<compile_context>
chip_gen: v5e
topology: v5e:2x2
jax: 0.10.0
libtpu: 0.0.40
codegen_flags: <defaults>
</compile_context>

<pallas_src>
import functools

import jax
import jax.numpy as jnp
from jax.experimental import pallas as pl
from jax.experimental.pallas import tpu as pltpu

EPS = 1e-5


# ------------------------------ Pallas kernel ------------------------------ #

def _res_bottleneck_kernel(xsh_ref, w1_ref, w2_ref, w3_ref, b_ref, o_ref,
                           y1_ref, acc_ref, *, H, W, c_b_p, c_out_p):
    """One image per grid step.

    xsh_ref: (1, 3*H, W, c_in)  bf16   three W-shifted copies of the image
    w1_ref : (c_in, c_b_p)      bf16   1x1 conv, BN scale folded in
    w2_ref : (9, c_b_p, c_b_p)  bf16   3x3 conv taps, BN scale folded in
    w3_ref : (c_b_p, c_out_p)   bf16   1x1 conv, BN scale folded in
    b_ref  : (3, 1, c_max)      f32    folded BN biases for the 3 stages
    o_ref  : (1, H, W, c_out_p) f32    output (stride-1 resolution)
    y1_ref : (3, H+2, W, c_b_p) bf16   scratch: stage-1 output + H halo rows
    acc_ref: (H*W, c_b_p)       f32    scratch: 3x3 accumulator
    """
    c_in = xsh_ref.shape[-1]
    Hp = H + 2

    # column index (sublane iota) for masking the wrapped-in W column.
    col = jax.lax.broadcasted_iota(jnp.int32, (H, W, c_b_p), 1)

    b1 = b_ref[0][:, :c_b_p]          # (1, c_b_p)
    b2 = b_ref[1][:, :c_b_p]
    b3 = b_ref[2][:, :c_out_p]

    zrow = jnp.zeros((1, W, c_b_p), y1_ref.dtype)

    # ---- stage 1: 1x1 conv (+folded BN) + ReLU on each W-shifted copy ----- #
    for k in range(3):                                   # dx = k - 1
        xk = xsh_ref[0, pl.ds(k * H, H), :, :]           # (H, W, c_in) bf16
        a = jnp.dot(xk.reshape(H * W, c_in), w1_ref[...],
                    preferred_element_type=jnp.float32)  # (H*W, c_b_p) f32
        y = jnp.maximum(a + b1, 0.0).reshape(H, W, c_b_p)
        # zero the column that corresponds to the 3x3 conv's zero padding
        if k == 0:
            y = jnp.where(col >= 1, y, 0.0)
        elif k == 2:
            y = jnp.where(col <= W - 2, y, 0.0)
        y1_ref[k, pl.ds(0, 1)] = zrow                    # top halo row
        y1_ref[k, pl.ds(1, H)] = y.astype(y1_ref.dtype)
        y1_ref[k, pl.ds(Hp - 1, 1)] = zrow               # bottom halo row

    # ---- stage 2: 3x3 conv as 9 accumulating matmuls + BN + ReLU ---------- #
    for t in range(9):
        ky, kx = divmod(t, 3)
        patch = y1_ref[kx, pl.ds(ky, H), :, :]           # (H, W, c_b_p) bf16
        part = jnp.dot(patch.reshape(H * W, c_b_p), w2_ref[t],
                       preferred_element_type=jnp.float32)
        if t == 0:
            acc_ref[...] = part
        else:
            acc_ref[...] += part
    y2 = jnp.maximum(acc_ref[...] + b2, 0.0).astype(jnp.bfloat16)

    # ---- stage 3: 1x1 conv (+folded BN), no ReLU -------------------------- #
    y3 = jnp.dot(y2, w3_ref[...], preferred_element_type=jnp.float32) + b3
    o_ref[...] = y3.reshape(1, H, W, c_out_p).astype(o_ref.dtype)


# --------------------------------- glue ------------------------------------ #

def _round_up(n, m):
    return ((n + m - 1) // m) * m


def _fold_bn(conv_bias, gamma, beta, mean, var, eps=EPS):
    scale = gamma / jnp.sqrt(var + eps)
    bias = (conv_bias - mean) * scale + beta
    return scale, bias


def _pad_axis(a, size, axis):
    pad = size - a.shape[axis]
    if pad <= 0:
        return a
    cfg = [(0, 0)] * a.ndim
    cfg[axis] = (0, pad)
    return jnp.pad(a, cfg)


def _build_shifted_input(x):
    """(N,H,W,C) -> (N, 3*H, W, C): W-shifted copies for dx = -1, 0, +1."""
    N, H, W, C = x.shape
    zc = jnp.zeros((N, H, 1, C), x.dtype)
    sh = [jnp.concatenate([zc, x[:, :, :W - 1, :]], axis=2),   # out[w] = x[w-1]
          x,                                                   # out[w] = x[w]
          jnp.concatenate([x[:, :, 1:, :], zc], axis=2)]       # out[w] = x[w+1]
    return jnp.stack(sh, axis=1).reshape(N, 3 * H, W, C)


@functools.partial(jax.jit, static_argnames=("stride",))
def res_bottleneck_block(x_nchw, pt, stride):
    """Forward pass matching the PyTorch module (eval-mode BatchNorm)."""
    x = jnp.transpose(x_nchw, (0, 2, 3, 1))                 # NCHW -> NHWC
    N, H, W, c_in = x.shape
    c_b = pt["w1"].shape[0]
    c_out = pt["w3"].shape[0]
    c_b_p = _round_up(c_b, 128)
    c_out_p = _round_up(c_out, 128)
    c_max = max(c_b_p, c_out_p)

    # Fold eval-mode BN into weights/biases, pad channels, cast to bf16
    # (in a real model this is one-time load-time work).
    s1, b1 = _fold_bn(pt["b1"], *pt["bn1"])
    s2, b2 = _fold_bn(pt["b2"], *pt["bn2"])
    s3, b3 = _fold_bn(pt["b3"], *pt["bn3"])

    w1 = jnp.transpose(pt["w1"][:, :, 0, 0], (1, 0)) * s1[None, :]   # (c_in,c_b)
    w1 = _pad_axis(w1, c_b_p, 1).astype(jnp.bfloat16)
    w2 = jnp.transpose(pt["w2"], (2, 3, 1, 0)).reshape(9, c_b, c_b)  # (t,ci,co)
    w2 = w2 * s2[None, None, :]
    w2 = _pad_axis(_pad_axis(w2, c_b_p, 1), c_b_p, 2).astype(jnp.bfloat16)
    w3 = jnp.transpose(pt["w3"][:, :, 0, 0], (1, 0)) * s3[None, :]   # (c_b,c_out)
    w3 = _pad_axis(_pad_axis(w3, c_b_p, 0), c_out_p, 1).astype(jnp.bfloat16)
    biases = jnp.stack([_pad_axis(b1, c_max, 0),
                        _pad_axis(b2, c_max, 0),
                        _pad_axis(b3, c_max, 0)], axis=0)
    biases = biases.reshape(3, 1, c_max).astype(jnp.float32)

    # TODO(synk): for large c_in the 3 W-shifted input copies triple the input
    # HBM read; an in-kernel sublane shift (pltpu.roll) would avoid it.
    xsh = _build_shifted_input(x).astype(jnp.bfloat16)      # (N, 3*H, W, c_in)

    kernel = functools.partial(_res_bottleneck_kernel, H=H, W=W,
                               c_b_p=c_b_p, c_out_p=c_out_p)
    y = pl.pallas_call(
        kernel,
        out_shape=jax.ShapeDtypeStruct((N, H, W, c_out_p), jnp.float32),
        grid_spec=pltpu.PrefetchScalarGridSpec(
            num_scalar_prefetch=0,
            grid=(N,),
            in_specs=[
                pl.BlockSpec((1, 3 * H, W, c_in), lambda n: (n, 0, 0, 0)),
                pl.BlockSpec((c_in, c_b_p), lambda n: (0, 0)),
                pl.BlockSpec((9, c_b_p, c_b_p), lambda n: (0, 0, 0)),
                pl.BlockSpec((c_b_p, c_out_p), lambda n: (0, 0)),
                pl.BlockSpec((3, 1, c_max), lambda n: (0, 0, 0)),
            ],
            out_specs=pl.BlockSpec((1, H, W, c_out_p), lambda n: (n, 0, 0, 0)),
            scratch_shapes=[
                pltpu.VMEM((3, H + 2, W, c_b_p), jnp.bfloat16),  # shifted y1
                pltpu.VMEM((H * W, c_b_p), jnp.float32),         # 3x3 accum
            ],
        ),
        compiler_params=pltpu.CompilerParams(
            dimension_semantics=("parallel",)),
    )(xsh, w1, w2, w3, biases)

    y = y[..., :c_out]                                      # drop channel pad
    if stride > 1:
        # 3x3/stride-2/pad-1 output == stride-1 output subsampled at even
        # positions (exact), and the final 1x1 conv is pointwise, so the
        # subsample commutes.
        # TODO(synk): in-kernel strided windows (pl.ds stride) would avoid the
        # 4x overcompute for the (minority) stride-2 blocks.
        y = y[:, ::stride, ::stride, :]
    return jnp.transpose(y, (0, 3, 1, 2))                   # NHWC -> NCHW


# ------------------------ parameter init / reference ----------------------- #

def init_params(key, c_in, c_b, c_out):
    """PyTorch-layout (OIHW) weights + eval-mode BN stats."""
    ks = jax.random.split(key, 9)
    f32 = jnp.float32

    def bn(k, c):
        g = 1.0 + 0.1 * jax.random.normal(jax.random.fold_in(k, 0), (c,), f32)
        be = 0.1 * jax.random.normal(jax.random.fold_in(k, 1), (c,), f32)
        m = 0.1 * jax.random.normal(jax.random.fold_in(k, 2), (c,), f32)
        v = 1.0 + 0.2 * jax.nn.sigmoid(
            jax.random.normal(jax.random.fold_in(k, 3), (c,), f32))
        return g, be, m, v

    return dict(
        w1=jax.random.normal(ks[0], (c_b, c_in, 1, 1), f32) * 0.2,
        b1=jax.random.normal(ks[1], (c_b,), f32) * 0.1,
        w2=jax.random.normal(ks[2], (c_b, c_b, 3, 3), f32) * 0.1,
        b2=jax.random.normal(ks[3], (c_b,), f32) * 0.1,
        w3=jax.random.normal(ks[4], (c_out, c_b, 1, 1), f32) * 0.2,
        b3=jax.random.normal(ks[5], (c_out,), f32) * 0.1,
        bn1=bn(ks[6], c_b), bn2=bn(ks[7], c_b), bn3=bn(ks[8], c_out),
    )


def ref_forward(x_nchw, pt, stride):
    """Pure-JAX f32 NCHW reference (eval-mode BN) for validation."""
    def conv(x, w, b, s, p):
        y = jax.lax.conv_general_dilated(
            x, w, (s, s), [(p, p), (p, p)],
            dimension_numbers=("NCHW", "OIHW", "NCHW"))
        return y + b[None, :, None, None]

    def bn(x, stats):
        g, be, m, v = stats
        return ((x - m[None, :, None, None]) /
                jnp.sqrt(v[None, :, None, None] + EPS)
                * g[None, :, None, None] + be[None, :, None, None])

    y = jax.nn.relu(bn(conv(x_nchw, pt["w1"], pt["b1"], 1, 0), pt["bn1"]))
    y = jax.nn.relu(bn(conv(y, pt["w2"], pt["b2"], stride, 1), pt["bn2"]))
    y = bn(conv(y, pt["w3"], pt["b3"], 1, 0), pt["bn3"])
    return y


# ---------------------------------- main ----------------------------------- #

if __name__ == "__main__":
    key = jax.random.PRNGKey(0)
    k_x, k_p = jax.random.split(key)

    N, c_in, H, W = 2, 16, 16, 16
    c_b, c_out = 8, 32

    x = jax.random.normal(k_x, (N, c_in, H, W), jnp.float32)  # NCHW, PyTorch-style
    pt = init_params(k_p, c_in, c_b, c_out)

    # TODO(synk): training-mode BatchNorm (batch statistics) not implemented;
    # eval-mode running-stat BN is folded into the kernel weights/biases.
    for stride in (1, 2):
        out = jax.block_until_ready(res_bottleneck_block(x, pt, stride=stride))
        ref = jax.block_until_ready(ref_forward(x, pt, stride))
        assert out.shape == ref.shape, (out.shape, ref.shape)
        max_err = float(jnp.max(jnp.abs(out - ref)))
        assert jnp.allclose(out, ref, atol=5e-2, rtol=5e-2), max_err

    print("KERNEL_OK")
</pallas_src>

<mosaic_0001>
module attributes {stable_mosaic.version = 11 : i64} {
  func.func @_res_bottleneck_kernel(%arg0: i32, %arg1: memref<1x48x16x16xbf16, #tpu.memory_space<vmem>>, %arg2: memref<16x128xbf16, #tpu.memory_space<vmem>>, %arg3: memref<9x128x128xbf16, #tpu.memory_space<vmem>>, %arg4: memref<128x128xbf16, #tpu.memory_space<vmem>>, %arg5: memref<3x1x128xf32, #tpu.memory_space<vmem>>, %arg6: memref<1x16x16x128xf32, #tpu.memory_space<vmem>>, %arg7: memref<3x18x16x128xbf16, #tpu.memory_space<vmem>>, %arg8: memref<256x128xf32, #tpu.memory_space<vmem>>) attributes {dimension_semantics = [#tpu.dimension_semantics<parallel>], iteration_bounds = array<i64: 2>, scalar_prefetch = 0 : i64, scratch_operands = 2 : i64, tpu.core_type = #tpu.core_type<tc>, window_params = [{transform_indices = @transform_0, window_bounds = array<i64: 1, 48, 16, 16>}, {pipeline_mode = #tpu.pipeline_mode<synchronous>, transform_indices = @transform_1, window_bounds = array<i64: 16, 128>}, {pipeline_mode = #tpu.pipeline_mode<synchronous>, transform_indices = @transform_2, window_bounds = array<i64: 9, 128, 128>}, {pipeline_mode = #tpu.pipeline_mode<synchronous>, transform_indices = @transform_3, window_bounds = array<i64: 128, 128>}, {pipeline_mode = #tpu.pipeline_mode<synchronous>, transform_indices = @transform_4, window_bounds = array<i64: 3, 1, 128>}, {transform_indices = @transform_5, window_bounds = array<i64: 1, 16, 16, 128>}]} {
    %0 = tpu.iota {dimensions = array<i32: 1>} : vector<16x16x128xi32>
    %c0 = arith.constant 0 : index
    %c0_0 = arith.constant 0 : index
    %c0_1 = arith.constant 0 : index
    %1 = vector.load %arg5[%c0, %c0_0, %c0_1] : memref<3x1x128xf32, #tpu.memory_space<vmem>>, vector<1x1x128xf32>
    %2 = vector.shape_cast %1 : vector<1x1x128xf32> to vector<1x128xf32>
    %c1 = arith.constant 1 : index
    %c0_2 = arith.constant 0 : index
    %c0_3 = arith.constant 0 : index
    %3 = vector.load %arg5[%c1, %c0_2, %c0_3] : memref<3x1x128xf32, #tpu.memory_space<vmem>>, vector<1x1x128xf32>
    %4 = vector.shape_cast %3 : vector<1x1x128xf32> to vector<1x128xf32>
    %c2 = arith.constant 2 : index
    %c0_4 = arith.constant 0 : index
    %c0_5 = arith.constant 0 : index
    %5 = vector.load %arg5[%c2, %c0_4, %c0_5] : memref<3x1x128xf32, #tpu.memory_space<vmem>>, vector<1x1x128xf32>
    %6 = vector.shape_cast %5 : vector<1x1x128xf32> to vector<1x128xf32>
    %cst = arith.constant 0.000000e+00 : bf16
    %7 = vector.broadcast %cst : bf16 to vector<1x16x128xbf16>
    %c0_6 = arith.constant 0 : index
    %c0_7 = arith.constant 0 : index
    %c0_8 = arith.constant 0 : index
    %c0_9 = arith.constant 0 : index
    %8 = vector.load %arg1[%c0_6, %c0_7, %c0_8, %c0_9] : memref<1x48x16x16xbf16, #tpu.memory_space<vmem>>, vector<1x16x16x16xbf16>
    %9 = vector.shape_cast %8 : vector<1x16x16x16xbf16> to vector<16x16x16xbf16>
    %10 = vector.shape_cast %9 : vector<16x16x16xbf16> to vector<256x16xbf16>
    %c0_10 = arith.constant 0 : index
    %c0_11 = arith.constant 0 : index
    %11 = vector.load %arg2[%c0_10, %c0_11] : memref<16x128xbf16, #tpu.memory_space<vmem>>, vector<16x128xbf16>
    %cst_12 = arith.constant dense<0.000000e+00> : vector<256x128xf32>
    %12 = tpu.matmul %10, %11, %cst_12 {dimension_numbers = #tpu.dot_dimension_numbers<[1], [0], [0], [1], [0, 0, 1, 1], [], []>} : vector<256x16xbf16>, vector<16x128xbf16>, vector<256x128xf32> -> vector<256x128xf32>
    %13 = vector.broadcast %2 : vector<1x128xf32> to vector<256x128xf32>
    %14 = arith.addf %12, %13 : vector<256x128xf32>
    %cst_13 = arith.constant 0.000000e+00 : f32
    %15 = vector.broadcast %cst_13 : f32 to vector<256x128xf32>
    %16 = arith.maximumf %14, %15 : vector<256x128xf32>
    %17 = vector.shape_cast %16 : vector<256x128xf32> to vector<16x16x128xf32>
    %c1_i32 = arith.constant 1 : i32
    %18 = vector.broadcast %c1_i32 : i32 to vector<16x16x128xi32>
    %19 = arith.cmpi sge, %0, %18 : vector<16x16x128xi32>
    %cst_14 = arith.constant 0.000000e+00 : f32
    %20 = vector.broadcast %cst_14 : f32 to vector<16x16x128xf32>
    %21 = arith.select %19, %17, %20 : vector<16x16x128xi1>, vector<16x16x128xf32>
    %c0_15 = arith.constant 0 : index
    %c0_16 = arith.constant 0 : index
    %c0_17 = arith.constant 0 : index
    %c0_18 = arith.constant 0 : index
    %22 = vector.load %arg7[%c0_15, %c0_16, %c0_17, %c0_18] : memref<3x18x16x128xbf16, #tpu.memory_space<vmem>>, vector<1x1x16x128xbf16>
    %23 = vector.shape_cast %22 : vector<1x1x16x128xbf16> to vector<1x16x128xbf16>
    %24 = vector.shape_cast %7 : vector<1x16x128xbf16> to vector<1x1x16x128xbf16>
    tpu.vector_store %arg7[%c0_15, %c0_16, %c0_17, %c0_18], %24 {strides = array<i32>} : memref<3x18x16x128xbf16, #tpu.memory_space<vmem>>, vector<1x1x16x128xbf16>,
    %25 = arith.truncf %21 : vector<16x16x128xf32> to vector<16x16x128xbf16>
    %c0_19 = arith.constant 0 : index
    %c1_20 = arith.constant 1 : index
    %c0_21 = arith.constant 0 : index
    %c0_22 = arith.constant 0 : index
    %26 = vector.load %arg7[%c0_19, %c1_20, %c0_21, %c0_22] : memref<3x18x16x128xbf16, #tpu.memory_space<vmem>>, vector<1x16x16x128xbf16>
    %27 = vector.shape_cast %26 : vector<1x16x16x128xbf16> to vector<16x16x128xbf16>
    %28 = vector.shape_cast %25 : vector<16x16x128xbf16> to vector<1x16x16x128xbf16>
    tpu.vector_store %arg7[%c0_19, %c1_20, %c0_21, %c0_22], %28 {strides = array<i32>} : memref<3x18x16x128xbf16, #tpu.memory_space<vmem>>, vector<1x16x16x128xbf16>,
    %c0_23 = arith.constant 0 : index
    %c17 = arith.constant 17 : index
    %c0_24 = arith.constant 0 : index
    %c0_25 = arith.constant 0 : index
    %29 = vector.load %arg7[%c0_23, %c17, %c0_24, %c0_25] : memref<3x18x16x128xbf16, #tpu.memory_space<vmem>>, vector<1x1x16x128xbf16>
    %30 = vector.shape_cast %29 : vector<1x1x16x128xbf16> to vector<1x16x128xbf16>
    %31 = vector.shape_cast %7 : vector<1x16x128xbf16> to vector<1x1x16x128xbf16>
    tpu.vector_store %arg7[%c0_23, %c17, %c0_24, %c0_25], %31 {strides = array<i32>} : memref<3x18x16x128xbf16, #tpu.memory_space<vmem>>, vector<1x1x16x128xbf16>,
    %c0_26 = arith.constant 0 : index
    %c16 = arith.constant 16 : index
    %c0_27 = arith.constant 0 : index
    %c0_28 = arith.constant 0 : index
    %32 = vector.load %arg1[%c0_26, %c16, %c0_27, %c0_28] : memref<1x48x16x16xbf16, #tpu.memory_space<vmem>>, vector<1x16x16x16xbf16>
    %33 = vector.shape_cast %32 : vector<1x16x16x16xbf16> to vector<16x16x16xbf16>
    %34 = vector.shape_cast %33 : vector<16x16x16xbf16> to vector<256x16xbf16>
    %c0_29 = arith.constant 0 : index
    %c0_30 = arith.constant 0 : index
    %35 = vector.load %arg2[%c0_29, %c0_30] : memref<16x128xbf16, #tpu.memory_space<vmem>>, vector<16x128xbf16>
    %cst_31 = arith.constant dense<0.000000e+00> : vector<256x128xf32>
    %36 = tpu.matmul %34, %35, %cst_31 {dimension_numbers = #tpu.dot_dimension_numbers<[1], [0], [0], [1], [0, 0, 1, 1], [], []>} : vector<256x16xbf16>, vector<16x128xbf16>, vector<256x128xf32> -> vector<256x128xf32>
    %37 = vector.broadcast %2 : vector<1x128xf32> to vector<256x128xf32>
    %38 = arith.addf %36, %37 : vector<256x128xf32>
    %cst_32 = arith.constant 0.000000e+00 : f32
    %39 = vector.broadcast %cst_32 : f32 to vector<256x128xf32>
    %40 = arith.maximumf %38, %39 : vector<256x128xf32>
    %41 = vector.shape_cast %40 : vector<256x128xf32> to vector<16x16x128xf32>
    %c1_33 = arith.constant 1 : index
    %c0_34 = arith.constant 0 : index
    %c0_35 = arith.constant 0 : index
    %c0_36 = arith.constant 0 : index
    %42 = vector.load %arg7[%c1_33, %c0_34, %c0_35, %c0_36] : memref<3x18x16x128xbf16, #tpu.memory_space<vmem>>, vector<1x1x16x128xbf16>
    %43 = vector.shape_cast %42 : vector<1x1x16x128xbf16> to vector<1x16x128xbf16>
    %44 = vector.shape_cast %7 : vector<1x16x128xbf16> to vector<1x1x16x128xbf16>
    tpu.vector_store %arg7[%c1_33, %c0_34, %c0_35, %c0_36], %44 {strides = array<i32>} : memref<3x18x16x128xbf16, #tpu.memory_space<vmem>>, vector<1x1x16x128xbf16>,
    %45 = arith.truncf %41 : vector<16x16x128xf32> to vector<16x16x128xbf16>
    %c1_37 = arith.constant 1 : index
    %c1_38 = arith.constant 1 : index
    %c0_39 = arith.constant 0 : index
    %c0_40 = arith.constant 0 : index
    %46 = vector.load %arg7[%c1_37, %c1_38, %c0_39, %c0_40] : memref<3x18x16x128xbf16, #tpu.memory_space<vmem>>, vector<1x16x16x128xbf16>
    %47 = vector.shape_cast %46 : vector<1x16x16x128xbf16> to vector<16x16x128xbf16>
    %48 = vector.shape_cast %45 : vector<16x16x128xbf16> to vector<1x16x16x128xbf16>
    tpu.vector_store %arg7[%c1_37, %c1_38, %c0_39, %c0_40], %48 {strides = array<i32>} : memref<3x18x16x128xbf16, #tpu.memory_space<vmem>>, vector<1x16x16x128xbf16>,
    %c1_41 = arith.constant 1 : index
    %c17_42 = arith.constant 17 : index
    %c0_43 = arith.constant 0 : index
    %c0_44 = arith.constant 0 : index
    %49 = vector.load %arg7[%c1_41, %c17_42, %c0_43, %c0_44] : memref<3x18x16x128xbf16, #tpu.memory_space<vmem>>, vector<1x1x16x128xbf16>
    %50 = vector.shape_cast %49 : vector<1x1x16x128xbf16> to vector<1x16x128xbf16>
    %51 = vector.shape_cast %7 : vector<1x16x128xbf16> to vector<1x1x16x128xbf16>
    tpu.vector_store %arg7[%c1_41, %c17_42, %c0_43, %c0_44], %51 {strides = array<i32>} : memref<3x18x16x128xbf16, #tpu.memory_space<vmem>>, vector<1x1x16x128xbf16>,
    %c0_45 = arith.constant 0 : index
    %c32 = arith.constant 32 : index
    %c0_46 = arith.constant 0 : index
    %c0_47 = arith.constant 0 : index
    %52 = vector.load %arg1[%c0_45, %c32, %c0_46, %c0_47] : memref<1x48x16x16xbf16, #tpu.memory_space<vmem>>, vector<1x16x16x16xbf16>
    %53 = vector.shape_cast %52 : vector<1x16x16x16xbf16> to vector<16x16x16xbf16>
    %54 = vector.shape_cast %53 : vector<16x16x16xbf16> to vector<256x16xbf16>
    %c0_48 = arith.constant 0 : index
    %c0_49 = arith.constant 0 : index
    %55 = vector.load %arg2[%c0_48, %c0_49] : memref<16x128xbf16, #tpu.memory_space<vmem>>, vector<16x128xbf16>
    %cst_50 = arith.constant dense<0.000000e+00> : vector<256x128xf32>
    %56 = tpu.matmul %54, %55, %cst_50 {dimension_numbers = #tpu.dot_dimension_numbers<[1], [0], [0], [1], [0, 0, 1, 1], [], []>} : vector<256x16xbf16>, vector<16x128xbf16>, vector<256x128xf32> -> vector<256x128xf32>
    %57 = vector.broadcast %2 : vector<1x128xf32> to vector<256x128xf32>
    %58 = arith.addf %56, %57 : vector<256x128xf32>
    %cst_51 = arith.constant 0.000000e+00 : f32
    %59 = vector.broadcast %cst_51 : f32 to vector<256x128xf32>
    %60 = arith.maximumf %58, %59 : vector<256x128xf32>
    %61 = vector.shape_cast %60 : vector<256x128xf32> to vector<16x16x128xf32>
    %c14_i32 = arith.constant 14 : i32
    %62 = vector.broadcast %c14_i32 : i32 to vector<16x16x128xi32>
    %63 = arith.cmpi sle, %0, %62 : vector<16x16x128xi32>
    %cst_52 = arith.constant 0.000000e+00 : f32
    %64 = vector.broadcast %cst_52 : f32 to vector<16x16x128xf32>
    %65 = arith.select %63, %61, %64 : vector<16x16x128xi1>, vector<16x16x128xf32>
    %c2_53 = arith.constant 2 : index
    %c0_54 = arith.constant 0 : index
    %c0_55 = arith.constant 0 : index
    %c0_56 = arith.constant 0 : index
    %66 = vector.load %arg7[%c2_53, %c0_54, %c0_55, %c0_56] : memref<3x18x16x128xbf16, #tpu.memory_space<vmem>>, vector<1x1x16x128xbf16>
    %67 = vector.shape_cast %66 : vector<1x1x16x128xbf16> to vector<1x16x128xbf16>
    %68 = vector.shape_cast %7 : vector<1x16x128xbf16> to vector<1x1x16x128xbf16>
    tpu.vector_store %arg7[%c2_53, %c0_54, %c0_55, %c0_56], %68 {strides = array<i32>} : memref<3x18x16x128xbf16, #tpu.memory_space<vmem>>, vector<1x1x16x128xbf16>,
    %69 = arith.truncf %65 : vector<16x16x128xf32> to vector<16x16x128xbf16>
    %c2_57 = arith.constant 2 : index
    %c1_58 = arith.constant 1 : index
    %c0_59 = arith.constant 0 : index
    %c0_60 = arith.constant 0 : index
    %70 = vector.load %arg7[%c2_57, %c1_58, %c0_59, %c0_60] : memref<3x18x16x128xbf16, #tpu.memory_space<vmem>>, vector<1x16x16x128xbf16>
    %71 = vector.shape_cast %70 : vector<1x16x16x128xbf16> to vector<16x16x128xbf16>
    %72 = vector.shape_cast %69 : vector<16x16x128xbf16> to vector<1x16x16x128xbf16>
    tpu.vector_store %arg7[%c2_57, %c1_58, %c0_59, %c0_60], %72 {strides = array<i32>} : memref<3x18x16x128xbf16, #tpu.memory_space<vmem>>, vector<1x16x16x128xbf16>,
    %c2_61 = arith.constant 2 : index
    %c17_62 = arith.constant 17 : index
    %c0_63 = arith.constant 0 : index
    %c0_64 = arith.constant 0 : index
    %73 = vector.load %arg7[%c2_61, %c17_62, %c0_63, %c0_64] : memref<3x18x16x128xbf16, #tpu.memory_space<vmem>>, vector<1x1x16x128xbf16>
    %74 = vector.shape_cast %73 : vector<1x1x16x128xbf16> to vector<1x16x128xbf16>
    %75 = vector.shape_cast %7 : vector<1x16x128xbf16> to vector<1x1x16x128xbf16>
    tpu.vector_store %arg7[%c2_61, %c17_62, %c0_63, %c0_64], %75 {strides = array<i32>} : memref<3x18x16x128xbf16, #tpu.memory_space<vmem>>, vector<1x1x16x128xbf16>,
    %c0_65 = arith.constant 0 : index
    %c0_66 = arith.constant 0 : index
    %c0_67 = arith.constant 0 : index
    %c0_68 = arith.constant 0 : index
    %76 = vector.load %arg7[%c0_65, %c0_66, %c0_67, %c0_68] : memref<3x18x16x128xbf16, #tpu.memory_space<vmem>>, vector<1x16x16x128xbf16>
    %77 = vector.shape_cast %76 : vector<1x16x16x128xbf16> to vector<16x16x128xbf16>
    %78 = vector.shape_cast %77 : vector<16x16x128xbf16> to vector<256x128xbf16>
    %c0_69 = arith.constant 0 : index
    %c0_70 = arith.constant 0 : index
    %c0_71 = arith.constant 0 : index
    %79 = vector.load %arg3[%c0_69, %c0_70, %c0_71] : memref<9x128x128xbf16, #tpu.memory_space<vmem>>, vector<1x128x128xbf16>
    %80 = vector.shape_cast %79 : vector<1x128x128xbf16> to vector<128x128xbf16>
    %cst_72 = arith.constant dense<0.000000e+00> : vector<256x128xf32>
    %81 = tpu.matmul %78, %80, %cst_72 {dimension_numbers = #tpu.dot_dimension_numbers<[1], [0], [0], [1], [0, 0, 1, 1], [], []>} : vector<256x128xbf16>, vector<128x128xbf16>, vector<256x128xf32> -> vector<256x128xf32>
    %c0_73 = arith.constant 0 : index
    %c0_74 = arith.constant 0 : index
    %82 = vector.load %arg8[%c0_73, %c0_74] : memref<256x128xf32, #tpu.memory_space<vmem>>, vector<256x128xf32>
    tpu.vector_store %arg8[%c0_73, %c0_74], %81 {strides = array<i32>} : memref<256x128xf32, #tpu.memory_space<vmem>>, vector<256x128xf32>,
    %c1_75 = arith.constant 1 : index
    %c0_76 = arith.constant 0 : index
    %c0_77 = arith.constant 0 : index
    %c0_78 = arith.constant 0 : index
    %83 = vector.load %arg7[%c1_75, %c0_76, %c0_77, %c0_78] : memref<3x18x16x128xbf16, #tpu.memory_space<vmem>>, vector<1x16x16x128xbf16>
    %84 = vector.shape_cast %83 : vector<1x16x16x128xbf16> to vector<16x16x128xbf16>
    %85 = vector.shape_cast %84 : vector<16x16x128xbf16> to vector<256x128xbf16>
    %c1_79 = arith.constant 1 : index
    %c0_80 = arith.constant 0 : index
    %c0_81 = arith.constant 0 : index
    %86 = vector.load %arg3[%c1_79, %c0_80, %c0_81] : memref<9x128x128xbf16, #tpu.memory_space<vmem>>, vector<1x128x128xbf16>
    %87 = vector.shape_cast %86 : vector<1x128x128xbf16> to vector<128x128xbf16>
    %cst_82 = arith.constant dense<0.000000e+00> : vector<256x128xf32>
    %88 = tpu.matmul %85, %87, %cst_82 {dimension_numbers = #tpu.dot_dimension_numbers<[1], [0], [0], [1], [0, 0, 1, 1], [], []>} : vector<256x128xbf16>, vector<128x128xbf16>, vector<256x128xf32> -> vector<256x128xf32>
    %c0_83 = arith.constant 0 : index
    %c0_84 = arith.constant 0 : index
    %89 = vector.load %arg8[%c0_83, %c0_84] : memref<256x128xf32, #tpu.memory_space<vmem>>, vector<256x128xf32>
    %90 = arith.addf %89, %88 : vector<256x128xf32>
    %c0_85 = arith.constant 0 : index
    %c0_86 = arith.constant 0 : index
    %91 = vector.load %arg8[%c0_85, %c0_86] : memref<256x128xf32, #tpu.memory_space<vmem>>, vector<256x128xf32>
    tpu.vector_store %arg8[%c0_85, %c0_86], %90 {strides = array<i32>} : memref<256x128xf32, #tpu.memory_space<vmem>>, vector<256x128xf32>,
    %c2_87 = arith.constant 2 : index
    %c0_88 = arith.constant 0 : index
    %c0_89 = arith.constant 0 : index
    %c0_90 = arith.constant 0 : index
    %92 = vector.load %arg7[%c2_87, %c0_88, %c0_89, %c0_90] : memref<3x18x16x128xbf16, #tpu.memory_space<vmem>>, vector<1x16x16x128xbf16>
    %93 = vector.shape_cast %92 : vector<1x16x16x128xbf16> to vector<16x16x128xbf16>
    %94 = vector.shape_cast %93 : vector<16x16x128xbf16> to vector<256x128xbf16>
    %c2_91 = arith.constant 2 : index
    %c0_92 = arith.constant 0 : index
    %c0_93 = arith.constant 0 : index
    %95 = vector.load %arg3[%c2_91, %c0_92, %c0_93] : memref<9x128x128xbf16, #tpu.memory_space<vmem>>, vector<1x128x128xbf16>
    %96 = vector.shape_cast %95 : vector<1x128x128xbf16> to vector<128x128xbf16>
    %cst_94 = arith.constant dense<0.000000e+00> : vector<256x128xf32>
    %97 = tpu.matmul %94, %96, %cst_94 {dimension_numbers = #tpu.dot_dimension_numbers<[1], [0], [0], [1], [0, 0, 1, 1], [], []>} : vector<256x128xbf16>, vector<128x128xbf16>, vector<256x128xf32> -> vector<256x128xf32>
    %c0_95 = arith.constant 0 : index
    %c0_96 = arith.constant 0 : index
    %98 = vector.load %arg8[%c0_95, %c0_96] : memref<256x128xf32, #tpu.memory_space<vmem>>, vector<256x128xf32>
    %99 = arith.addf %98, %97 : vector<256x128xf32>
    %c0_97 = arith.constant 0 : index
    %c0_98 = arith.constant 0 : index
    %100 = vector.load %arg8[%c0_97, %c0_98] : memref<256x128xf32, #tpu.memory_space<vmem>>, vector<256x128xf32>
    tpu.vector_store %arg8[%c0_97, %c0_98], %99 {strides = array<i32>} : memref<256x128xf32, #tpu.memory_space<vmem>>, vector<256x128xf32>,
    %c0_99 = arith.constant 0 : index
    %c1_100 = arith.constant 1 : index
    %c0_101 = arith.constant 0 : index
    %c0_102 = arith.constant 0 : index
    %101 = vector.load %arg7[%c0_99, %c1_100, %c0_101, %c0_102] : memref<3x18x16x128xbf16, #tpu.memory_space<vmem>>, vector<1x16x16x128xbf16>
    %102 = vector.shape_cast %101 : vector<1x16x16x128xbf16> to vector<16x16x128xbf16>
    %103 = vector.shape_cast %102 : vector<16x16x128xbf16> to vector<256x128xbf16>
    %c3 = arith.constant 3 : index
    %c0_103 = arith.constant 0 : index
    %c0_104 = arith.constant 0 : index
    %104 = vector.load %arg3[%c3, %c0_103, %c0_104] : memref<9x128x128xbf16, #tpu.memory_space<vmem>>, vector<1x128x128xbf16>
    %105 = vector.shape_cast %104 : vector<1x128x128xbf16> to vector<128x128xbf16>
    %cst_105 = arith.constant dense<0.000000e+00> : vector<256x128xf32>
    %106 = tpu.matmul %103, %105, %cst_105 {dimension_numbers = #tpu.dot_dimension_numbers<[1], [0], [0], [1], [0, 0, 1, 1], [], []>} : vector<256x128xbf16>, vector<128x128xbf16>, vector<256x128xf32> -> vector<256x128xf32>
    %c0_106 = arith.constant 0 : index
    %c0_107 = arith.constant 0 : index
    %107 = vector.load %arg8[%c0_106, %c0_107] : memref<256x128xf32, #tpu.memory_space<vmem>>, vector<256x128xf32>
    %108 = arith.addf %107, %106 : vector<256x128xf32>
    %c0_108 = arith.constant 0 : index
    %c0_109 = arith.constant 0 : index
    %109 = vector.load %arg8[%c0_108, %c0_109] : memref<256x128xf32, #tpu.memory_space<vmem>>, vector<256x128xf32>
    tpu.vector_store %arg8[%c0_108, %c0_109], %108 {strides = array<i32>} : memref<256x128xf32, #tpu.memory_space<vmem>>, vector<256x128xf32>,
    %c1_110 = arith.constant 1 : index
    %c1_111 = arith.constant 1 : index
    %c0_112 = arith.constant 0 : index
    %c0_113 = arith.constant 0 : index
    %110 = vector.load %arg7[%c1_110, %c1_111, %c0_112, %c0_113] : memref<3x18x16x128xbf16, #tpu.memory_space<vmem>>, vector<1x16x16x128xbf16>
    %111 = vector.shape_cast %110 : vector<1x16x16x128xbf16> to vector<16x16x128xbf16>
    %112 = vector.shape_cast %111 : vector<16x16x128xbf16> to vector<256x128xbf16>
    %c4 = arith.constant 4 : index
    %c0_114 = arith.constant 0 : index
    %c0_115 = arith.constant 0 : index
    %113 = vector.load %arg3[%c4, %c0_114, %c0_115] : memref<9x128x128xbf16, #tpu.memory_space<vmem>>, vector<1x128x128xbf16>
    %114 = vector.shape_cast %113 : vector<1x128x128xbf16> to vector<128x128xbf16>
    %cst_116 = arith.constant dense<0.000000e+00> : vector<256x128xf32>
    %115 = tpu.matmul %112, %114, %cst_116 {dimension_numbers = #tpu.dot_dimension_numbers<[1], [0], [0], [1], [0, 0, 1, 1], [], []>} : vector<256x128xbf16>, vector<128x128xbf16>, vector<256x128xf32> -> vector<256x128xf32>
    %c0_117 = arith.constant 0 : index
    %c0_118 = arith.constant 0 : index
    %116 = vector.load %arg8[%c0_117, %c0_118] : memref<256x128xf32, #tpu.memory_space<vmem>>, vector<256x128xf32>
    %117 = arith.addf %116, %115 : vector<256x128xf32>
    %c0_119 = arith.constant 0 : index
    %c0_120 = arith.constant 0 : index
    %118 = vector.load %arg8[%c0_119, %c0_120] : memref<256x128xf32, #tpu.memory_space<vmem>>, vector<256x128xf32>
    tpu.vector_store %arg8[%c0_119, %c0_120], %117 {strides = array<i32>} : memref<256x128xf32, #tpu.memory_space<vmem>>, vector<256x128xf32>,
    %c2_121 = arith.constant 2 : index
    %c1_122 = arith.constant 1 : index
    %c0_123 = arith.constant 0 : index
    %c0_124 = arith.constant 0 : index
    %119 = vector.load %arg7[%c2_121, %c1_122, %c0_123, %c0_124] : memref<3x18x16x128xbf16, #tpu.memory_space<vmem>>, vector<1x16x16x128xbf16>
    %120 = vector.shape_cast %119 : vector<1x16x16x128xbf16> to vector<16x16x128xbf16>
    %121 = vector.shape_cast %120 : vector<16x16x128xbf16> to vector<256x128xbf16>
    %c5 = arith.constant 5 : index
    %c0_125 = arith.constant 0 : index
    %c0_126 = arith.constant 0 : index
    %122 = vector.load %arg3[%c5, %c0_125, %c0_126] : memref<9x128x128xbf16, #tpu.memory_space<vmem>>, vector<1x128x128xbf16>
    %123 = vector.shape_cast %122 : vector<1x128x128xbf16> to vector<128x128xbf16>
    %cst_127 = arith.constant dense<0.000000e+00> : vector<256x128xf32>
    %124 = tpu.matmul %121, %123, %cst_127 {dimension_numbers = #tpu.dot_dimension_numbers<[1], [0], [0], [1], [0, 0, 1, 1], [], []>} : vector<256x128xbf16>, vector<128x128xbf16>, vector<256x128xf32> -> vector<256x128xf32>
    %c0_128 = arith.constant 0 : index
    %c0_129 = arith.constant 0 : index
    %125 = vector.load %arg8[%c0_128, %c0_129] : memref<256x128xf32, #tpu.memory_space<vmem>>, vector<256x128xf32>
    %126 = arith.addf %125, %124 : vector<256x128xf32>
    %c0_130 = arith.constant 0 : index
    %c0_131 = arith.constant 0 : index
    %127 = vector.load %arg8[%c0_130, %c0_131] : memref<256x128xf32, #tpu.memory_space<vmem>>, vector<256x128xf32>
    tpu.vector_store %arg8[%c0_130, %c0_131], %126 {strides = array<i32>} : memref<256x128xf32, #tpu.memory_space<vmem>>, vector<256x128xf32>,
    %c0_132 = arith.constant 0 : index
    %c2_133 = arith.constant 2 : index
    %c0_134 = arith.constant 0 : index
    %c0_135 = arith.constant 0 : index
    %128 = vector.load %arg7[%c0_132, %c2_133, %c0_134, %c0_135] : memref<3x18x16x128xbf16, #tpu.memory_space<vmem>>, vector<1x16x16x128xbf16>
    %129 = vector.shape_cast %128 : vector<1x16x16x128xbf16> to vector<16x16x128xbf16>
    %130 = vector.shape_cast %129 : vector<16x16x128xbf16> to vector<256x128xbf16>
    %c6 = arith.constant 6 : index
    %c0_136 = arith.constant 0 : index
    %c0_137 = arith.constant 0 : index
    %131 = vector.load %arg3[%c6, %c0_136, %c0_137] : memref<9x128x128xbf16, #tpu.memory_space<vmem>>, vector<1x128x128xbf16>
    %132 = vector.shape_cast %131 : vector<1x128x128xbf16> to vector<128x128xbf16>
    %cst_138 = arith.constant dense<0.000000e+00> : vector<256x128xf32>
    %133 = tpu.matmul %130, %132, %cst_138 {dimension_numbers = #tpu.dot_dimension_numbers<[1], [0], [0], [1], [0, 0, 1, 1], [], []>} : vector<256x128xbf16>, vector<128x128xbf16>, vector<256x128xf32> -> vector<256x128xf32>
    %c0_139 = arith.constant 0 : index
    %c0_140 = arith.constant 0 : index
    %134 = vector.load %arg8[%c0_139, %c0_140] : memref<256x128xf32, #tpu.memory_space<vmem>>, vector<256x128xf32>
    %135 = arith.addf %134, %133 : vector<256x128xf32>
    %c0_141 = arith.constant 0 : index
    %c0_142 = arith.constant 0 : index
    %136 = vector.load %arg8[%c0_141, %c0_142] : memref<256x128xf32, #tpu.memory_space<vmem>>, vector<256x128xf32>
    tpu.vector_store %arg8[%c0_141, %c0_142], %135 {strides = array<i32>} : memref<256x128xf32, #tpu.memory_space<vmem>>, vector<256x128xf32>,
    %c1_143 = arith.constant 1 : index
    %c2_144 = arith.constant 2 : index
    %c0_145 = arith.constant 0 : index
    %c0_146 = arith.constant 0 : index
    %137 = vector.load %arg7[%c1_143, %c2_144, %c0_145, %c0_146] : memref<3x18x16x128xbf16, #tpu.memory_space<vmem>>, vector<1x16x16x128xbf16>
    %138 = vector.shape_cast %137 : vector<1x16x16x128xbf16> to vector<16x16x128xbf16>
    %139 = vector.shape_cast %138 : vector<16x16x128xbf16> to vector<256x128xbf16>
    %c7 = arith.constant 7 : index
    %c0_147 = arith.constant 0 : index
    %c0_148 = arith.constant 0 : index
    %140 = vector.load %arg3[%c7, %c0_147, %c0_148] : memref<9x128x128xbf16, #tpu.memory_space<vmem>>, vector<1x128x128xbf16>
    %141 = vector.shape_cast %140 : vector<1x128x128xbf16> to vector<128x128xbf16>
    %cst_149 = arith.constant dense<0.000000e+00> : vector<256x128xf32>
    %142 = tpu.matmul %139, %141, %cst_149 {dimension_numbers = #tpu.dot_dimension_numbers<[1], [0], [0], [1], [0, 0, 1, 1], [], []>} : vector<256x128xbf16>, vector<128x128xbf16>, vector<256x128xf32> -> vector<256x128xf32>
    %c0_150 = arith.constant 0 : index
    %c0_151 = arith.constant 0 : index
    %143 = vector.load %arg8[%c0_150, %c0_151] : memref<256x128xf32, #tpu.memory_space<vmem>>, vector<256x128xf32>
    %144 = arith.addf %143, %142 : vector<256x128xf32>
    %c0_152 = arith.constant 0 : index
    %c0_153 = arith.constant 0 : index
    %145 = vector.load %arg8[%c0_152, %c0_153] : memref<256x128xf32, #tpu.memory_space<vmem>>, vector<256x128xf32>
    tpu.vector_store %arg8[%c0_152, %c0_153], %144 {strides = array<i32>} : memref<256x128xf32, #tpu.memory_space<vmem>>, vector<256x128xf32>,
    %c2_154 = arith.constant 2 : index
    %c2_155 = arith.constant 2 : index
    %c0_156 = arith.constant 0 : index
    %c0_157 = arith.constant 0 : index
    %146 = vector.load %arg7[%c2_154, %c2_155, %c0_156, %c0_157] : memref<3x18x16x128xbf16, #tpu.memory_space<vmem>>, vector<1x16x16x128xbf16>
    %147 = vector.shape_cast %146 : vector<1x16x16x128xbf16> to vector<16x16x128xbf16>
    %148 = vector.shape_cast %147 : vector<16x16x128xbf16> to vector<256x128xbf16>
    %c8 = arith.constant 8 : index
    %c0_158 = arith.constant 0 : index
    %c0_159 = arith.constant 0 : index
    %149 = vector.load %arg3[%c8, %c0_158, %c0_159] : memref<9x128x128xbf16, #tpu.memory_space<vmem>>, vector<1x128x128xbf16>
    %150 = vector.shape_cast %149 : vector<1x128x128xbf16> to vector<128x128xbf16>
    %cst_160 = arith.constant dense<0.000000e+00> : vector<256x128xf32>
    %151 = tpu.matmul %148, %150, %cst_160 {dimension_numbers = #tpu.dot_dimension_numbers<[1], [0], [0], [1], [0, 0, 1, 1], [], []>} : vector<256x128xbf16>, vector<128x128xbf16>, vector<256x128xf32> -> vector<256x128xf32>
    %c0_161 = arith.constant 0 : index
    %c0_162 = arith.constant 0 : index
    %152 = vector.load %arg8[%c0_161, %c0_162] : memref<256x128xf32, #tpu.memory_space<vmem>>, vector<256x128xf32>
    %153 = arith.addf %152, %151 : vector<256x128xf32>
    %c0_163 = arith.constant 0 : index
    %c0_164 = arith.constant 0 : index
    %154 = vector.load %arg8[%c0_163, %c0_164] : memref<256x128xf32, #tpu.memory_space<vmem>>, vector<256x128xf32>
    tpu.vector_store %arg8[%c0_163, %c0_164], %153 {strides = array<i32>} : memref<256x128xf32, #tpu.memory_space<vmem>>, vector<256x128xf32>,
    %c0_165 = arith.constant 0 : index
    %c0_166 = arith.constant 0 : index
    %155 = vector.load %arg8[%c0_165, %c0_166] : memref<256x128xf32, #tpu.memory_space<vmem>>, vector<256x128xf32>
    %156 = vector.broadcast %4 : vector<1x128xf32> to vector<256x128xf32>
    %157 = arith.addf %155, %156 : vector<256x128xf32>
    %cst_167 = arith.constant 0.000000e+00 : f32
    %158 = vector.broadcast %cst_167 : f32 to vector<256x128xf32>
    %159 = arith.maximumf %157, %158 : vector<256x128xf32>
    %160 = arith.truncf %159 : vector<256x128xf32> to vector<256x128xbf16>
    %c0_168 = arith.constant 0 : index
    %c0_169 = arith.constant 0 : index
    %161 = vector.load %arg4[%c0_168, %c0_169] : memref<128x128xbf16, #tpu.memory_space<vmem>>, vector<128x128xbf16>
    %cst_170 = arith.constant dense<0.000000e+00> : vector<256x128xf32>
    %162 = tpu.matmul %160, %161, %cst_170 {dimension_numbers = #tpu.dot_dimension_numbers<[1], [0], [0], [1], [0, 0, 1, 1], [], []>} : vector<256x128xbf16>, vector<128x128xbf16>, vector<256x128xf32> -> vector<256x128xf32>
    %163 = vector.broadcast %6 : vector<1x128xf32> to vector<256x128xf32>
    %164 = arith.addf %162, %163 : vector<256x128xf32>
    %165 = vector.shape_cast %164 : vector<256x128xf32> to vector<1x16x16x128xf32>
    %c0_171 = arith.constant 0 : index
    %c0_172 = arith.constant 0 : index
    %c0_173 = arith.constant 0 : index
    %c0_174 = arith.constant 0 : index
    %166 = vector.load %arg6[%c0_171, %c0_172, %c0_173, %c0_174] : memref<1x16x16x128xf32, #tpu.memory_space<vmem>>, vector<1x16x16x128xf32>
    tpu.vector_store %arg6[%c0_171, %c0_172, %c0_173, %c0_174], %165 {strides = array<i32>} : memref<1x16x16x128xf32, #tpu.memory_space<vmem>>, vector<1x16x16x128xf32>,
    return
  }
  func.func @transform_0(%arg0: i32) -> (i32, i32, i32, i32) {
    %c0_i32 = arith.constant 0 : i32
    %c0_i32_0 = arith.constant 0 : i32
    %c0_i32_1 = arith.constant 0 : i32
    %c0_i32_2 = arith.constant 0 : i32
    return %arg0, %c0_i32, %c0_i32_0, %c0_i32_1 : i32, i32, i32, i32
  }
  func.func @transform_1(%arg0: i32) -> (i32, i32) {
    %c0_i32 = arith.constant 0 : i32
    %c0_i32_0 = arith.constant 0 : i32
    %c0_i32_1 = arith.constant 0 : i32
    return %c0_i32, %c0_i32_0 : i32, i32
  }
  func.func @transform_2(%arg0: i32) -> (i32, i32, i32) {
    %c0_i32 = arith.constant 0 : i32
    %c0_i32_0 = arith.constant 0 : i32
    %c0_i32_1 = arith.constant 0 : i32
    %c0_i32_2 = arith.constant 0 : i32
    return %c0_i32, %c0_i32_0, %c0_i32_1 : i32, i32, i32
  }
  func.func @transform_3(%arg0: i32) -> (i32, i32) {
    %c0_i32 = arith.constant 0 : i32
    %c0_i32_0 = arith.constant 0 : i32
    %c0_i32_1 = arith.constant 0 : i32
    return %c0_i32, %c0_i32_0 : i32, i32
  }
  func.func @transform_4(%arg0: i32) -> (i32, i32, i32) {
    %c0_i32 = arith.constant 0 : i32
    %c0_i32_0 = arith.constant 0 : i32
    %c0_i32_1 = arith.constant 0 : i32
    %c0_i32_2 = arith.constant 0 : i32
    return %c0_i32, %c0_i32_0, %c0_i32_1 : i32, i32, i32
  }
  func.func @transform_5(%arg0: i32) -> (i32, i32, i32, i32) {
    %c0_i32 = arith.constant 0 : i32
    %c0_i32_0 = arith.constant 0 : i32
    %c0_i32_1 = arith.constant 0 : i32
    %c0_i32_2 = arith.constant 0 : i32
    return %arg0, %c0_i32, %c0_i32_0, %c0_i32_1 : i32, i32, i32, i32
  }
}

</mosaic_0001>

<llo_original>
// kernel: res_bottleneck_block.1
$region0: #{res_bottleneck_block.1}
  #allocation0 [shape = 'u32[]', space=smem, size = 0x4, offset = 0x4, fixed_abs, tag = 'smem constant byte address 0x4 - core index']
  #allocation1 [shape = 'u32[72,128]{1,0:T(1,128)}', space=vmem, size = 0x9000, scoped, tag = 'internal scratch']
  #allocation2 [shape = 'bf16[3,18,16,128]{3,2,1,0:T(8,128)(2,1)}', space=vmem, size = 0x36000, scoped, tag = 'scratch operand']
  #allocation3 [shape = 'f32[256,128]{1,0:T(8,128)}', space=vmem, size = 0x20000, scoped, tag = 'scratch operand']
  %s0 = inlined_call_operand.vmem [shape: bf16[2,48,16,16], index: 0, kind: input, shape index: {}]
  %s1 = inlined_call_operand.vmem [shape: bf16[16,128], index: 1, kind: input, shape index: {}]
  %s2 = inlined_call_operand.vmem [shape: bf16[9,128,128], index: 2, kind: input, shape index: {}]
  %s3 = inlined_call_operand.vmem [shape: bf16[128,128], index: 3, kind: input, shape index: {}]
  %s4 = inlined_call_operand.vmem [shape: f32[3,1,128], index: 4, kind: input, shape index: {}]
  %s5 = inlined_call_operand.vmem [shape: f32[2,16,16,128], index: 5, kind: output, shape index: {}]
  %s6 = sld [smem:[#allocation0]]
  $region53: #{res_bottleneck_block.1} parent=0
    _
  %s8 = ssub.s32 1, %s6
  %s9 = scalar_select 0, %s8, %s6
  loop: start=0, step=1, limit=4
  $region2: #{res_bottleneck_block.1} parent=0 // loop_pre_header
    _
  $region3: #{res_bottleneck_block.1} parent=0 // loop_header
    %s11 = sphi 0, %s15
    %p12 = scmp.ge.s32.totalorder %s11, 4
    %s21 = sphi 0, %s23
    %s24 = sphi 0, %s21
    %s25 = sphi 0, %s24
    %s41 = sphi 0, %s25
    %s45 = sphi 0, %s45
    %s47 = sphi 0, %s45
    %s48 = sphi 0, %s47
    %s62 = sphi 0, %s48
    %s66 = sphi 0, %s66
    %s68 = sphi 0, %s66
    %s69 = sphi 0, %s68
    %s83 = sphi 0, %s69
    %s87 = sphi 0, %s87
    %s89 = sphi 0, %s87
    %s90 = sphi 0, %s89
    %s104 = sphi 0, %s90
    %s108 = sphi 0, %s108
    %s110 = sphi 0, %s108
    %s111 = sphi 0, %s110
    %s125 = sphi 0, %s111
    %s131 = sphi 0, %s133
    %s134 = sphi 0, %s131
    %s135 = sphi 0, %s134
    %s151 = sphi 0, %s135
  $region4: #{res_bottleneck_block.1} parent=0 // loop_header_branch
    %14 = sbr.rel (%p12) target = $region8
  $region5: #{res_bottleneck_block.1} parent=0 // loop_body
    %s16 = ssub.s32 %s11, 1
    %s17 = ssub.s32 %s11, 2
    %s18 = sadd.s32 %s11, 1
    %s19 = ssub.s32 %s11, %s18
    %p20 = scmp.eq.s32.totalorder %s19, 0
    %s22 = sadd.s32 %s21, 1
    %s23 = scalar_select %p20, %s21, %s22
    %p26 = pneg %p20
    %p27 = scmp.eq.s32.totalorder %s11, 1
    %p28 = por %p26, %p27
    %p29 = scmp.ne.s32.totalorder %s21, %s24
    %p30 = scmp.eq.s32.totalorder %s11, 0
    %p31 = por %p29, %p30
    %p32 = scmp.ne.s32.totalorder %s21, %s24
    %p33 = scmp.eq.s32.totalorder %s16, 1
    %p34 = por %p32, %p33
    %p35 = scmp.ne.s32.totalorder %s24, %s25
    %p36 = scmp.eq.s32.totalorder %s16, 0
    %p37 = por %p35, %p36
    %p38 = scmp.ne.s32.totalorder %s24, %s25
    %p39 = scmp.eq.s32.totalorder %s17, 1
    %p40 = por %p38, %p39
    %p42 = scmp.ne.s32.totalorder %s25, %s41
    %p43 = scmp.eq.s32.totalorder %s17, 0
    %p44 = por %p42, %p43
    %s46 = sadd.s32 %s45, 1
    %p49 = scmp.eq.s32.totalorder %s11, 1
    %p50 = scmp.ne.s32.totalorder %s45, %s47
    %p51 = scmp.eq.s32.totalorder %s11, 0
    %p52 = por %p50, %p51
    %p53 = scmp.ne.s32.totalorder %s45, %s47
    %p54 = scmp.eq.s32.totalorder %s16, 1
    %p55 = por %p53, %p54
    %p56 = scmp.ne.s32.totalorder %s47, %s48
    %p57 = scmp.eq.s32.totalorder %s16, 0
    %p58 = por %p56, %p57
    %p59 = scmp.ne.s32.totalorder %s47, %s48
    %p60 = scmp.eq.s32.totalorder %s17, 1
    %p61 = por %p59, %p60
    %p63 = scmp.ne.s32.totalorder %s48, %s62
    %p64 = scmp.eq.s32.totalorder %s17, 0
    %p65 = por %p63, %p64
    %s67 = sadd.s32 %s66, 1
    %p70 = scmp.eq.s32.totalorder %s11, 1
    %p71 = scmp.ne.s32.totalorder %s66, %s68
    %p72 = scmp.eq.s32.totalorder %s11, 0
    %p73 = por %p71, %p72
    %p74 = scmp.ne.s32.totalorder %s66, %s68
    %p75 = scmp.eq.s32.totalorder %s16, 1
    %p76 = por %p74, %p75
    %p77 = scmp.ne.s32.totalorder %s68, %s69
    %p78 = scmp.eq.s32.totalorder %s16, 0
    %p79 = por %p77, %p78
    %p80 = scmp.ne.s32.totalorder %s68, %s69
    %p81 = scmp.eq.s32.totalorder %s17, 1
    %p82 = por %p80, %p81
    %p84 = scmp.ne.s32.totalorder %s69, %s83
    %p85 = scmp.eq.s32.totalorder %s17, 0
    %p86 = por %p84, %p85
    %s88 = sadd.s32 %s87, 1
    %p91 = scmp.eq.s32.totalorder %s11, 1
    %p92 = scmp.ne.s32.totalorder %s87, %s89
    %p93 = scmp.eq.s32.totalorder %s11, 0
    %p94 = por %p92, %p93
    %p95 = scmp.ne.s32.totalorder %s87, %s89
    %p96 = scmp.eq.s32.totalorder %s16, 1
    %p97 = por %p95, %p96
    %p98 = scmp.ne.s32.totalorder %s89, %s90
    %p99 = scmp.eq.s32.totalorder %s16, 0
    %p100 = por %p98, %p99
    %p101 = scmp.ne.s32.totalorder %s89, %s90
    %p102 = scmp.eq.s32.totalorder %s17, 1
    %p103 = por %p101, %p102
    %p105 = scmp.ne.s32.totalorder %s90, %s104
    %p106 = scmp.eq.s32.totalorder %s17, 0
    %p107 = por %p105, %p106
    %s109 = sadd.s32 %s108, 1
    %p112 = scmp.eq.s32.totalorder %s11, 1
    %p113 = scmp.ne.s32.totalorder %s108, %s110
    %p114 = scmp.eq.s32.totalorder %s11, 0
    %p115 = por %p113, %p114
    %p116 = scmp.ne.s32.totalorder %s108, %s110
    %p117 = scmp.eq.s32.totalorder %s16, 1
    %p118 = por %p116, %p117
    %p119 = scmp.ne.s32.totalorder %s110, %s111
    %p120 = scmp.eq.s32.totalorder %s16, 0
    %p121 = por %p119, %p120
    %p122 = scmp.ne.s32.totalorder %s110, %s111
    %p123 = scmp.eq.s32.totalorder %s17, 1
    %p124 = por %p122, %p123
    %p126 = scmp.ne.s32.totalorder %s111, %s125
    %p127 = scmp.eq.s32.totalorder %s17, 0
    %p128 = por %p126, %p127
    %s129 = ssub.s32 %s11, %s18
    %p130 = scmp.eq.s32.totalorder %s129, 0
    %s132 = sadd.s32 %s131, 1
    %s133 = scalar_select %p130, %s131, %s132
    %p136 = pneg %p130
    %p137 = scmp.eq.s32.totalorder %s11, 1
    %p138 = por %p136, %p137
    %p139 = scmp.ne.s32.totalorder %s131, %s134
    %p140 = scmp.eq.s32.totalorder %s11, 0
    %p141 = por %p139, %p140
    %p142 = scmp.ne.s32.totalorder %s131, %s134
    %p143 = scmp.eq.s32.totalorder %s16, 1
    %p144 = por %p142, %p143
    %p145 = scmp.ne.s32.totalorder %s134, %s135
    %p146 = scmp.eq.s32.totalorder %s16, 0
    %p147 = por %p145, %p146
    %p148 = scmp.ne.s32.totalorder %s134, %s135
    %p149 = scmp.eq.s32.totalorder %s17, 1
    %p150 = por %p148, %p149
    %p152 = scmp.ne.s32.totalorder %s135, %s151
    %p153 = scmp.eq.s32.totalorder %s17, 0
    %p154 = por %p152, %p153
    %p155 = scmp.le.s32.totalorder 1, %s11
    %p156 = scmp.lt.s32.totalorder %s11, 3
    %p157 = pnand %p155, %p156
    %p158 = pneg %p157
    // Predicated region
    $region9: #{res_bottleneck_block.1} parent=5 // pred_check
      _
    $region10: #{res_bottleneck_block.1} parent=5 // pred_check_branch
      %160 = sbr.rel (%p157) target = $region12
    $region11: #{res_bottleneck_block.1} parent=5 // pred_region
      %s161 = ssub.s32 %s11, 1
      // Predicated region
      $region13: #{res_bottleneck_block.1} parent=11 // pred_check
        %p162 = pneg %p58
      $region14: #{res_bottleneck_block.1} parent=11 // pred_check_branch
        %164 = sbr.rel (%p162) target = $region16
      $region15: #{res_bottleneck_block.1} parent=11 // pred_region
        _
      $region16: #{res_bottleneck_block.1} parent=11 // pred_fallthru
        _
      // Predicated region
      $region17: #{res_bottleneck_block.1} parent=11 // pred_check
        %p165 = pneg %p79
      $region18: #{res_bottleneck_block.1} parent=11 // pred_check_branch
        %167 = sbr.rel (%p165) target = $region20
      $region19: #{res_bottleneck_block.1} parent=11 // pred_region
        _
      $region20: #{res_bottleneck_block.1} parent=11 // pred_fallthru
        _
      // Predicated region
      $region21: #{res_bottleneck_block.1} parent=11 // pred_check
        %p168 = pneg %p100
      $region22: #{res_bottleneck_block.1} parent=11 // pred_check_branch
        %170 = sbr.rel (%p168) target = $region24
      $region23: #{res_bottleneck_block.1} parent=11 // pred_region
        _
      $region24: #{res_bottleneck_block.1} parent=11 // pred_fallthru
        _
      // Predicated region
      $region25: #{res_bottleneck_block.1} parent=11 // pred_check
        %p171 = pneg %p121
      $region26: #{res_bottleneck_block.1} parent=11 // pred_check_branch
        %173 = sbr.rel (%p171) target = $region28
      $region27: #{res_bottleneck_block.1} parent=11 // pred_region
        _
      $region28: #{res_bottleneck_block.1} parent=11 // pred_fallthru
        _
    $region12: #{res_bottleneck_block.1} parent=5 // pred_fallthru
      _
    %p174 = scmp.lt.s32.totalorder %s11, 2
    // Predicated region
    $region29: #{res_bottleneck_block.1} parent=5 // pred_check
      %p175 = pneg %p174
    $region30: #{res_bottleneck_block.1} parent=5 // pred_check_branch
      %177 = sbr.rel (%p175) target = $region32
    $region31: #{res_bottleneck_block.1} parent=5 // pred_region
      // Predicated region
      $region33: #{res_bottleneck_block.1} parent=31 // pred_check
        %p178 = pneg %p31
      $region34: #{res_bottleneck_block.1} parent=31 // pred_check_branch
        %180 = sbr.rel (%p178) target = $region36
      $region35: #{res_bottleneck_block.1} parent=31 // pred_region
        %p181 = scmp.lt.s32.totalorder %s11, 1
        %s182 = scalar_select %p181, %s11, 1
        %s183 = smul.addr %s182, 96
        %s184 = smul.addr %s183, 4
        %s185 = scalar_lea.vmem %s0, %s184
      $region36: #{res_bottleneck_block.1} parent=31 // pred_fallthru
        _
    $region32: #{res_bottleneck_block.1} parent=5 // pred_fallthru
      _
    %p186 = scmp.le.s32.totalorder 1, %s11
    %p187 = scmp.lt.s32.totalorder %s11, 3
    %p188 = pnand %p186, %p187
    %p189 = pneg %p188
    // Predicated region
    $region37: #{res_bottleneck_block.1} parent=5 // pred_check
      _
    $region38: #{res_bottleneck_block.1} parent=5 // pred_check_branch
      %191 = sbr.rel (%p188) target = $region40
    $region39: #{res_bottleneck_block.1} parent=5 // pred_region
      %s192 = ssub.s32 %s11, 1
      %p193 = scmp.lt.s32.totalorder %s16, 1
      %s194 = scalar_select %p193, %s16, 1
      %s195 = smul.addr %s194, 96
      %s196 = smul.addr %s195, 4
      %s197 = scalar_lea.vmem %s0, %s196
      %p198 = pneg %p37
      %p199 = pneg %p34
      %p200 = pneg %p58
      %p201 = pneg %p55
      %p202 = pneg %p79
      %p203 = pneg %p76
      %p204 = pneg %p100
      %p205 = pneg %p97
      %p206 = pneg %p121
      %p207 = pneg %p118
      %p208 = pneg %p147
      %p209 = pneg %p144
      %p210 = scmp.lt.s32.totalorder %s16, 1
      %s211 = scalar_select %p210, %s16, 1
      %s212 = smul.addr %s211, 32
      %s213 = smul.addr %s212, 8
      %s214 = scalar_lea.vmem %s5, %s213
      %p215 = scmp.lt.s32.totalorder %s16, 1
      %s216 = scalar_select %p215, %s16, 1
      %s217 = smul.addr %s216, 96
      %s218 = smul.addr %s217, 4
      %s219 = scalar_lea.vmem %s0, %s218
      %p220 = scmp.lt.s32.totalorder %s16, 1
      %s221 = scalar_select %p220, %s16, 1
      %s222 = smul.addr %s221, 32
      %s223 = smul.addr %s222, 8
      %s224 = scalar_lea.vmem %s5, %s223
      %v226 = vlaneseq
      %v227 = vshrl.u32 %v226, 7
      %v228 = vadd.s32 %v227, 8
      %v229 = vld [vmem:[%s4] sm:$0x1]
      %s230 = scalar_lea.vmem %s4, 1
      %v231 = vld [vmem:[%s230] sm:$0x1]
      %s232 = scalar_lea.vmem %s4, 2
      %v233 = vld [vmem:[%s232] sm:$0x1]
      %v234 = vld [vmem:[%s219] sm:$0xf]
      %v235 = vld [vmem:[%s219 + $0x4] sm:$0xf]
      %v236 = vld [vmem:[%s219 + $0x8] sm:$0xf]
      %v237 = vld [vmem:[%s219 + $0xc] sm:$0xf]
      %v238 = vld [vmem:[%s219 + $0x10] sm:$0xf]
      %v239 = vld [vmem:[%s219 + $0x14] sm:$0xf]
      %v240 = vld [vmem:[%s219 + $0x18] sm:$0xf]
      %v241 = vld [vmem:[%s219 + $0x1c] sm:$0xf]
      %v242 = vld [vmem:[%s219 + $0x20] sm:$0xf]
      %v243 = vld [vmem:[%s219 + $0x24] sm:$0xf]
      %v244 = vld [vmem:[%s219 + $0x28] sm:$0xf]
      %v245 = vld [vmem:[%s219 + $0x2c] sm:$0xf]
      %v246 = vld [vmem:[%s219 + $0x30] sm:$0xf]
      %v247 = vld [vmem:[%s219 + $0x34] sm:$0xf]
      %v248 = vld [vmem:[%s219 + $0x38] sm:$0xf]
      %v249 = vld [vmem:[%s219 + $0x3c] sm:$0xf]
      %v250 = vld [vmem:[%s219 + $0x40] sm:$0xf]
      %v251 = vld [vmem:[%s219 + $0x44] sm:$0xf]
      %v252 = vld [vmem:[%s219 + $0x48] sm:$0xf]
      %v253 = vld [vmem:[%s219 + $0x4c] sm:$0xf]
      %v254 = vld [vmem:[%s219 + $0x50] sm:$0xf]
      %v255 = vld [vmem:[%s219 + $0x54] sm:$0xf]
      %v256 = vld [vmem:[%s219 + $0x58] sm:$0xf]
      %v257 = vld [vmem:[%s219 + $0x5c] sm:$0xf]
      %v258 = vld [vmem:[%s219 + $0x60] sm:$0xf]
      %v259 = vld [vmem:[%s219 + $0x64] sm:$0xf]
      %v260 = vld [vmem:[%s219 + $0x68] sm:$0xf]
      %v261 = vld [vmem:[%s219 + $0x6c] sm:$0xf]
      %v262 = vld [vmem:[%s219 + $0x70] sm:$0xf]
      %v263 = vld [vmem:[%s219 + $0x74] sm:$0xf]
      %v264 = vld [vmem:[%s219 + $0x78] sm:$0xf]
      %v265 = vld [vmem:[%s219 + $0x7c] sm:$0xf]
      %v266 = vld [vmem:[%s1] sm:$0xf]
      %v267 = vld [vmem:[%s1 + $0x4] sm:$0xf]
      %v269 = vperm.slane %v229, 0
      %v303 = vunpack.c.l.b16 %v234
      %v304 = vunpack.c.l.b16 %v235
      %v305 = vunpack.c.l.b16 %v236
      %v306 = vunpack.c.l.b16 %v237
      %v307 = vunpack.c.l.b16 %v238
      %v308 = vunpack.c.l.b16 %v239
      %v309 = vunpack.c.l.b16 %v240
      %v310 = vunpack.c.l.b16 %v241
      %v311 = vunpack.c.l.b16 %v242
      %v312 = vunpack.c.l.b16 %v243
      %v313 = vunpack.c.l.b16 %v244
      %v314 = vunpack.c.l.b16 %v245
      %v315 = vunpack.c.l.b16 %v246
      %v316 = vunpack.c.l.b16 %v247
      %v317 = vunpack.c.l.b16 %v248
      %v318 = vunpack.c.l.b16 %v249
      %v319 = vunpack.c.l.b16 %v250
      %v320 = vunpack.c.l.b16 %v251
      %v321 = vunpack.c.l.b16 %v252
      %v322 = vunpack.c.l.b16 %v253
      %v323 = vunpack.c.l.b16 %v254
      %v324 = vunpack.c.l.b16 %v255
      %v325 = vunpack.c.l.b16 %v256
      %v326 = vunpack.c.l.b16 %v257
      %v327 = vunpack.c.l.b16 %v258
      %v328 = vunpack.c.l.b16 %v259
      %v329 = vunpack.c.l.b16 %v260
      %v330 = vunpack.c.l.b16 %v261
      %v331 = vunpack.c.l.b16 %v262
      %v332 = vunpack.c.l.b16 %v263
      %v333 = vunpack.c.l.b16 %v264
      %v334 = vunpack.c.l.b16 %v265
      %v335 = vpack.c.b16 %v304, %v303
      %v336 = vpack.c.b16 %v306, %v305
      %v337 = vpack.c.b16 %v308, %v307
      %v338 = vpack.c.b16 %v310, %v309
      %v339 = vpack.c.b16 %v312, %v311
      %v340 = vpack.c.b16 %v314, %v313
      %v341 = vpack.c.b16 %v316, %v315
      %v342 = vpack.c.b16 %v318, %v317
      %v343 = vpack.c.b16 %v320, %v319
      %v344 = vpack.c.b16 %v322, %v321
      %v345 = vpack.c.b16 %v324, %v323
      %v346 = vpack.c.b16 %v326, %v325
      %v347 = vpack.c.b16 %v328, %v327
      %v348 = vpack.c.b16 %v330, %v329
      %v349 = vpack.c.b16 %v332, %v331
      %v350 = vpack.c.b16 %v334, %v333
      %v353 = vunpack.c.l.b16 %v266
      %v354 = vunpack.c.l.b16 %v267
      %v355 = vpack.c.b16 %v354, %v353
      %vm357 = vcmask 130048
      %v359 = vsel %vm357, %v335, 0
      %v362 = vsel %vm357, %v336, 0
      %v365 = vsel %vm357, %v337, 0
      %v368 = vsel %vm357, %v338, 0
      %v371 = vsel %vm357, %v339, 0
      %v374 = vsel %vm357, %v340, 0
      %v377 = vsel %vm357, %v341, 0
      %v380 = vsel %vm357, %v342, 0
      %v383 = vsel %vm357, %v343, 0
      %v386 = vsel %vm357, %v344, 0
      %v389 = vsel %vm357, %v345, 0
      %v392 = vsel %vm357, %v346, 0
      %v395 = vsel %vm357, %v347, 0
      %v398 = vsel %vm357, %v348, 0
      %v401 = vsel %vm357, %v349, 0
      %v404 = vsel %vm357, %v350, 0
      %406 = vmatpush.bf16.msra.mxu0 0
      %407 = vmatpush.bf16.msra.mxu0 0
      %408 = vmatpush.bf16.msra.mxu0 0
      %409 = vmatpush.bf16.msra.mxu0 0
      %410 = vmatpush.bf16.msra.mxu0 0
      %411 = vmatpush.bf16.msra.mxu0 0
      %412 = vmatpush.bf16.msra.mxu0 0
      %413 = vmatpush.bf16.msra.mxu0 %v355
      %414 = vmatmul.bf16.gmra.mxu0 %v359
      %v415 = vpop.f32.mrf.mxu0
      %v416 = vadd.f32 %v269, %v415
      %v417 = vpop.f32.mrf.mxu0
      %v418 = vadd.f32 %v269, %v417
      %419 = vmatmul.bf16.gmra.mxu0 %v362
      %v420 = vpop.f32.mrf.mxu0
      %v421 = vadd.f32 %v269, %v420
      %v422 = vpop.f32.mrf.mxu0
      %v423 = vadd.f32 %v269, %v422
      %424 = vmatmul.bf16.gmra.mxu0 %v365
      %v425 = vpop.f32.mrf.mxu0
      %v426 = vadd.f32 %v269, %v425
      %v427 = vpop.f32.mrf.mxu0
      %v428 = vadd.f32 %v269, %v427
      %429 = vmatmul.bf16.gmra.mxu0 %v368
      %v430 = vpop.f32.mrf.mxu0
      %v431 = vadd.f32 %v269, %v430
      %v432 = vpop.f32.mrf.mxu0
      %v433 = vadd.f32 %v269, %v432
      %434 = vmatmul.bf16.gmra.mxu0 %v371
      %v435 = vpop.f32.mrf.mxu0
      %v436 = vadd.f32 %v269, %v435
      %v437 = vpop.f32.mrf.mxu0
      %v438 = vadd.f32 %v269, %v437
      %439 = vmatmul.bf16.gmra.mxu0 %v374
      %v440 = vpop.f32.mrf.mxu0
      %v441 = vadd.f32 %v269, %v440
      %v442 = vpop.f32.mrf.mxu0
      %v443 = vadd.f32 %v269, %v442
      %444 = vmatmul.bf16.gmra.mxu0 %v377
      %v445 = vpop.f32.mrf.mxu0
      %v446 = vadd.f32 %v269, %v445
      %v447 = vpop.f32.mrf.mxu0
      %v448 = vadd.f32 %v269, %v447
      %449 = vmatmul.bf16.gmra.mxu0 %v380
      %v450 = vpop.f32.mrf.mxu0
      %v451 = vadd.f32 %v269, %v450
      %v452 = vpop.f32.mrf.mxu0
      %v453 = vadd.f32 %v269, %v452
      %454 = vmatmul.bf16.gmra.mxu0 %v383
      %v455 = vpop.f32.mrf.mxu0
      %v456 = vadd.f32 %v269, %v455
      %v457 = vpop.f32.mrf.mxu0
      %v458 = vadd.f32 %v269, %v457
      %459 = vmatmul.bf16.gmra.mxu0 %v386
      %v460 = vpop.f32.mrf.mxu0
      %v461 = vadd.f32 %v269, %v460
      %v462 = vpop.f32.mrf.mxu0
      %v463 = vadd.f32 %v269, %v462
      %464 = vmatmul.bf16.gmra.mxu0 %v389
      %v465 = vpop.f32.mrf.mxu0
      %v466 = vadd.f32 %v269, %v465
      %v467 = vpop.f32.mrf.mxu0
      %v468 = vadd.f32 %v269, %v467
      %469 = vmatmul.bf16.gmra.mxu0 %v392
      %v470 = vpop.f32.mrf.mxu0
      %v471 = vadd.f32 %v269, %v470
      %v472 = vpop.f32.mrf.mxu0
      %v473 = vadd.f32 %v269, %v472
      %474 = vmatmul.bf16.gmra.mxu0 %v395
      %v475 = vpop.f32.mrf.mxu0
      %v476 = vadd.f32 %v269, %v475
      %v477 = vpop.f32.mrf.mxu0
      %v478 = vadd.f32 %v269, %v477
      %479 = vmatmul.bf16.gmra.mxu0 %v398
      %v480 = vpop.f32.mrf.mxu0
      %v481 = vadd.f32 %v269, %v480
      %v482 = vpop.f32.mrf.mxu0
      %v483 = vadd.f32 %v269, %v482
      %484 = vmatmul.bf16.gmra.mxu0 %v401
      %v485 = vpop.f32.mrf.mxu0
      %v486 = vadd.f32 %v269, %v485
      %v487 = vpop.f32.mrf.mxu0
      %v488 = vadd.f32 %v269, %v487
      %489 = vmatmul.bf16.gmra.mxu0 %v404
      %v490 = vpop.f32.mrf.mxu0
      %v491 = vadd.f32 %v269, %v490
      %v492 = vpop.f32.mrf.mxu0
      %v493 = vadd.f32 %v269, %v492
      %494 = vdwg.mxu0
      %v495 = vmax.f32 %v416, 0.0
      %v496 = vmax.f32 %v418, 0.0
      %v497 = vmax.f32 %v421, 0.0
      %v498 = vmax.f32 %v423, 0.0
      %v499 = vmax.f32 %v426, 0.0
      %v500 = vmax.f32 %v428, 0.0
      %v501 = vmax.f32 %v431, 0.0
      %v502 = vmax.f32 %v433, 0.0
      %v503 = vmax.f32 %v436, 0.0
      %v504 = vmax.f32 %v438, 0.0
      %v505 = vmax.f32 %v441, 0.0
      %v506 = vmax.f32 %v443, 0.0
      %v507 = vmax.f32 %v446, 0.0
      %v508 = vmax.f32 %v448, 0.0
      %v509 = vmax.f32 %v451, 0.0
      %v510 = vmax.f32 %v453, 0.0
      %v511 = vmax.f32 %v456, 0.0
      %v512 = vmax.f32 %v458, 0.0
      %v513 = vmax.f32 %v461, 0.0
      %v514 = vmax.f32 %v463, 0.0
      %v515 = vmax.f32 %v466, 0.0
      %v516 = vmax.f32 %v468, 0.0
      %v517 = vmax.f32 %v471, 0.0
      %v518 = vmax.f32 %v473, 0.0
      %v519 = vmax.f32 %v476, 0.0
      %v520 = vmax.f32 %v478, 0.0
      %v521 = vmax.f32 %v481, 0.0
      %v522 = vmax.f32 %v483, 0.0
      %v523 = vmax.f32 %v486, 0.0
      %v524 = vmax.f32 %v488, 0.0
      %v525 = vmax.f32 %v491, 0.0
      %v526 = vmax.f32 %v493, 0.0
      %vm527 = vcmp.ge.s32.totalorder %v227, 1
      %vm528 = vcmp.ge.s32.totalorder %v228, 1
      %v529 = vsel %vm527, %v495, 0.0
      %v530 = vsel %vm528, %v496, 0.0
      %v531 = vsel %vm527, %v497, 0.0
      %v532 = vsel %vm528, %v498, 0.0
      %v533 = vsel %vm527, %v499, 0.0
      %v534 = vsel %vm528, %v500, 0.0
      %v535 = vsel %vm527, %v501, 0.0
      %v536 = vsel %vm528, %v502, 0.0
      %v537 = vsel %vm527, %v503, 0.0
      %v538 = vsel %vm528, %v504, 0.0
      %v539 = vsel %vm527, %v505, 0.0
      %v540 = vsel %vm528, %v506, 0.0
      %v541 = vsel %vm527, %v507, 0.0
      %v542 = vsel %vm528, %v508, 0.0
      %v543 = vsel %vm527, %v509, 0.0
      %v544 = vsel %vm528, %v510, 0.0
      %v545 = vsel %vm527, %v511, 0.0
      %v546 = vsel %vm528, %v512, 0.0
      %v547 = vsel %vm527, %v513, 0.0
      %v548 = vsel %vm528, %v514, 0.0
      %v549 = vsel %vm527, %v515, 0.0
      %v550 = vsel %vm528, %v516, 0.0
      %v551 = vsel %vm527, %v517, 0.0
      %v552 = vsel %vm528, %v518, 0.0
      %v553 = vsel %vm527, %v519, 0.0
      %v554 = vsel %vm528, %v520, 0.0
      %v555 = vsel %vm527, %v521, 0.0
      %v556 = vsel %vm528, %v522, 0.0
      %v557 = vsel %vm527, %v523, 0.0
      %v558 = vsel %vm528, %v524, 0.0
      %v559 = vsel %vm527, %v525, 0.0
      %v560 = vsel %vm528, %v526, 0.0
      %561 = vst [vmem:[#allocation2] sm:$0xf] 0
      %562 = vst [vmem:[#allocation2 + $0x4] sm:$0xf] 0
      %v563 = vpack.c.bf16 %v529, %v529
      %v564 = vpack.c.bf16 %v530, %v530
      %v565 = vpack.c.bf16 %v531, %v531
      %v566 = vpack.c.bf16 %v532, %v532
      %v567 = vpack.c.bf16 %v533, %v533
      %v568 = vpack.c.bf16 %v534, %v534
      %v569 = vpack.c.bf16 %v535, %v535
      %v570 = vpack.c.bf16 %v536, %v536
      %v571 = vpack.c.bf16 %v537, %v537
      %v572 = vpack.c.bf16 %v538, %v538
      %v573 = vpack.c.bf16 %v539, %v539
      %v574 = vpack.c.bf16 %v540, %v540
      %v575 = vpack.c.bf16 %v541, %v541
      %v576 = vpack.c.bf16 %v542, %v542
      %v577 = vpack.c.bf16 %v543, %v543
      %v578 = vpack.c.bf16 %v544, %v544
      %v579 = vpack.c.bf16 %v545, %v545
      %v580 = vpack.c.bf16 %v546, %v546
      %v581 = vpack.c.bf16 %v547, %v547
      %v582 = vpack.c.bf16 %v548, %v548
      %v583 = vpack.c.bf16 %v549, %v549
      %v584 = vpack.c.bf16 %v550, %v550
      %v585 = vpack.c.bf16 %v551, %v551
      %v586 = vpack.c.bf16 %v552, %v552
      %v587 = vpack.c.bf16 %v553, %v553
      %v588 = vpack.c.bf16 %v554, %v554
      %v589 = vpack.c.bf16 %v555, %v555
      %v590 = vpack.c.bf16 %v556, %v556
      %v591 = vpack.c.bf16 %v557, %v557
      %v592 = vpack.c.bf16 %v558, %v558
      %v593 = vpack.c.bf16 %v559, %v559
      %v594 = vpack.c.bf16 %v560, %v560
      %s595 = scalar_lea.vmem [#allocation2], 8
      %596 = vst [vmem:[%s595] sm:$0xf] %v563
      %597 = vst [vmem:[%s595 + $0x4] sm:$0xf] %v564
      %598 = vst [vmem:[%s595 + $0x8] sm:$0xf] %v565
      %599 = vst [vmem:[%s595 + $0xc] sm:$0xf] %v566
      %600 = vst [vmem:[%s595 + $0x10] sm:$0xf] %v567
      %601 = vst [vmem:[%s595 + $0x14] sm:$0xf] %v568
      %602 = vst [vmem:[%s595 + $0x18] sm:$0xf] %v569
      %603 = vst [vmem:[%s595 + $0x1c] sm:$0xf] %v570
      %604 = vst [vmem:[%s595 + $0x20] sm:$0xf] %v571
      %605 = vst [vmem:[%s595 + $0x24] sm:$0xf] %v572
      %606 = vst [vmem:[%s595 + $0x28] sm:$0xf] %v573
      %607 = vst [vmem:[%s595 + $0x2c] sm:$0xf] %v574
      %608 = vst [vmem:[%s595 + $0x30] sm:$0xf] %v575
      %609 = vst [vmem:[%s595 + $0x34] sm:$0xf] %v576
      %610 = vst [vmem:[%s595 + $0x38] sm:$0xf] %v577
      %611 = vst [vmem:[%s595 + $0x3c] sm:$0xf] %v578
      %612 = vst [vmem:[%s595 + $0x40] sm:$0xf] %v579
      %613 = vst [vmem:[%s595 + $0x44] sm:$0xf] %v580
      %614 = vst [vmem:[%s595 + $0x48] sm:$0xf] %v581
      %615 = vst [vmem:[%s595 + $0x4c] sm:$0xf] %v582
      %616 = vst [vmem:[%s595 + $0x50] sm:$0xf] %v583
      %617 = vst [vmem:[%s595 + $0x54] sm:$0xf] %v584
      %618 = vst [vmem:[%s595 + $0x58] sm:$0xf] %v585
      %619 = vst [vmem:[%s595 + $0x5c] sm:$0xf] %v586
      %620 = vst [vmem:[%s595 + $0x60] sm:$0xf] %v587
      %621 = vst [vmem:[%s595 + $0x64] sm:$0xf] %v588
      %622 = vst [vmem:[%s595 + $0x68] sm:$0xf] %v589
      %623 = vst [vmem:[%s595 + $0x6c] sm:$0xf] %v590
      %624 = vst [vmem:[%s595 + $0x70] sm:$0xf] %v591
      %625 = vst [vmem:[%s595 + $0x74] sm:$0xf] %v592
      %626 = vst [vmem:[%s595 + $0x78] sm:$0xf] %v593
      %627 = vst [vmem:[%s595 + $0x7c] sm:$0xf] %v594
      %s628 = scalar_lea.vmem [#allocation2], 136
      %629 = vst [vmem:[%s628] sm:$0xf] 0
      %630 = vst [vmem:[%s628 + $0x4] sm:$0xf] 0
      %s631 = scalar_lea.vmem %s219, 128
      %v632 = vld [vmem:[%s631] sm:$0xf]
      %v633 = vld [vmem:[%s631 + $0x4] sm:$0xf]
      %v634 = vld [vmem:[%s631 + $0x8] sm:$0xf]
      %v635 = vld [vmem:[%s631 + $0xc] sm:$0xf]
      %v636 = vld [vmem:[%s631 + $0x10] sm:$0xf]
      %v637 = vld [vmem:[%s631 + $0x14] sm:$0xf]
      %v638 = vld [vmem:[%s631 + $0x18] sm:$0xf]
      %v639 = vld [vmem:[%s631 + $0x1c] sm:$0xf]
      %v640 = vld [vmem:[%s631 + $0x20] sm:$0xf]
      %v641 = vld [vmem:[%s631 + $0x24] sm:$0xf]
      %v642 = vld [vmem:[%s631 + $0x28] sm:$0xf]
      %v643 = vld [vmem:[%s631 + $0x2c] sm:$0xf]
      %v644 = vld [vmem:[%s631 + $0x30] sm:$0xf]
      %v645 = vld [vmem:[%s631 + $0x34] sm:$0xf]
      %v646 = vld [vmem:[%s631 + $0x38] sm:$0xf]
      %v647 = vld [vmem:[%s631 + $0x3c] sm:$0xf]
      %v648 = vld [vmem:[%s631 + $0x40] sm:$0xf]
      %v649 = vld [vmem:[%s631 + $0x44] sm:$0xf]
      %v650 = vld [vmem:[%s631 + $0x48] sm:$0xf]
      %v651 = vld [vmem:[%s631 + $0x4c] sm:$0xf]
      %v652 = vld [vmem:[%s631 + $0x50] sm:$0xf]
      %v653 = vld [vmem:[%s631 + $0x54] sm:$0xf]
      %v654 = vld [vmem:[%s631 + $0x58] sm:$0xf]
      %v655 = vld [vmem:[%s631 + $0x5c] sm:$0xf]
      %v656 = vld [vmem:[%s631 + $0x60] sm:$0xf]
      %v657 = vld [vmem:[%s631 + $0x64] sm:$0xf]
      %v658 = vld [vmem:[%s631 + $0x68] sm:$0xf]
      %v659 = vld [vmem:[%s631 + $0x6c] sm:$0xf]
      %v660 = vld [vmem:[%s631 + $0x70] sm:$0xf]
      %v661 = vld [vmem:[%s631 + $0x74] sm:$0xf]
      %v662 = vld [vmem:[%s631 + $0x78] sm:$0xf]
      %v663 = vld [vmem:[%s631 + $0x7c] sm:$0xf]
      %v664 = vld [vmem:[%s1] sm:$0xf]
      %v665 = vld [vmem:[%s1 + $0x4] sm:$0xf]
      %v698 = vunpack.c.l.b16 %v632
      %v699 = vunpack.c.l.b16 %v633
      %v700 = vunpack.c.l.b16 %v634
      %v701 = vunpack.c.l.b16 %v635
      %v702 = vunpack.c.l.b16 %v636
      %v703 = vunpack.c.l.b16 %v637
      %v704 = vunpack.c.l.b16 %v638
      %v705 = vunpack.c.l.b16 %v639
      %v706 = vunpack.c.l.b16 %v640
      %v707 = vunpack.c.l.b16 %v641
      %v708 = vunpack.c.l.b16 %v642
      %v709 = vunpack.c.l.b16 %v643
      %v710 = vunpack.c.l.b16 %v644
      %v711 = vunpack.c.l.b16 %v645
      %v712 = vunpack.c.l.b16 %v646
      %v713 = vunpack.c.l.b16 %v647
      %v714 = vunpack.c.l.b16 %v648
      %v715 = vunpack.c.l.b16 %v649
      %v716 = vunpack.c.l.b16 %v650
      %v717 = vunpack.c.l.b16 %v651
      %v718 = vunpack.c.l.b16 %v652
      %v719 = vunpack.c.l.b16 %v653
      %v720 = vunpack.c.l.b16 %v654
      %v721 = vunpack.c.l.b16 %v655
      %v722 = vunpack.c.l.b16 %v656
      %v723 = vunpack.c.l.b16 %v657
      %v724 = vunpack.c.l.b16 %v658
      %v725 = vunpack.c.l.b16 %v659
      %v726 = vunpack.c.l.b16 %v660
      %v727 = vunpack.c.l.b16 %v661
      %v728 = vunpack.c.l.b16 %v662
      %v729 = vunpack.c.l.b16 %v663
      %v730 = vpack.c.b16 %v699, %v698
      %v731 = vpack.c.b16 %v701, %v700
      %v732 = vpack.c.b16 %v703, %v702
      %v733 = vpack.c.b16 %v705, %v704
      %v734 = vpack.c.b16 %v707, %v706
      %v735 = vpack.c.b16 %v709, %v708
      %v736 = vpack.c.b16 %v711, %v710
      %v737 = vpack.c.b16 %v713, %v712
      %v738 = vpack.c.b16 %v715, %v714
      %v739 = vpack.c.b16 %v717, %v716
      %v740 = vpack.c.b16 %v719, %v718
      %v741 = vpack.c.b16 %v721, %v720
      %v742 = vpack.c.b16 %v723, %v722
      %v743 = vpack.c.b16 %v725, %v724
      %v744 = vpack.c.b16 %v727, %v726
      %v745 = vpack.c.b16 %v729, %v728
      %v748 = vunpack.c.l.b16 %v664
      %v749 = vunpack.c.l.b16 %v665
      %v750 = vpack.c.b16 %v749, %v748
      %v753 = vsel %vm357, %v730, 0
      %v756 = vsel %vm357, %v731, 0
      %v759 = vsel %vm357, %v732, 0
      %v762 = vsel %vm357, %v733, 0
      %v765 = vsel %vm357, %v734, 0
      %v768 = vsel %vm357, %v735, 0
      %v771 = vsel %vm357, %v736, 0
      %v774 = vsel %vm357, %v737, 0
      %v777 = vsel %vm357, %v738, 0
      %v780 = vsel %vm357, %v739, 0
      %v783 = vsel %vm357, %v740, 0
      %v786 = vsel %vm357, %v741, 0
      %v789 = vsel %vm357, %v742, 0
      %v792 = vsel %vm357, %v743, 0
      %v795 = vsel %vm357, %v744, 0
      %v798 = vsel %vm357, %v745, 0
      %800 = vmatpush.bf16.msra.mxu0 0
      %801 = vmatpush.bf16.msra.mxu0 0
      %802 = vmatpush.bf16.msra.mxu0 0
      %803 = vmatpush.bf16.msra.mxu0 0
      %804 = vmatpush.bf16.msra.mxu0 0
      %805 = vmatpush.bf16.msra.mxu0 0
      %806 = vmatpush.bf16.msra.mxu0 0
      %807 = vmatpush.bf16.msra.mxu0 %v750
      %808 = vmatmul.bf16.gmra.mxu0 %v753
      %v809 = vpop.f32.mrf.mxu0
      %v810 = vadd.f32 %v269, %v809
      %v811 = vpop.f32.mrf.mxu0
      %v812 = vadd.f32 %v269, %v811
      %813 = vmatmul.bf16.gmra.mxu0 %v756
      %v814 = vpop.f32.mrf.mxu0
      %v815 = vadd.f32 %v269, %v814
      %v816 = vpop.f32.mrf.mxu0
      %v817 = vadd.f32 %v269, %v816
      %818 = vmatmul.bf16.gmra.mxu0 %v759
      %v819 = vpop.f32.mrf.mxu0
      %v820 = vadd.f32 %v269, %v819
      %v821 = vpop.f32.mrf.mxu0
      %v822 = vadd.f32 %v269, %v821
      %823 = vmatmul.bf16.gmra.mxu0 %v762
      %v824 = vpop.f32.mrf.mxu0
      %v825 = vadd.f32 %v269, %v824
      %v826 = vpop.f32.mrf.mxu0
      %v827 = vadd.f32 %v269, %v826
      %828 = vmatmul.bf16.gmra.mxu0 %v765
      %v829 = vpop.f32.mrf.mxu0
      %v830 = vadd.f32 %v269, %v829
      %v831 = vpop.f32.mrf.mxu0
      %v832 = vadd.f32 %v269, %v831
      %833 = vmatmul.bf16.gmra.mxu0 %v768
      %v834 = vpop.f32.mrf.mxu0
      %v835 = vadd.f32 %v269, %v834
      %v836 = vpop.f32.mrf.mxu0
      %v837 = vadd.f32 %v269, %v836
      %838 = vmatmul.bf16.gmra.mxu0 %v771
      %v839 = vpop.f32.mrf.mxu0
      %v840 = vadd.f32 %v269, %v839
      %v841 = vpop.f32.mrf.mxu0
      %v842 = vadd.f32 %v269, %v841
      %843 = vmatmul.bf16.gmra.mxu0 %v774
      %v844 = vpop.f32.mrf.mxu0
      %v845 = vadd.f32 %v269, %v844
      %v846 = vpop.f32.mrf.mxu0
      %v847 = vadd.f32 %v269, %v846
      %848 = vmatmul.bf16.gmra.mxu0 %v777
      %v849 = vpop.f32.mrf.mxu0
      %v850 = vadd.f32 %v269, %v849
      %v851 = vpop.f32.mrf.mxu0
      %v852 = vadd.f32 %v269, %v851
      %853 = vmatmul.bf16.gmra.mxu0 %v780
      %v854 = vpop.f32.mrf.mxu0
      %v855 = vadd.f32 %v269, %v854
      %v856 = vpop.f32.mrf.mxu0
      %v857 = vadd.f32 %v269, %v856
      %858 = vmatmul.bf16.gmra.mxu0 %v783
      %v859 = vpop.f32.mrf.mxu0
      %v860 = vadd.f32 %v269, %v859
      %v861 = vpop.f32.mrf.mxu0
      %v862 = vadd.f32 %v269, %v861
      %863 = vmatmul.bf16.gmra.mxu0 %v786
      %v864 = vpop.f32.mrf.mxu0
      %v865 = vadd.f32 %v269, %v864
      %v866 = vpop.f32.mrf.mxu0
      %v867 = vadd.f32 %v269, %v866
      %868 = vmatmul.bf16.gmra.mxu0 %v789
      %v869 = vpop.f32.mrf.mxu0
      %v870 = vadd.f32 %v269, %v869
      %v871 = vpop.f32.mrf.mxu0
      %v872 = vadd.f32 %v269, %v871
      %873 = vmatmul.bf16.gmra.mxu0 %v792
      %v874 = vpop.f32.mrf.mxu0
      %v875 = vadd.f32 %v269, %v874
      %v876 = vpop.f32.mrf.mxu0
      %v877 = vadd.f32 %v269, %v876
      %878 = vmatmul.bf16.gmra.mxu0 %v795
      %v879 = vpop.f32.mrf.mxu0
      %v880 = vadd.f32 %v269, %v879
      %v881 = vpop.f32.mrf.mxu0
      %v882 = vadd.f32 %v269, %v881
      %883 = vmatmul.bf16.gmra.mxu0 %v798
      %v884 = vpop.f32.mrf.mxu0
      %v885 = vadd.f32 %v269, %v884
      %v886 = vpop.f32.mrf.mxu0
      %v887 = vadd.f32 %v269, %v886
      %888 = vdwg.mxu0
      %v889 = vmax.f32 %v810, 0.0
      %v890 = vmax.f32 %v812, 0.0
      %v891 = vmax.f32 %v815, 0.0
      %v892 = vmax.f32 %v817, 0.0
      %v893 = vmax.f32 %v820, 0.0
      %v894 = vmax.f32 %v822, 0.0
      %v895 = vmax.f32 %v825, 0.0
      %v896 = vmax.f32 %v827, 0.0
      %v897 = vmax.f32 %v830, 0.0
      %v898 = vmax.f32 %v832, 0.0
      %v899 = vmax.f32 %v835, 0.0
      %v900 = vmax.f32 %v837, 0.0
      %v901 = vmax.f32 %v840, 0.0
      %v902 = vmax.f32 %v842, 0.0
      %v903 = vmax.f32 %v845, 0.0
      %v904 = vmax.f32 %v847, 0.0
      %v905 = vmax.f32 %v850, 0.0
      %v906 = vmax.f32 %v852, 0.0
      %v907 = vmax.f32 %v855, 0.0
      %v908 = vmax.f32 %v857, 0.0
      %v909 = vmax.f32 %v860, 0.0
      %v910 = vmax.f32 %v862, 0.0
      %v911 = vmax.f32 %v865, 0.0
      %v912 = vmax.f32 %v867, 0.0
      %v913 = vmax.f32 %v870, 0.0
      %v914 = vmax.f32 %v872, 0.0
      %v915 = vmax.f32 %v875, 0.0
      %v916 = vmax.f32 %v877, 0.0
      %v917 = vmax.f32 %v880, 0.0
      %v918 = vmax.f32 %v882, 0.0
      %v919 = vmax.f32 %v885, 0.0
      %v920 = vmax.f32 %v887, 0.0
      %s921 = scalar_lea.vmem [#allocation2], 144
      %922 = vst [vmem:[%s921] sm:$0xf] 0
      %923 = vst [vmem:[%s921 + $0x4] sm:$0xf] 0
      %v924 = vpack.c.bf16 %v889, %v889
      %v925 = vpack.c.bf16 %v890, %v890
      %v926 = vpack.c.bf16 %v891, %v891
      %v927 = vpack.c.bf16 %v892, %v892
      %v928 = vpack.c.bf16 %v893, %v893
      %v929 = vpack.c.bf16 %v894, %v894
      %v930 = vpack.c.bf16 %v895, %v895
      %v931 = vpack.c.bf16 %v896, %v896
      %v932 = vpack.c.bf16 %v897, %v897
      %v933 = vpack.c.bf16 %v898, %v898
      %v934 = vpack.c.bf16 %v899, %v899
      %v935 = vpack.c.bf16 %v900, %v900
      %v936 = vpack.c.bf16 %v901, %v901
      %v937 = vpack.c.bf16 %v902, %v902
      %v938 = vpack.c.bf16 %v903, %v903
      %v939 = vpack.c.bf16 %v904, %v904
      %v940 = vpack.c.bf16 %v905, %v905
      %v941 = vpack.c.bf16 %v906, %v906
      %v942 = vpack.c.bf16 %v907, %v907
      %v943 = vpack.c.bf16 %v908, %v908
      %v944 = vpack.c.bf16 %v909, %v909
      %v945 = vpack.c.bf16 %v910, %v910
      %v946 = vpack.c.bf16 %v911, %v911
      %v947 = vpack.c.bf16 %v912, %v912
      %v948 = vpack.c.bf16 %v913, %v913
      %v949 = vpack.c.bf16 %v914, %v914
      %v950 = vpack.c.bf16 %v915, %v915
      %v951 = vpack.c.bf16 %v916, %v916
      %v952 = vpack.c.bf16 %v917, %v917
      %v953 = vpack.c.bf16 %v918, %v918
      %v954 = vpack.c.bf16 %v919, %v919
      %v955 = vpack.c.bf16 %v920, %v920
      %s956 = scalar_lea.vmem [#allocation2], 152
      %957 = vst [vmem:[%s956] sm:$0xf] %v924
      %958 = vst [vmem:[%s956 + $0x4] sm:$0xf] %v925
      %959 = vst [vmem:[%s956 + $0x8] sm:$0xf] %v926
      %960 = vst [vmem:[%s956 + $0xc] sm:$0xf] %v927
      %961 = vst [vmem:[%s956 + $0x10] sm:$0xf] %v928
      %962 = vst [vmem:[%s956 + $0x14] sm:$0xf] %v929
      %963 = vst [vmem:[%s956 + $0x18] sm:$0xf] %v930
      %964 = vst [vmem:[%s956 + $0x1c] sm:$0xf] %v931
      %965 = vst [vmem:[%s956 + $0x20] sm:$0xf] %v932
      %966 = vst [vmem:[%s956 + $0x24] sm:$0xf] %v933
      %967 = vst [vmem:[%s956 + $0x28] sm:$0xf] %v934
      %968 = vst [vmem:[%s956 + $0x2c] sm:$0xf] %v935
      %969 = vst [vmem:[%s956 + $0x30] sm:$0xf] %v936
      %970 = vst [vmem:[%s956 + $0x34] sm:$0xf] %v937
      %971 = vst [vmem:[%s956 + $0x38] sm:$0xf] %v938
      %972 = vst [vmem:[%s956 + $0x3c] sm:$0xf] %v939
      %973 = vst [vmem:[%s956 + $0x40] sm:$0xf] %v940
      %974 = vst [vmem:[%s956 + $0x44] sm:$0xf] %v941
      %975 = vst [vmem:[%s956 + $0x48] sm:$0xf] %v942
      %976 = vst [vmem:[%s956 + $0x4c] sm:$0xf] %v943
      %977 = vst [vmem:[%s956 + $0x50] sm:$0xf] %v944
      %978 = vst [vmem:[%s956 + $0x54] sm:$0xf] %v945
      %979 = vst [vmem:[%s956 + $0x58] sm:$0xf] %v946
      %980 = vst [vmem:[%s956 + $0x5c] sm:$0xf] %v947
      %981 = vst [vmem:[%s956 + $0x60] sm:$0xf] %v948
      %982 = vst [vmem:[%s956 + $0x64] sm:$0xf] %v949
      %983 = vst [vmem:[%s956 + $0x68] sm:$0xf] %v950
      %984 = vst [vmem:[%s956 + $0x6c] sm:$0xf] %v951
      %985 = vst [vmem:[%s956 + $0x70] sm:$0xf] %v952
      %986 = vst [vmem:[%s956 + $0x74] sm:$0xf] %v953
      %987 = vst [vmem:[%s956 + $0x78] sm:$0xf] %v954
      %988 = vst [vmem:[%s956 + $0x7c] sm:$0xf] %v955
      %s989 = scalar_lea.vmem [#allocation2], 280
      %990 = vst [vmem:[%s989] sm:$0xf] 0
      %991 = vst [vmem:[%s989 + $0x4] sm:$0xf] 0
      %s992 = scalar_lea.vmem %s219, 256
      %v993 = vld [vmem:[%s992] sm:$0xf]
      %v994 = vld [vmem:[%s992 + $0x4] sm:$0xf]
      %v995 = vld [vmem:[%s992 + $0x8] sm:$0xf]
      %v996 = vld [vmem:[%s992 + $0xc] sm:$0xf]
      %v997 = vld [vmem:[%s992 + $0x10] sm:$0xf]
      %v998 = vld [vmem:[%s992 + $0x14] sm:$0xf]
      %v999 = vld [vmem:[%s992 + $0x18] sm:$0xf]
      %v1000 = vld [vmem:[%s992 + $0x1c] sm:$0xf]
      %v1001 = vld [vmem:[%s992 + $0x20] sm:$0xf]
      %v1002 = vld [vmem:[%s992 + $0x24] sm:$0xf]
      %v1003 = vld [vmem:[%s992 + $0x28] sm:$0xf]
      %v1004 = vld [vmem:[%s992 + $0x2c] sm:$0xf]
      %v1005 = vld [vmem:[%s992 + $0x30] sm:$0xf]
      %v1006 = vld [vmem:[%s992 + $0x34] sm:$0xf]
      %v1007 = vld [vmem:[%s992 + $0x38] sm:$0xf]
      %v1008 = vld [vmem:[%s992 + $0x3c] sm:$0xf]
      %v1009 = vld [vmem:[%s992 + $0x40] sm:$0xf]
      %v1010 = vld [vmem:[%s992 + $0x44] sm:$0xf]
      %v1011 = vld [vmem:[%s992 + $0x48] sm:$0xf]
      %v1012 = vld [vmem:[%s992 + $0x4c] sm:$0xf]
      %v1013 = vld [vmem:[%s992 + $0x50] sm:$0xf]
      %v1014 = vld [vmem:[%s992 + $0x54] sm:$0xf]
      %v1015 = vld [vmem:[%s992 + $0x58] sm:$0xf]
      %v1016 = vld [vmem:[%s992 + $0x5c] sm:$0xf]
      %v1017 = vld [vmem:[%s992 + $0x60] sm:$0xf]
      %v1018 = vld [vmem:[%s992 + $0x64] sm:$0xf]
      %v1019 = vld [vmem:[%s992 + $0x68] sm:$0xf]
      %v1020 = vld [vmem:[%s992 + $0x6c] sm:$0xf]
      %v1021 = vld [vmem:[%s992 + $0x70] sm:$0xf]
      %v1022 = vld [vmem:[%s992 + $0x74] sm:$0xf]
      %v1023 = vld [vmem:[%s992 + $0x78] sm:$0xf]
      %v1024 = vld [vmem:[%s992 + $0x7c] sm:$0xf]
      %v1025 = vld [vmem:[%s1] sm:$0xf]
      %v1026 = vld [vmem:[%s1 + $0x4] sm:$0xf]
      %v1059 = vunpack.c.l.b16 %v993
      %v1060 = vunpack.c.l.b16 %v994
      %v1061 = vunpack.c.l.b16 %v995
      %v1062 = vunpack.c.l.b16 %v996
      %v1063 = vunpack.c.l.b16 %v997
      %v1064 = vunpack.c.l.b16 %v998
      %v1065 = vunpack.c.l.b16 %v999
      %v1066 = vunpack.c.l.b16 %v1000
      %v1067 = vunpack.c.l.b16 %v1001
      %v1068 = vunpack.c.l.b16 %v1002
      %v1069 = vunpack.c.l.b16 %v1003
      %v1070 = vunpack.c.l.b16 %v1004
      %v1071 = vunpack.c.l.b16 %v1005
      %v1072 = vunpack.c.l.b16 %v1006
      %v1073 = vunpack.c.l.b16 %v1007
      %v1074 = vunpack.c.l.b16 %v1008
      %v1075 = vunpack.c.l.b16 %v1009
      %v1076 = vunpack.c.l.b16 %v1010
      %v1077 = vunpack.c.l.b16 %v1011
      %v1078 = vunpack.c.l.b16 %v1012
      %v1079 = vunpack.c.l.b16 %v1013
      %v1080 = vunpack.c.l.b16 %v1014
      %v1081 = vunpack.c.l.b16 %v1015
      %v1082 = vunpack.c.l.b16 %v1016
      %v1083 = vunpack.c.l.b16 %v1017
      %v1084 = vunpack.c.l.b16 %v1018
      %v1085 = vunpack.c.l.b16 %v1019
      %v1086 = vunpack.c.l.b16 %v1020
      %v1087 = vunpack.c.l.b16 %v1021
      %v1088 = vunpack.c.l.b16 %v1022
      %v1089 = vunpack.c.l.b16 %v1023
      %v1090 = vunpack.c.l.b16 %v1024
      %v1091 = vpack.c.b16 %v1060, %v1059
      %v1092 = vpack.c.b16 %v1062, %v1061
      %v1093 = vpack.c.b16 %v1064, %v1063
      %v1094 = vpack.c.b16 %v1066, %v1065
      %v1095 = vpack.c.b16 %v1068, %v1067
      %v1096 = vpack.c.b16 %v1070, %v1069
      %v1097 = vpack.c.b16 %v1072, %v1071
      %v1098 = vpack.c.b16 %v1074, %v1073
      %v1099 = vpack.c.b16 %v1076, %v1075
      %v1100 = vpack.c.b16 %v1078, %v1077
      %v1101 = vpack.c.b16 %v1080, %v1079
      %v1102 = vpack.c.b16 %v1082, %v1081
      %v1103 = vpack.c.b16 %v1084, %v1083
      %v1104 = vpack.c.b16 %v1086, %v1085
      %v1105 = vpack.c.b16 %v1088, %v1087
      %v1106 = vpack.c.b16 %v1090, %v1089
      %v1109 = vunpack.c.l.b16 %v1025
      %v1110 = vunpack.c.l.b16 %v1026
      %v1111 = vpack.c.b16 %v1110, %v1109
      %v1114 = vsel %vm357, %v1091, 0
      %v1117 = vsel %vm357, %v1092, 0
      %v1120 = vsel %vm357, %v1093, 0
      %v1123 = vsel %vm357, %v1094, 0
      %v1126 = vsel %vm357, %v1095, 0
      %v1129 = vsel %vm357, %v1096, 0
      %v1132 = vsel %vm357, %v1097, 0
      %v1135 = vsel %vm357, %v1098, 0
      %v1138 = vsel %vm357, %v1099, 0
      %v1141 = vsel %vm357, %v1100, 0
      %v1144 = vsel %vm357, %v1101, 0
      %v1147 = vsel %vm357, %v1102, 0
      %v1150 = vsel %vm357, %v1103, 0
      %v1153 = vsel %vm357, %v1104, 0
      %v1156 = vsel %vm357, %v1105, 0
      %v1159 = vsel %vm357, %v1106, 0
      %1161 = vmatpush.bf16.msra.mxu0 0
      %1162 = vmatpush.bf16.msra.mxu0 0
      %1163 = vmatpush.bf16.msra.mxu0 0
      %1164 = vmatpush.bf16.msra.mxu0 0
      %1165 = vmatpush.bf16.msra.mxu0 0
      %1166 = vmatpush.bf16.msra.mxu0 0
      %1167 = vmatpush.bf16.msra.mxu0 0
      %1168 = vmatpush.bf16.msra.mxu0 %v1111
      %1169 = vmatmul.bf16.gmra.mxu0 %v1114
      %v1170 = vpop.f32.mrf.mxu0
      %v1171 = vadd.f32 %v269, %v1170
      %v1172 = vpop.f32.mrf.mxu0
      %v1173 = vadd.f32 %v269, %v1172
      %1174 = vmatmul.bf16.gmra.mxu0 %v1117
      %v1175 = vpop.f32.mrf.mxu0
      %v1176 = vadd.f32 %v269, %v1175
      %v1177 = vpop.f32.mrf.mxu0
      %v1178 = vadd.f32 %v269, %v1177
      %1179 = vmatmul.bf16.gmra.mxu0 %v1120
      %v1180 = vpop.f32.mrf.mxu0
      %v1181 = vadd.f32 %v269, %v1180
      %v1182 = vpop.f32.mrf.mxu0
      %v1183 = vadd.f32 %v269, %v1182
      %1184 = vmatmul.bf16.gmra.mxu0 %v1123
      %v1185 = vpop.f32.mrf.mxu0
      %v1186 = vadd.f32 %v269, %v1185
      %v1187 = vpop.f32.mrf.mxu0
      %v1188 = vadd.f32 %v269, %v1187
      %1189 = vmatmul.bf16.gmra.mxu0 %v1126
      %v1190 = vpop.f32.mrf.mxu0
      %v1191 = vadd.f32 %v269, %v1190
      %v1192 = vpop.f32.mrf.mxu0
      %v1193 = vadd.f32 %v269, %v1192
      %1194 = vmatmul.bf16.gmra.mxu0 %v1129
      %v1195 = vpop.f32.mrf.mxu0
      %v1196 = vadd.f32 %v269, %v1195
      %v1197 = vpop.f32.mrf.mxu0
      %v1198 = vadd.f32 %v269, %v1197
      %1199 = vmatmul.bf16.gmra.mxu0 %v1132
      %v1200 = vpop.f32.mrf.mxu0
      %v1201 = vadd.f32 %v269, %v1200
      %v1202 = vpop.f32.mrf.mxu0
      %v1203 = vadd.f32 %v269, %v1202
      %1204 = vmatmul.bf16.gmra.mxu0 %v1135
      %v1205 = vpop.f32.mrf.mxu0
      %v1206 = vadd.f32 %v269, %v1205
      %v1207 = vpop.f32.mrf.mxu0
      %v1208 = vadd.f32 %v269, %v1207
      %1209 = vmatmul.bf16.gmra.mxu0 %v1138
      %v1210 = vpop.f32.mrf.mxu0
      %v1211 = vadd.f32 %v269, %v1210
      %v1212 = vpop.f32.mrf.mxu0
      %v1213 = vadd.f32 %v269, %v1212
      %1214 = vmatmul.bf16.gmra.mxu0 %v1141
      %v1215 = vpop.f32.mrf.mxu0
      %v1216 = vadd.f32 %v269, %v1215
      %v1217 = vpop.f32.mrf.mxu0
      %v1218 = vadd.f32 %v269, %v1217
      %1219 = vmatmul.bf16.gmra.mxu0 %v1144
      %v1220 = vpop.f32.mrf.mxu0
      %v1221 = vadd.f32 %v269, %v1220
      %v1222 = vpop.f32.mrf.mxu0
      %v1223 = vadd.f32 %v269, %v1222
      %1224 = vmatmul.bf16.gmra.mxu0 %v1147
      %v1225 = vpop.f32.mrf.mxu0
      %v1226 = vadd.f32 %v269, %v1225
      %v1227 = vpop.f32.mrf.mxu0
      %v1228 = vadd.f32 %v269, %v1227
      %1229 = vmatmul.bf16.gmra.mxu0 %v1150
      %v1230 = vpop.f32.mrf.mxu0
      %v1231 = vadd.f32 %v269, %v1230
      %v1232 = vpop.f32.mrf.mxu0
      %v1233 = vadd.f32 %v269, %v1232
      %1234 = vmatmul.bf16.gmra.mxu0 %v1153
      %v1235 = vpop.f32.mrf.mxu0
      %v1236 = vadd.f32 %v269, %v1235
      %v1237 = vpop.f32.mrf.mxu0
      %v1238 = vadd.f32 %v269, %v1237
      %1239 = vmatmul.bf16.gmra.mxu0 %v1156
      %v1240 = vpop.f32.mrf.mxu0
      %v1241 = vadd.f32 %v269, %v1240
      %v1242 = vpop.f32.mrf.mxu0
      %v1243 = vadd.f32 %v269, %v1242
      %1244 = vmatmul.bf16.gmra.mxu0 %v1159
      %v1245 = vpop.f32.mrf.mxu0
      %v1246 = vadd.f32 %v269, %v1245
      %v1247 = vpop.f32.mrf.mxu0
      %v1248 = vadd.f32 %v269, %v1247
      %1249 = vdwg.mxu0
      %v1250 = vmax.f32 %v1171, 0.0
      %v1251 = vmax.f32 %v1173, 0.0
      %v1252 = vmax.f32 %v1176, 0.0
      %v1253 = vmax.f32 %v1178, 0.0
      %v1254 = vmax.f32 %v1181, 0.0
      %v1255 = vmax.f32 %v1183, 0.0
      %v1256 = vmax.f32 %v1186, 0.0
      %v1257 = vmax.f32 %v1188, 0.0
      %v1258 = vmax.f32 %v1191, 0.0
      %v1259 = vmax.f32 %v1193, 0.0
      %v1260 = vmax.f32 %v1196, 0.0
      %v1261 = vmax.f32 %v1198, 0.0
      %v1262 = vmax.f32 %v1201, 0.0
      %v1263 = vmax.f32 %v1203, 0.0
      %v1264 = vmax.f32 %v1206, 0.0
      %v1265 = vmax.f32 %v1208, 0.0
      %v1266 = vmax.f32 %v1211, 0.0
      %v1267 = vmax.f32 %v1213, 0.0
      %v1268 = vmax.f32 %v1216, 0.0
      %v1269 = vmax.f32 %v1218, 0.0
      %v1270 = vmax.f32 %v1221, 0.0
      %v1271 = vmax.f32 %v1223, 0.0
      %v1272 = vmax.f32 %v1226, 0.0
      %v1273 = vmax.f32 %v1228, 0.0
      %v1274 = vmax.f32 %v1231, 0.0
      %v1275 = vmax.f32 %v1233, 0.0
      %v1276 = vmax.f32 %v1236, 0.0
      %v1277 = vmax.f32 %v1238, 0.0
      %v1278 = vmax.f32 %v1241, 0.0
      %v1279 = vmax.f32 %v1243, 0.0
      %v1280 = vmax.f32 %v1246, 0.0
      %v1281 = vmax.f32 %v1248, 0.0
      %vm1282 = vcmp.le.s32.totalorder %v227, 14
      %vm1283 = vcmp.le.s32.totalorder %v228, 14
      %v1284 = vsel %vm1282, %v1250, 0.0
      %v1285 = vsel %vm1283, %v1251, 0.0
      %v1286 = vsel %vm1282, %v1252, 0.0
      %v1287 = vsel %vm1283, %v1253, 0.0
      %v1288 = vsel %vm1282, %v1254, 0.0
      %v1289 = vsel %vm1283, %v1255, 0.0
      %v1290 = vsel %vm1282, %v1256, 0.0
      %v1291 = vsel %vm1283, %v1257, 0.0
      %v1292 = vsel %vm1282, %v1258, 0.0
      %v1293 = vsel %vm1283, %v1259, 0.0
      %v1294 = vsel %vm1282, %v1260, 0.0
      %v1295 = vsel %vm1283, %v1261, 0.0
      %v1296 = vsel %vm1282, %v1262, 0.0
      %v1297 = vsel %vm1283, %v1263, 0.0
      %v1298 = vsel %vm1282, %v1264, 0.0
      %v1299 = vsel %vm1283, %v1265, 0.0
      %v1300 = vsel %vm1282, %v1266, 0.0
      %v1301 = vsel %vm1283, %v1267, 0.0
      %v1302 = vsel %vm1282, %v1268, 0.0
      %v1303 = vsel %vm1283, %v1269, 0.0
      %v1304 = vsel %vm1282, %v1270, 0.0
      %v1305 = vsel %vm1283, %v1271, 0.0
      %v1306 = vsel %vm1282, %v1272, 0.0
      %v1307 = vsel %vm1283, %v1273, 0.0
      %v1308 = vsel %vm1282, %v1274, 0.0
      %v1309 = vsel %vm1283, %v1275, 0.0
      %v1310 = vsel %vm1282, %v1276, 0.0
      %v1311 = vsel %vm1283, %v1277, 0.0
      %v1312 = vsel %vm1282, %v1278, 0.0
      %v1313 = vsel %vm1283, %v1279, 0.0
      %v1314 = vsel %vm1282, %v1280, 0.0
      %v1315 = vsel %vm1283, %v1281, 0.0
      %s1316 = scalar_lea.vmem [#allocation2], 288
      %1317 = vst [vmem:[%s1316] sm:$0xf] 0
      %1318 = vst [vmem:[%s1316 + $0x4] sm:$0xf] 0
      %v1319 = vpack.c.bf16 %v1284, %v1284
      %v1320 = vpack.c.bf16 %v1285, %v1285
      %v1321 = vpack.c.bf16 %v1286, %v1286
      %v1322 = vpack.c.bf16 %v1287, %v1287
      %v1323 = vpack.c.bf16 %v1288, %v1288
      %v1324 = vpack.c.bf16 %v1289, %v1289
      %v1325 = vpack.c.bf16 %v1290, %v1290
      %v1326 = vpack.c.bf16 %v1291, %v1291
      %v1327 = vpack.c.bf16 %v1292, %v1292
      %v1328 = vpack.c.bf16 %v1293, %v1293
      %v1329 = vpack.c.bf16 %v1294, %v1294
      %v1330 = vpack.c.bf16 %v1295, %v1295
      %v1331 = vpack.c.bf16 %v1296, %v1296
      %v1332 = vpack.c.bf16 %v1297, %v1297
      %v1333 = vpack.c.bf16 %v1298, %v1298
      %v1334 = vpack.c.bf16 %v1299, %v1299
      %v1335 = vpack.c.bf16 %v1300, %v1300
      %v1336 = vpack.c.bf16 %v1301, %v1301
      %v1337 = vpack.c.bf16 %v1302, %v1302
      %v1338 = vpack.c.bf16 %v1303, %v1303
      %v1339 = vpack.c.bf16 %v1304, %v1304
      %v1340 = vpack.c.bf16 %v1305, %v1305
      %v1341 = vpack.c.bf16 %v1306, %v1306
      %v1342 = vpack.c.bf16 %v1307, %v1307
      %v1343 = vpack.c.bf16 %v1308, %v1308
      %v1344 = vpack.c.bf16 %v1309, %v1309
      %v1345 = vpack.c.bf16 %v1310, %v1310
      %v1346 = vpack.c.bf16 %v1311, %v1311
      %v1347 = vpack.c.bf16 %v1312, %v1312
      %v1348 = vpack.c.bf16 %v1313, %v1313
      %v1349 = vpack.c.bf16 %v1314, %v1314
      %v1350 = vpack.c.bf16 %v1315, %v1315
      %s1351 = scalar_lea.vmem [#allocation2], 296
      %1352 = vst [vmem:[%s1351] sm:$0xf] %v1319
      %1353 = vst [vmem:[%s1351 + $0x4] sm:$0xf] %v1320
      %1354 = vst [vmem:[%s1351 + $0x8] sm:$0xf] %v1321
      %1355 = vst [vmem:[%s1351 + $0xc] sm:$0xf] %v1322
      %1356 = vst [vmem:[%s1351 + $0x10] sm:$0xf] %v1323
      %1357 = vst [vmem:[%s1351 + $0x14] sm:$0xf] %v1324
      %1358 = vst [vmem:[%s1351 + $0x18] sm:$0xf] %v1325
      %1359 = vst [vmem:[%s1351 + $0x1c] sm:$0xf] %v1326
      %1360 = vst [vmem:[%s1351 + $0x20] sm:$0xf] %v1327
      %1361 = vst [vmem:[%s1351 + $0x24] sm:$0xf] %v1328
      %1362 = vst [vmem:[%s1351 + $0x28] sm:$0xf] %v1329
      %1363 = vst [vmem:[%s1351 + $0x2c] sm:$0xf] %v1330
      %1364 = vst [vmem:[%s1351 + $0x30] sm:$0xf] %v1331
      %1365 = vst [vmem:[%s1351 + $0x34] sm:$0xf] %v1332
      %1366 = vst [vmem:[%s1351 + $0x38] sm:$0xf] %v1333
      %1367 = vst [vmem:[%s1351 + $0x3c] sm:$0xf] %v1334
      %1368 = vst [vmem:[%s1351 + $0x40] sm:$0xf] %v1335
      %1369 = vst [vmem:[%s1351 + $0x44] sm:$0xf] %v1336
      %1370 = vst [vmem:[%s1351 + $0x48] sm:$0xf] %v1337
      %1371 = vst [vmem:[%s1351 + $0x4c] sm:$0xf] %v1338
      %1372 = vst [vmem:[%s1351 + $0x50] sm:$0xf] %v1339
      %1373 = vst [vmem:[%s1351 + $0x54] sm:$0xf] %v1340
      %1374 = vst [vmem:[%s1351 + $0x58] sm:$0xf] %v1341
      %1375 = vst [vmem:[%s1351 + $0x5c] sm:$0xf] %v1342
      %1376 = vst [vmem:[%s1351 + $0x60] sm:$0xf] %v1343
      %1377 = vst [vmem:[%s1351 + $0x64] sm:$0xf] %v1344
      %1378 = vst [vmem:[%s1351 + $0x68] sm:$0xf] %v1345
      %1379 = vst [vmem:[%s1351 + $0x6c] sm:$0xf] %v1346
      %1380 = vst [vmem:[%s1351 + $0x70] sm:$0xf] %v1347
      %1381 = vst [vmem:[%s1351 + $0x74] sm:$0xf] %v1348
      %1382 = vst [vmem:[%s1351 + $0x78] sm:$0xf] %v1349
      %1383 = vst [vmem:[%s1351 + $0x7c] sm:$0xf] %v1350
      %s1384 = scalar_lea.vmem [#allocation2], 424
      %1385 = vst [vmem:[%s1384] sm:$0xf] 0
      %1386 = vst [vmem:[%s1384 + $0x4] sm:$0xf] 0
      %v1387 = vld [vmem:[#allocation2] sm:$0xf]
      %v1388 = vld [vmem:[#allocation2 + $0x4] sm:$0xf]
      %v1389 = vld [vmem:[#allocation2 + $0x8] sm:$0xf]
      %v1390 = vld [vmem:[#allocation2 + $0xc] sm:$0xf]
      %v1391 = vld [vmem:[#allocation2 + $0x10] sm:$0xf]
      %v1392 = vld [vmem:[#allocation2 + $0x14] sm:$0xf]
      %v1393 = vld [vmem:[#allocation2 + $0x18] sm:$0xf]
      %v1394 = vld [vmem:[#allocation2 + $0x1c] sm:$0xf]
      %v1395 = vld [vmem:[#allocation2 + $0x20] sm:$0xf]
      %v1396 = vld [vmem:[#allocation2 + $0x24] sm:$0xf]
      %v1397 = vld [vmem:[#allocation2 + $0x28] sm:$0xf]
      %v1398 = vld [vmem:[#allocation2 + $0x2c] sm:$0xf]
      %v1399 = vld [vmem:[#allocation2 + $0x30] sm:$0xf]
      %v1400 = vld [vmem:[#allocation2 + $0x34] sm:$0xf]
      %v1401 = vld [vmem:[#allocation2 + $0x38] sm:$0xf]
      %v1402 = vld [vmem:[#allocation2 + $0x3c] sm:$0xf]
      %v1403 = vld [vmem:[#allocation2 + $0x40] sm:$0xf]
      %v1404 = vld [vmem:[#allocation2 + $0x44] sm:$0xf]
      %v1405 = vld [vmem:[#allocation2 + $0x48] sm:$0xf]
      %v1406 = vld [vmem:[#allocation2 + $0x4c] sm:$0xf]
      %v1407 = vld [vmem:[#allocation2 + $0x50] sm:$0xf]
      %v1408 = vld [vmem:[#allocation2 + $0x54] sm:$0xf]
      %v1409 = vld [vmem:[#allocation2 + $0x58] sm:$0xf]
      %v1410 = vld [vmem:[#allocation2 + $0x5c] sm:$0xf]
      %v1411 = vld [vmem:[#allocation2 + $0x60] sm:$0xf]
      %v1412 = vld [vmem:[#allocation2 + $0x64] sm:$0xf]
      %v1413 = vld [vmem:[#allocation2 + $0x68] sm:$0xf]
      %v1414 = vld [vmem:[#allocation2 + $0x6c] sm:$0xf]
      %v1415 = vld [vmem:[#allocation2 + $0x70] sm:$0xf]
      %v1416 = vld [vmem:[#allocation2 + $0x74] sm:$0xf]
      %v1417 = vld [vmem:[#allocation2 + $0x78] sm:$0xf]
      %v1418 = vld [vmem:[#allocation2 + $0x7c] sm:$0xf]
      %v1419 = vld [vmem:[%s2] sm:$0xf]
      %v1420 = vld [vmem:[%s2 + $0x4] sm:$0xf]
      %v1421 = vld [vmem:[%s2 + $0x8] sm:$0xf]
      %v1422 = vld [vmem:[%s2 + $0xc] sm:$0xf]
      %v1423 = vld [vmem:[%s2 + $0x10] sm:$0xf]
      %v1424 = vld [vmem:[%s2 + $0x14] sm:$0xf]
      %v1425 = vld [vmem:[%s2 + $0x18] sm:$0xf]
      %v1426 = vld [vmem:[%s2 + $0x1c] sm:$0xf]
      %v1427 = vld [vmem:[%s2 + $0x20] sm:$0xf]
      %v1428 = vld [vmem:[%s2 + $0x24] sm:$0xf]
      %v1429 = vld [vmem:[%s2 + $0x28] sm:$0xf]
      %v1430 = vld [vmem:[%s2 + $0x2c] sm:$0xf]
      %v1431 = vld [vmem:[%s2 + $0x30] sm:$0xf]
      %v1432 = vld [vmem:[%s2 + $0x34] sm:$0xf]
      %v1433 = vld [vmem:[%s2 + $0x38] sm:$0xf]
      %v1434 = vld [vmem:[%s2 + $0x3c] sm:$0xf]
      %v1467 = vunpack.c.l.b16 %v1387
      %v1468 = vunpack.c.l.b16 %v1388
      %v1469 = vunpack.c.l.b16 %v1389
      %v1470 = vunpack.c.l.b16 %v1390
      %v1471 = vunpack.c.l.b16 %v1391
      %v1472 = vunpack.c.l.b16 %v1392
      %v1473 = vunpack.c.l.b16 %v1393
      %v1474 = vunpack.c.l.b16 %v1394
      %v1475 = vunpack.c.l.b16 %v1395
      %v1476 = vunpack.c.l.b16 %v1396
      %v1477 = vunpack.c.l.b16 %v1397
      %v1478 = vunpack.c.l.b16 %v1398
      %v1479 = vunpack.c.l.b16 %v1399
      %v1480 = vunpack.c.l.b16 %v1400
      %v1481 = vunpack.c.l.b16 %v1401
      %v1482 = vunpack.c.l.b16 %v1402
      %v1483 = vunpack.c.l.b16 %v1403
      %v1484 = vunpack.c.l.b16 %v1404
      %v1485 = vunpack.c.l.b16 %v1405
      %v1486 = vunpack.c.l.b16 %v1406
      %v1487 = vunpack.c.l.b16 %v1407
      %v1488 = vunpack.c.l.b16 %v1408
      %v1489 = vunpack.c.l.b16 %v1409
      %v1490 = vunpack.c.l.b16 %v1410
      %v1491 = vunpack.c.l.b16 %v1411
      %v1492 = vunpack.c.l.b16 %v1412
      %v1493 = vunpack.c.l.b16 %v1413
      %v1494 = vunpack.c.l.b16 %v1414
      %v1495 = vunpack.c.l.b16 %v1415
      %v1496 = vunpack.c.l.b16 %v1416
      %v1497 = vunpack.c.l.b16 %v1417
      %v1498 = vunpack.c.l.b16 %v1418
      %v1499 = vpack.c.b16 %v1468, %v1467
      %v1500 = vpack.c.b16 %v1470, %v1469
      %v1501 = vpack.c.b16 %v1472, %v1471
      %v1502 = vpack.c.b16 %v1474, %v1473
      %v1503 = vpack.c.b16 %v1476, %v1475
      %v1504 = vpack.c.b16 %v1478, %v1477
      %v1505 = vpack.c.b16 %v1480, %v1479
      %v1506 = vpack.c.b16 %v1482, %v1481
      %v1507 = vpack.c.b16 %v1484, %v1483
      %v1508 = vpack.c.b16 %v1486, %v1485
      %v1509 = vpack.c.b16 %v1488, %v1487
      %v1510 = vpack.c.b16 %v1490, %v1489
      %v1511 = vpack.c.b16 %v1492, %v1491
      %v1512 = vpack.c.b16 %v1494, %v1493
      %v1513 = vpack.c.b16 %v1496, %v1495
      %v1514 = vpack.c.b16 %v1498, %v1497
      %v1547 = vunpack.c.l.b16 %v1419
      %v1548 = vunpack.c.l.b16 %v1420
      %v1549 = vunpack.c.l.b16 %v1421
      %v1550 = vunpack.c.l.b16 %v1422
      %v1551 = vunpack.c.l.b16 %v1423
      %v1552 = vunpack.c.l.b16 %v1424
      %v1553 = vunpack.c.l.b16 %v1425
      %v1554 = vunpack.c.l.b16 %v1426
      %v1555 = vunpack.c.l.b16 %v1427
      %v1556 = vunpack.c.l.b16 %v1428
      %v1557 = vunpack.c.l.b16 %v1429
      %v1558 = vunpack.c.l.b16 %v1430
      %v1559 = vunpack.c.l.b16 %v1431
      %v1560 = vunpack.c.l.b16 %v1432
      %v1561 = vunpack.c.l.b16 %v1433
      %v1562 = vunpack.c.l.b16 %v1434
      %v1563 = vpack.c.b16 %v1548, %v1547
      %v1564 = vpack.c.b16 %v1550, %v1549
      %v1565 = vpack.c.b16 %v1552, %v1551
      %v1566 = vpack.c.b16 %v1554, %v1553
      %v1567 = vpack.c.b16 %v1556, %v1555
      %v1568 = vpack.c.b16 %v1558, %v1557
      %v1569 = vpack.c.b16 %v1560, %v1559
      %v1570 = vpack.c.b16 %v1562, %v1561
      %1579 = vmatpush.bf16.msra.mxu0 %v1570
      %1580 = vmatpush.bf16.msra.mxu0 %v1569
      %1581 = vmatpush.bf16.msra.mxu0 %v1568
      %1582 = vmatpush.bf16.msra.mxu0 %v1567
      %1583 = vmatpush.bf16.msra.mxu0 %v1566
      %1584 = vmatpush.bf16.msra.mxu0 %v1565
      %1585 = vmatpush.bf16.msra.mxu0 %v1564
      %1586 = vmatpush.bf16.msra.mxu0 %v1563
      %1587 = vmatmul.bf16.gmra.mxu0 %v1499
      %v1588 = vpop.f32.mrf.mxu0
      %v1589 = vadd.f32 0.0, %v1588
      %v1590 = vpop.f32.mrf.mxu0
      %v1591 = vadd.f32 0.0, %v1590
      %1592 = vmatmul.bf16.gmra.mxu0 %v1500
      %v1593 = vpop.f32.mrf.mxu0
      %v1594 = vadd.f32 0.0, %v1593
      %v1595 = vpop.f32.mrf.mxu0
      %v1596 = vadd.f32 0.0, %v1595
      %1597 = vmatmul.bf16.gmra.mxu0 %v1501
      %v1598 = vpop.f32.mrf.mxu0
      %v1599 = vadd.f32 0.0, %v1598
      %v1600 = vpop.f32.mrf.mxu0
      %v1601 = vadd.f32 0.0, %v1600
      %1602 = vmatmul.bf16.gmra.mxu0 %v1502
      %v1603 = vpop.f32.mrf.mxu0
      %v1604 = vadd.f32 0.0, %v1603
      %v1605 = vpop.f32.mrf.mxu0
      %v1606 = vadd.f32 0.0, %v1605
      %1607 = vmatmul.bf16.gmra.mxu0 %v1503
      %v1608 = vpop.f32.mrf.mxu0
      %v1609 = vadd.f32 0.0, %v1608
      %v1610 = vpop.f32.mrf.mxu0
      %v1611 = vadd.f32 0.0, %v1610
      %1612 = vmatmul.bf16.gmra.mxu0 %v1504
      %v1613 = vpop.f32.mrf.mxu0
      %v1614 = vadd.f32 0.0, %v1613
      %v1615 = vpop.f32.mrf.mxu0
      %v1616 = vadd.f32 0.0, %v1615
      %1617 = vmatmul.bf16.gmra.mxu0 %v1505
      %v1618 = vpop.f32.mrf.mxu0
      %v1619 = vadd.f32 0.0, %v1618
      %v1620 = vpop.f32.mrf.mxu0
      %v1621 = vadd.f32 0.0, %v1620
      %1622 = vmatmul.bf16.gmra.mxu0 %v1506
      %v1623 = vpop.f32.mrf.mxu0
      %v1624 = vadd.f32 0.0, %v1623
      %v1625 = vpop.f32.mrf.mxu0
      %v1626 = vadd.f32 0.0, %v1625
      %1627 = vmatmul.bf16.gmra.mxu0 %v1507
      %v1628 = vpop.f32.mrf.mxu0
      %v1629 = vadd.f32 0.0, %v1628
      %v1630 = vpop.f32.mrf.mxu0
      %v1631 = vadd.f32 0.0, %v1630
      %1632 = vmatmul.bf16.gmra.mxu0 %v1508
      %v1633 = vpop.f32.mrf.mxu0
      %v1634 = vadd.f32 0.0, %v1633
      %v1635 = vpop.f32.mrf.mxu0
      %v1636 = vadd.f32 0.0, %v1635
      %1637 = vmatmul.bf16.gmra.mxu0 %v1509
      %v1638 = vpop.f32.mrf.mxu0
      %v1639 = vadd.f32 0.0, %v1638
      %v1640 = vpop.f32.mrf.mxu0
      %v1641 = vadd.f32 0.0, %v1640
      %1642 = vmatmul.bf16.gmra.mxu0 %v1510
      %v1643 = vpop.f32.mrf.mxu0
      %v1644 = vadd.f32 0.0, %v1643
      %v1645 = vpop.f32.mrf.mxu0
      %v1646 = vadd.f32 0.0, %v1645
      %1647 = vmatmul.bf16.gmra.mxu0 %v1511
      %v1648 = vpop.f32.mrf.mxu0
      %v1649 = vadd.f32 0.0, %v1648
      %v1650 = vpop.f32.mrf.mxu0
      %v1651 = vadd.f32 0.0, %v1650
      %1652 = vmatmul.bf16.gmra.mxu0 %v1512
      %v1653 = vpop.f32.mrf.mxu0
      %v1654 = vadd.f32 0.0, %v1653
      %v1655 = vpop.f32.mrf.mxu0
      %v1656 = vadd.f32 0.0, %v1655
      %1657 = vmatmul.bf16.gmra.mxu0 %v1513
      %v1658 = vpop.f32.mrf.mxu0
      %v1659 = vadd.f32 0.0, %v1658
      %v1660 = vpop.f32.mrf.mxu0
      %v1661 = vadd.f32 0.0, %v1660
      %1662 = vmatmul.bf16.gmra.mxu0 %v1514
      %v1663 = vpop.f32.mrf.mxu0
      %v1664 = vadd.f32 0.0, %v1663
      %v1665 = vpop.f32.mrf.mxu0
      %v1666 = vadd.f32 0.0, %v1665
      %1667 = vdwg.mxu0
      %1668 = vst [vmem:[#allocation3] sm:$0xff] %v1589
      %1669 = vst [vmem:[#allocation3 + $0x8] sm:$0xff] %v1591
      %1670 = vst [vmem:[#allocation3 + $0x10] sm:$0xff] %v1594
      %1671 = vst [vmem:[#allocation3 + $0x18] sm:$0xff] %v1596
      %1672 = vst [vmem:[#allocation3 + $0x20] sm:$0xff] %v1599
      %1673 = vst [vmem:[#allocation3 + $0x28] sm:$0xff] %v1601
      %1674 = vst [vmem:[#allocation3 + $0x30] sm:$0xff] %v1604
      %1675 = vst [vmem:[#allocation3 + $0x38] sm:$0xff] %v1606
      %1676 = vst [vmem:[#allocation3 + $0x40] sm:$0xff] %v1609
      %1677 = vst [vmem:[#allocation3 + $0x48] sm:$0xff] %v1611
      %1678 = vst [vmem:[#allocation3 + $0x50] sm:$0xff] %v1614
      %1679 = vst [vmem:[#allocation3 + $0x58] sm:$0xff] %v1616
      %1680 = vst [vmem:[#allocation3 + $0x60] sm:$0xff] %v1619
      %1681 = vst [vmem:[#allocation3 + $0x68] sm:$0xff] %v1621
      %1682 = vst [vmem:[#allocation3 + $0x70] sm:$0xff] %v1624
      %1683 = vst [vmem:[#allocation3 + $0x78] sm:$0xff] %v1626
      %1684 = vst [vmem:[#allocation3 + $0x80] sm:$0xff] %v1629
      %1685 = vst [vmem:[#allocation3 + $0x88] sm:$0xff] %v1631
      %1686 = vst [vmem:[#allocation3 + $0x90] sm:$0xff] %v1634
      %1687 = vst [vmem:[#allocation3 + $0x98] sm:$0xff] %v1636
      %1688 = vst [vmem:[#allocation3 + $0xa0] sm:$0xff] %v1639
      %1689 = vst [vmem:[#allocation3 + $0xa8] sm:$0xff] %v1641
      %1690 = vst [vmem:[#allocation3 + $0xb0] sm:$0xff] %v1644
      %1691 = vst [vmem:[#allocation3 + $0xb8] sm:$0xff] %v1646
      %1692 = vst [vmem:[#allocation3 + $0xc0] sm:$0xff] %v1649
      %1693 = vst [vmem:[#allocation3 + $0xc8] sm:$0xff] %v1651
      %1694 = vst [vmem:[#allocation3 + $0xd0] sm:$0xff] %v1654
      %1695 = vst [vmem:[#allocation3 + $0xd8] sm:$0xff] %v1656
      %1696 = vst [vmem:[#allocation3 + $0xe0] sm:$0xff] %v1659
      %1697 = vst [vmem:[#allocation3 + $0xe8] sm:$0xff] %v1661
      %1698 = vst [vmem:[#allocation3 + $0xf0] sm:$0xff] %v1664
      %1699 = vst [vmem:[#allocation3 + $0xf8] sm:$0xff] %v1666
      %v1700 = vld [vmem:[%s921] sm:$0xf]
      %v1701 = vld [vmem:[%s921 + $0x4] sm:$0xf]
      %v1702 = vld [vmem:[%s921 + $0x8] sm:$0xf]
      %v1703 = vld [vmem:[%s921 + $0xc] sm:$0xf]
      %v1704 = vld [vmem:[%s921 + $0x10] sm:$0xf]
      %v1705 = vld [vmem:[%s921 + $0x14] sm:$0xf]
      %v1706 = vld [vmem:[%s921 + $0x18] sm:$0xf]
      %v1707 = vld [vmem:[%s921 + $0x1c] sm:$0xf]
      %v1708 = vld [vmem:[%s921 + $0x20] sm:$0xf]
      %v1709 = vld [vmem:[%s921 + $0x24] sm:$0xf]
      %v1710 = vld [vmem:[%s921 + $0x28] sm:$0xf]
      %v1711 = vld [vmem:[%s921 + $0x2c] sm:$0xf]
      %v1712 = vld [vmem:[%s921 + $0x30] sm:$0xf]
      %v1713 = vld [vmem:[%s921 + $0x34] sm:$0xf]
      %v1714 = vld [vmem:[%s921 + $0x38] sm:$0xf]
      %v1715 = vld [vmem:[%s921 + $0x3c] sm:$0xf]
      %v1716 = vld [vmem:[%s921 + $0x40] sm:$0xf]
      %v1717 = vld [vmem:[%s921 + $0x44] sm:$0xf]
      %v1718 = vld [vmem:[%s921 + $0x48] sm:$0xf]
      %v1719 = vld [vmem:[%s921 + $0x4c] sm:$0xf]
      %v1720 = vld [vmem:[%s921 + $0x50] sm:$0xf]
      %v1721 = vld [vmem:[%s921 + $0x54] sm:$0xf]
      %v1722 = vld [vmem:[%s921 + $0x58] sm:$0xf]
      %v1723 = vld [vmem:[%s921 + $0x5c] sm:$0xf]
      %v1724 = vld [vmem:[%s921 + $0x60] sm:$0xf]
      %v1725 = vld [vmem:[%s921 + $0x64] sm:$0xf]
      %v1726 = vld [vmem:[%s921 + $0x68] sm:$0xf]
      %v1727 = vld [vmem:[%s921 + $0x6c] sm:$0xf]
      %v1728 = vld [vmem:[%s921 + $0x70] sm:$0xf]
      %v1729 = vld [vmem:[%s921 + $0x74] sm:$0xf]
      %v1730 = vld [vmem:[%s921 + $0x78] sm:$0xf]
      %v1731 = vld [vmem:[%s921 + $0x7c] sm:$0xf]
      %s1732 = scalar_lea.vmem %s2, 64
      %v1733 = vld [vmem:[%s1732] sm:$0xf]
      %v1734 = vld [vmem:[%s1732 + $0x4] sm:$0xf]
      %v1735 = vld [vmem:[%s1732 + $0x8] sm:$0xf]
      %v1736 = vld [vmem:[%s1732 + $0xc] sm:$0xf]
      %v1737 = vld [vmem:[%s1732 + $0x10] sm:$0xf]
      %v1738 = vld [vmem:[%s1732 + $0x14] sm:$0xf]
      %v1739 = vld [vmem:[%s1732 + $0x18] sm:$0xf]
      %v1740 = vld [vmem:[%s1732 + $0x1c] sm:$0xf]
      %v1741 = vld [vmem:[%s1732 + $0x20] sm:$0xf]
      %v1742 = vld [vmem:[%s1732 + $0x24] sm:$0xf]
      %v1743 = vld [vmem:[%s1732 + $0x28] sm:$0xf]
      %v1744 = vld [vmem:[%s1732 + $0x2c] sm:$0xf]
      %v1745 = vld [vmem:[%s1732 + $0x30] sm:$0xf]
      %v1746 = vld [vmem:[%s1732 + $0x34] sm:$0xf]
      %v1747 = vld [vmem:[%s1732 + $0x38] sm:$0xf]
      %v1748 = vld [vmem:[%s1732 + $0x3c] sm:$0xf]
      %v1781 = vunpack.c.l.b16 %v1700
      %v1782 = vunpack.c.l.b16 %v1701
      %v1783 = vunpack.c.l.b16 %v1702
      %v1784 = vunpack.c.l.b16 %v1703
      %v1785 = vunpack.c.l.b16 %v1704
      %v1786 = vunpack.c.l.b16 %v1705
      %v1787 = vunpack.c.l.b16 %v1706
      %v1788 = vunpack.c.l.b16 %v1707
      %v1789 = vunpack.c.l.b16 %v1708
      %v1790 = vunpack.c.l.b16 %v1709
      %v1791 = vunpack.c.l.b16 %v1710
      %v1792 = vunpack.c.l.b16 %v1711
      %v1793 = vunpack.c.l.b16 %v1712
      %v1794 = vunpack.c.l.b16 %v1713
      %v1795 = vunpack.c.l.b16 %v1714
      %v1796 = vunpack.c.l.b16 %v1715
      %v1797 = vunpack.c.l.b16 %v1716
      %v1798 = vunpack.c.l.b16 %v1717
      %v1799 = vunpack.c.l.b16 %v1718
      %v1800 = vunpack.c.l.b16 %v1719
      %v1801 = vunpack.c.l.b16 %v1720
      %v1802 = vunpack.c.l.b16 %v1721
      %v1803 = vunpack.c.l.b16 %v1722
      %v1804 = vunpack.c.l.b16 %v1723
      %v1805 = vunpack.c.l.b16 %v1724
      %v1806 = vunpack.c.l.b16 %v1725
      %v1807 = vunpack.c.l.b16 %v1726
      %v1808 = vunpack.c.l.b16 %v1727
      %v1809 = vunpack.c.l.b16 %v1728
      %v1810 = vunpack.c.l.b16 %v1729
      %v1811 = vunpack.c.l.b16 %v1730
      %v1812 = vunpack.c.l.b16 %v1731
      %v1813 = vpack.c.b16 %v1782, %v1781
      %v1814 = vpack.c.b16 %v1784, %v1783
      %v1815 = vpack.c.b16 %v1786, %v1785
      %v1816 = vpack.c.b16 %v1788, %v1787
      %v1817 = vpack.c.b16 %v1790, %v1789
      %v1818 = vpack.c.b16 %v1792, %v1791
      %v1819 = vpack.c.b16 %v1794, %v1793
      %v1820 = vpack.c.b16 %v1796, %v1795
      %v1821 = vpack.c.b16 %v1798, %v1797
      %v1822 = vpack.c.b16 %v1800, %v1799
      %v1823 = vpack.c.b16 %v1802, %v1801
      %v1824 = vpack.c.b16 %v1804, %v1803
      %v1825 = vpack.c.b16 %v1806, %v1805
      %v1826 = vpack.c.b16 %v1808, %v1807
      %v1827 = vpack.c.b16 %v1810, %v1809
      %v1828 = vpack.c.b16 %v1812, %v1811
      %v1861 = vunpack.c.l.b16 %v1733
      %v1862 = vunpack.c.l.b16 %v1734
      %v1863 = vunpack.c.l.b16 %v1735
      %v1864 = vunpack.c.l.b16 %v1736
      %v1865 = vunpack.c.l.b16 %v1737
      %v1866 = vunpack.c.l.b16 %v1738
      %v1867 = vunpack.c.l.b16 %v1739
      %v1868 = vunpack.c.l.b16 %v1740
      %v1869 = vunpack.c.l.b16 %v1741
      %v1870 = vunpack.c.l.b16 %v1742
      %v1871 = vunpack.c.l.b16 %v1743
      %v1872 = vunpack.c.l.b16 %v1744
      %v1873 = vunpack.c.l.b16 %v1745
      %v1874 = vunpack.c.l.b16 %v1746
      %v1875 = vunpack.c.l.b16 %v1747
      %v1876 = vunpack.c.l.b16 %v1748
      %v1877 = vpack.c.b16 %v1862, %v1861
      %v1878 = vpack.c.b16 %v1864, %v1863
      %v1879 = vpack.c.b16 %v1866, %v1865
      %v1880 = vpack.c.b16 %v1868, %v1867
      %v1881 = vpack.c.b16 %v1870, %v1869
      %v1882 = vpack.c.b16 %v1872, %v1871
      %v1883 = vpack.c.b16 %v1874, %v1873
      %v1884 = vpack.c.b16 %v1876, %v1875
      %1893 = vmatpush.bf16.msra.mxu0 %v1884
      %1894 = vmatpush.bf16.msra.mxu0 %v1883
      %1895 = vmatpush.bf16.msra.mxu0 %v1882
      %1896 = vmatpush.bf16.msra.mxu0 %v1881
      %1897 = vmatpush.bf16.msra.mxu0 %v1880
      %1898 = vmatpush.bf16.msra.mxu0 %v1879
      %1899 = vmatpush.bf16.msra.mxu0 %v1878
      %1900 = vmatpush.bf16.msra.mxu0 %v1877
      %1901 = vmatmul.bf16.gmra.mxu0 %v1813
      %v1902 = vpop.f32.mrf.mxu0
      %v1903 = vadd.f32 0.0, %v1902
      %v1904 = vpop.f32.mrf.mxu0
      %v1905 = vadd.f32 0.0, %v1904
      %1906 = vmatmul.bf16.gmra.mxu0 %v1814
      %v1907 = vpop.f32.mrf.mxu0
      %v1908 = vadd.f32 0.0, %v1907
      %v1909 = vpop.f32.mrf.mxu0
      %v1910 = vadd.f32 0.0, %v1909
      %1911 = vmatmul.bf16.gmra.mxu0 %v1815
      %v1912 = vpop.f32.mrf.mxu0
      %v1913 = vadd.f32 0.0, %v1912
      %v1914 = vpop.f32.mrf.mxu0
      %v1915 = vadd.f32 0.0, %v1914
      %1916 = vmatmul.bf16.gmra.mxu0 %v1816
      %v1917 = vpop.f32.mrf.mxu0
      %v1918 = vadd.f32 0.0, %v1917
      %v1919 = vpop.f32.mrf.mxu0
      %v1920 = vadd.f32 0.0, %v1919
      %1921 = vmatmul.bf16.gmra.mxu0 %v1817
      %v1922 = vpop.f32.mrf.mxu0
      %v1923 = vadd.f32 0.0, %v1922
      %v1924 = vpop.f32.mrf.mxu0
      %v1925 = vadd.f32 0.0, %v1924
      %1926 = vmatmul.bf16.gmra.mxu0 %v1818
      %v1927 = vpop.f32.mrf.mxu0
      %v1928 = vadd.f32 0.0, %v1927
      %v1929 = vpop.f32.mrf.mxu0
      %v1930 = vadd.f32 0.0, %v1929
      %1931 = vmatmul.bf16.gmra.mxu0 %v1819
      %v1932 = vpop.f32.mrf.mxu0
      %v1933 = vadd.f32 0.0, %v1932
      %v1934 = vpop.f32.mrf.mxu0
      %v1935 = vadd.f32 0.0, %v1934
      %1936 = vmatmul.bf16.gmra.mxu0 %v1820
      %v1937 = vpop.f32.mrf.mxu0
      %v1938 = vadd.f32 0.0, %v1937
      %v1939 = vpop.f32.mrf.mxu0
      %v1940 = vadd.f32 0.0, %v1939
      %1941 = vmatmul.bf16.gmra.mxu0 %v1821
      %v1942 = vpop.f32.mrf.mxu0
      %v1943 = vadd.f32 0.0, %v1942
      %v1944 = vpop.f32.mrf.mxu0
      %v1945 = vadd.f32 0.0, %v1944
      %1946 = vmatmul.bf16.gmra.mxu0 %v1822
      %v1947 = vpop.f32.mrf.mxu0
      %v1948 = vadd.f32 0.0, %v1947
      %v1949 = vpop.f32.mrf.mxu0
      %v1950 = vadd.f32 0.0, %v1949
      %1951 = vmatmul.bf16.gmra.mxu0 %v1823
      %v1952 = vpop.f32.mrf.mxu0
      %v1953 = vadd.f32 0.0, %v1952
      %v1954 = vpop.f32.mrf.mxu0
      %v1955 = vadd.f32 0.0, %v1954
      %1956 = vmatmul.bf16.gmra.mxu0 %v1824
      %v1957 = vpop.f32.mrf.mxu0
      %v1958 = vadd.f32 0.0, %v1957
      %v1959 = vpop.f32.mrf.mxu0
      %v1960 = vadd.f32 0.0, %v1959
      %1961 = vmatmul.bf16.gmra.mxu0 %v1825
      %v1962 = vpop.f32.mrf.mxu0
      %v1963 = vadd.f32 0.0, %v1962
      %v1964 = vpop.f32.mrf.mxu0
      %v1965 = vadd.f32 0.0, %v1964
      %1966 = vmatmul.bf16.gmra.mxu0 %v1826
      %v1967 = vpop.f32.mrf.mxu0
      %v1968 = vadd.f32 0.0, %v1967
      %v1969 = vpop.f32.mrf.mxu0
      %v1970 = vadd.f32 0.0, %v1969
      %1971 = vmatmul.bf16.gmra.mxu0 %v1827
      %v1972 = vpop.f32.mrf.mxu0
      %v1973 = vadd.f32 0.0, %v1972
      %v1974 = vpop.f32.mrf.mxu0
      %v1975 = vadd.f32 0.0, %v1974
      %1976 = vmatmul.bf16.gmra.mxu0 %v1828
      %v1977 = vpop.f32.mrf.mxu0
      %v1978 = vadd.f32 0.0, %v1977
      %v1979 = vpop.f32.mrf.mxu0
      %v1980 = vadd.f32 0.0, %v1979
      %1981 = vdwg.mxu0
      %v1982 = vld [vmem:[#allocation3] sm:$0xff]
      %v1983 = vld [vmem:[#allocation3 + $0x8] sm:$0xff]
      %v1984 = vld [vmem:[#allocation3 + $0x10] sm:$0xff]
      %v1985 = vld [vmem:[#allocation3 + $0x18] sm:$0xff]
      %v1986 = vld [vmem:[#allocation3 + $0x20] sm:$0xff]
      %v1987 = vld [vmem:[#allocation3 + $0x28] sm:$0xff]
      %v1988 = vld [vmem:[#allocation3 + $0x30] sm:$0xff]
      %v1989 = vld [vmem:[#allocation3 + $0x38] sm:$0xff]
      %v1990 = vld [vmem:[#allocation3 + $0x40] sm:$0xff]
      %v1991 = vld [vmem:[#allocation3 + $0x48] sm:$0xff]
      %v1992 = vld [vmem:[#allocation3 + $0x50] sm:$0xff]
      %v1993 = vld [vmem:[#allocation3 + $0x58] sm:$0xff]
      %v1994 = vld [vmem:[#allocation3 + $0x60] sm:$0xff]
      %v1995 = vld [vmem:[#allocation3 + $0x68] sm:$0xff]
      %v1996 = vld [vmem:[#allocation3 + $0x70] sm:$0xff]
      %v1997 = vld [vmem:[#allocation3 + $0x78] sm:$0xff]
      %v1998 = vld [vmem:[#allocation3 + $0x80] sm:$0xff]
      %v1999 = vld [vmem:[#allocation3 + $0x88] sm:$0xff]
      %v2000 = vld [vmem:[#allocation3 + $0x90] sm:$0xff]
      %v2001 = vld [vmem:[#allocation3 + $0x98] sm:$0xff]
      %v2002 = vld [vmem:[#allocation3 + $0xa0] sm:$0xff]
      %v2003 = vld [vmem:[#allocation3 + $0xa8] sm:$0xff]
      %v2004 = vld [vmem:[#allocation3 + $0xb0] sm:$0xff]
      %v2005 = vld [vmem:[#allocation3 + $0xb8] sm:$0xff]
      %v2006 = vld [vmem:[#allocation3 + $0xc0] sm:$0xff]
      %v2007 = vld [vmem:[#allocation3 + $0xc8] sm:$0xff]
      %v2008 = vld [vmem:[#allocation3 + $0xd0] sm:$0xff]
      %v2009 = vld [vmem:[#allocation3 + $0xd8] sm:$0xff]
      %v2010 = vld [vmem:[#allocation3 + $0xe0] sm:$0xff]
      %v2011 = vld [vmem:[#allocation3 + $0xe8] sm:$0xff]
      %v2012 = vld [vmem:[#allocation3 + $0xf0] sm:$0xff]
      %v2013 = vld [vmem:[#allocation3 + $0xf8] sm:$0xff]
      %v2014 = vadd.f32 %v1982, %v1903
      %v2015 = vadd.f32 %v1983, %v1905
      %v2016 = vadd.f32 %v1984, %v1908
      %v2017 = vadd.f32 %v1985, %v1910
      %v2018 = vadd.f32 %v1986, %v1913
      %v2019 = vadd.f32 %v1987, %v1915
      %v2020 = vadd.f32 %v1988, %v1918
      %v2021 = vadd.f32 %v1989, %v1920
      %v2022 = vadd.f32 %v1990, %v1923
      %v2023 = vadd.f32 %v1991, %v1925
      %v2024 = vadd.f32 %v1992, %v1928
      %v2025 = vadd.f32 %v1993, %v1930
      %v2026 = vadd.f32 %v1994, %v1933
      %v2027 = vadd.f32 %v1995, %v1935
      %v2028 = vadd.f32 %v1996, %v1938
      %v2029 = vadd.f32 %v1997, %v1940
      %v2030 = vadd.f32 %v1998, %v1943
      %v2031 = vadd.f32 %v1999, %v1945
      %v2032 = vadd.f32 %v2000, %v1948
      %v2033 = vadd.f32 %v2001, %v1950
      %v2034 = vadd.f32 %v2002, %v1953
      %v2035 = vadd.f32 %v2003, %v1955
      %v2036 = vadd.f32 %v2004, %v1958
      %v2037 = vadd.f32 %v2005, %v1960
      %v2038 = vadd.f32 %v2006, %v1963
      %v2039 = vadd.f32 %v2007, %v1965
      %v2040 = vadd.f32 %v2008, %v1968
      %v2041 = vadd.f32 %v2009, %v1970
      %v2042 = vadd.f32 %v2010, %v1973
      %v2043 = vadd.f32 %v2011, %v1975
      %v2044 = vadd.f32 %v2012, %v1978
      %v2045 = vadd.f32 %v2013, %v1980
      %2046 = vst [vmem:[#allocation3] sm:$0xff] %v2014
      %2047 = vst [vmem:[#allocation3 + $0x8] sm:$0xff] %v2015
      %2048 = vst [vmem:[#allocation3 + $0x10] sm:$0xff] %v2016
      %2049 = vst [vmem:[#allocation3 + $0x18] sm:$0xff] %v2017
      %2050 = vst [vmem:[#allocation3 + $0x20] sm:$0xff] %v2018
      %2051 = vst [vmem:[#allocation3 + $0x28] sm:$0xff] %v2019
      %2052 = vst [vmem:[#allocation3 + $0x30] sm:$0xff] %v2020
      %2053 = vst [vmem:[#allocation3 + $0x38] sm:$0xff] %v2021
      %2054 = vst [vmem:[#allocation3 + $0x40] sm:$0xff] %v2022
      %2055 = vst [vmem:[#allocation3 + $0x48] sm:$0xff] %v2023
      %2056 = vst [vmem:[#allocation3 + $0x50] sm:$0xff] %v2024
      %2057 = vst [vmem:[#allocation3 + $0x58] sm:$0xff] %v2025
      %2058 = vst [vmem:[#allocation3 + $0x60] sm:$0xff] %v2026
      %2059 = vst [vmem:[#allocation3 + $0x68] sm:$0xff] %v2027
      %2060 = vst [vmem:[#allocation3 + $0x70] sm:$0xff] %v2028
      %2061 = vst [vmem:[#allocation3 + $0x78] sm:$0xff] %v2029
      %2062 = vst [vmem:[#allocation3 + $0x80] sm:$0xff] %v2030
      %2063 = vst [vmem:[#allocation3 + $0x88] sm:$0xff] %v2031
      %2064 = vst [vmem:[#allocation3 + $0x90] sm:$0xff] %v2032
      %2065 = vst [vmem:[#allocation3 + $0x98] sm:$0xff] %v2033
      %2066 = vst [vmem:[#allocation3 + $0xa0] sm:$0xff] %v2034
      %2067 = vst [vmem:[#allocation3 + $0xa8] sm:$0xff] %v2035
      %2068 = vst [vmem:[#allocation3 + $0xb0] sm:$0xff] %v2036
      %2069 = vst [vmem:[#allocation3 + $0xb8] sm:$0xff] %v2037
      %2070 = vst [vmem:[#allocation3 + $0xc0] sm:$0xff] %v2038
      %2071 = vst [vmem:[#allocation3 + $0xc8] sm:$0xff] %v2039
      %2072 = vst [vmem:[#allocation3 + $0xd0] sm:$0xff] %v2040
      %2073 = vst [vmem:[#allocation3 + $0xd8] sm:$0xff] %v2041
      %2074 = vst [vmem:[#allocation3 + $0xe0] sm:$0xff] %v2042
      %2075 = vst [vmem:[#allocation3 + $0xe8] sm:$0xff] %v2043
      %2076 = vst [vmem:[#allocation3 + $0xf0] sm:$0xff] %v2044
      %2077 = vst [vmem:[#allocation3 + $0xf8] sm:$0xff] %v2045
      %v2078 = vld [vmem:[%s1316] sm:$0xf]
      %v2079 = vld [vmem:[%s1316 + $0x4] sm:$0xf]
      %v2080 = vld [vmem:[%s1316 + $0x8] sm:$0xf]
      %v2081 = vld [vmem:[%s1316 + $0xc] sm:$0xf]
      %v2082 = vld [vmem:[%s1316 + $0x10] sm:$0xf]
      %v2083 = vld [vmem:[%s1316 + $0x14] sm:$0xf]
      %v2084 = vld [vmem:[%s1316 + $0x18] sm:$0xf]
      %v2085 = vld [vmem:[%s1316 + $0x1c] sm:$0xf]
      %v2086 = vld [vmem:[%s1316 + $0x20] sm:$0xf]
      %v2087 = vld [vmem:[%s1316 + $0x24] sm:$0xf]
      %v2088 = vld [vmem:[%s1316 + $0x28] sm:$0xf]
      %v2089 = vld [vmem:[%s1316 + $0x2c] sm:$0xf]
      %v2090 = vld [vmem:[%s1316 + $0x30] sm:$0xf]
      %v2091 = vld [vmem:[%s1316 + $0x34] sm:$0xf]
      %v2092 = vld [vmem:[%s1316 + $0x38] sm:$0xf]
      %v2093 = vld [vmem:[%s1316 + $0x3c] sm:$0xf]
      %v2094 = vld [vmem:[%s1316 + $0x40] sm:$0xf]
      %v2095 = vld [vmem:[%s1316 + $0x44] sm:$0xf]
      %v2096 = vld [vmem:[%s1316 + $0x48] sm:$0xf]
      %v2097 = vld [vmem:[%s1316 + $0x4c] sm:$0xf]
      %v2098 = vld [vmem:[%s1316 + $0x50] sm:$0xf]
      %v2099 = vld [vmem:[%s1316 + $0x54] sm:$0xf]
      %v2100 = vld [vmem:[%s1316 + $0x58] sm:$0xf]
      %v2101 = vld [vmem:[%s1316 + $0x5c] sm:$0xf]
      %v2102 = vld [vmem:[%s1316 + $0x60] sm:$0xf]
      %v2103 = vld [vmem:[%s1316 + $0x64] sm:$0xf]
      %v2104 = vld [vmem:[%s1316 + $0x68] sm:$0xf]
      %v2105 = vld [vmem:[%s1316 + $0x6c] sm:$0xf]
      %v2106 = vld [vmem:[%s1316 + $0x70] sm:$0xf]
      %v2107 = vld [vmem:[%s1316 + $0x74] sm:$0xf]
      %v2108 = vld [vmem:[%s1316 + $0x78] sm:$0xf]
      %v2109 = vld [vmem:[%s1316 + $0x7c] sm:$0xf]
      %s2110 = scalar_lea.vmem %s2, 128
      %v2111 = vld [vmem:[%s2110] sm:$0xf]
      %v2112 = vld [vmem:[%s2110 + $0x4] sm:$0xf]
      %v2113 = vld [vmem:[%s2110 + $0x8] sm:$0xf]
      %v2114 = vld [vmem:[%s2110 + $0xc] sm:$0xf]
      %v2115 = vld [vmem:[%s2110 + $0x10] sm:$0xf]
      %v2116 = vld [vmem:[%s2110 + $0x14] sm:$0xf]
      %v2117 = vld [vmem:[%s2110 + $0x18] sm:$0xf]
      %v2118 = vld [vmem:[%s2110 + $0x1c] sm:$0xf]
      %v2119 = vld [vmem:[%s2110 + $0x20] sm:$0xf]
      %v2120 = vld [vmem:[%s2110 + $0x24] sm:$0xf]
      %v2121 = vld [vmem:[%s2110 + $0x28] sm:$0xf]
      %v2122 = vld [vmem:[%s2110 + $0x2c] sm:$0xf]
      %v2123 = vld [vmem:[%s2110 + $0x30] sm:$0xf]
      %v2124 = vld [vmem:[%s2110 + $0x34] sm:$0xf]
      %v2125 = vld [vmem:[%s2110 + $0x38] sm:$0xf]
      %v2126 = vld [vmem:[%s2110 + $0x3c] sm:$0xf]
      %v2159 = vunpack.c.l.b16 %v2078
      %v2160 = vunpack.c.l.b16 %v2079
      %v2161 = vunpack.c.l.b16 %v2080
      %v2162 = vunpack.c.l.b16 %v2081
      %v2163 = vunpack.c.l.b16 %v2082
      %v2164 = vunpack.c.l.b16 %v2083
      %v2165 = vunpack.c.l.b16 %v2084
      %v2166 = vunpack.c.l.b16 %v2085
      %v2167 = vunpack.c.l.b16 %v2086
      %v2168 = vunpack.c.l.b16 %v2087
      %v2169 = vunpack.c.l.b16 %v2088
      %v2170 = vunpack.c.l.b16 %v2089
      %v2171 = vunpack.c.l.b16 %v2090
      %v2172 = vunpack.c.l.b16 %v2091
      %v2173 = vunpack.c.l.b16 %v2092
      %v2174 = vunpack.c.l.b16 %v2093
      %v2175 = vunpack.c.l.b16 %v2094
      %v2176 = vunpack.c.l.b16 %v2095
      %v2177 = vunpack.c.l.b16 %v2096
      %v2178 = vunpack.c.l.b16 %v2097
      %v2179 = vunpack.c.l.b16 %v2098
      %v2180 = vunpack.c.l.b16 %v2099
      %v2181 = vunpack.c.l.b16 %v2100
      %v2182 = vunpack.c.l.b16 %v2101
      %v2183 = vunpack.c.l.b16 %v2102
      %v2184 = vunpack.c.l.b16 %v2103
      %v2185 = vunpack.c.l.b16 %v2104
      %v2186 = vunpack.c.l.b16 %v2105
      %v2187 = vunpack.c.l.b16 %v2106
      %v2188 = vunpack.c.l.b16 %v2107
      %v2189 = vunpack.c.l.b16 %v2108
      %v2190 = vunpack.c.l.b16 %v2109
      %v2191 = vpack.c.b16 %v2160, %v2159
      %v2192 = vpack.c.b16 %v2162, %v2161
      %v2193 = vpack.c.b16 %v2164, %v2163
      %v2194 = vpack.c.b16 %v2166, %v2165
      %v2195 = vpack.c.b16 %v2168, %v2167
      %v2196 = vpack.c.b16 %v2170, %v2169
      %v2197 = vpack.c.b16 %v2172, %v2171
      %v2198 = vpack.c.b16 %v2174, %v2173
      %v2199 = vpack.c.b16 %v2176, %v2175
      %v2200 = vpack.c.b16 %v2178, %v2177
      %v2201 = vpack.c.b16 %v2180, %v2179
      %v2202 = vpack.c.b16 %v2182, %v2181
      %v2203 = vpack.c.b16 %v2184, %v2183
      %v2204 = vpack.c.b16 %v2186, %v2185
      %v2205 = vpack.c.b16 %v2188, %v2187
      %v2206 = vpack.c.b16 %v2190, %v2189
      %v2239 = vunpack.c.l.b16 %v2111
      %v2240 = vunpack.c.l.b16 %v2112
      %v2241 = vunpack.c.l.b16 %v2113
      %v2242 = vunpack.c.l.b16 %v2114
      %v2243 = vunpack.c.l.b16 %v2115
      %v2244 = vunpack.c.l.b16 %v2116
      %v2245 = vunpack.c.l.b16 %v2117
      %v2246 = vunpack.c.l.b16 %v2118
      %v2247 = vunpack.c.l.b16 %v2119
      %v2248 = vunpack.c.l.b16 %v2120
      %v2249 = vunpack.c.l.b16 %v2121
      %v2250 = vunpack.c.l.b16 %v2122
      %v2251 = vunpack.c.l.b16 %v2123
      %v2252 = vunpack.c.l.b16 %v2124
      %v2253 = vunpack.c.l.b16 %v2125
      %v2254 = vunpack.c.l.b16 %v2126
      %v2255 = vpack.c.b16 %v2240, %v2239
      %v2256 = vpack.c.b16 %v2242, %v2241
      %v2257 = vpack.c.b16 %v2244, %v2243
      %v2258 = vpack.c.b16 %v2246, %v2245
      %v2259 = vpack.c.b16 %v2248, %v2247
      %v2260 = vpack.c.b16 %v2250, %v2249
      %v2261 = vpack.c.b16 %v2252, %v2251
      %v2262 = vpack.c.b16 %v2254, %v2253
      %2271 = vmatpush.bf16.msra.mxu0 %v2262
      %2272 = vmatpush.bf16.msra.mxu0 %v2261
      %2273 = vmatpush.bf16.msra.mxu0 %v2260
      %2274 = vmatpush.bf16.msra.mxu0 %v2259
      %2275 = vmatpush.bf16.msra.mxu0 %v2258
      %2276 = vmatpush.bf16.msra.mxu0 %v2257
      %2277 = vmatpush.bf16.msra.mxu0 %v2256
      %2278 = vmatpush.bf16.msra.mxu0 %v2255
      %2279 = vmatmul.bf16.gmra.mxu0 %v2191
      %v2280 = vpop.f32.mrf.mxu0
      %v2281 = vadd.f32 0.0, %v2280
      %v2282 = vpop.f32.mrf.mxu0
      %v2283 = vadd.f32 0.0, %v2282
      %2284 = vmatmul.bf16.gmra.mxu0 %v2192
      %v2285 = vpop.f32.mrf.mxu0
      %v2286 = vadd.f32 0.0, %v2285
      %v2287 = vpop.f32.mrf.mxu0
      %v2288 = vadd.f32 0.0, %v2287
      %2289 = vmatmul.bf16.gmra.mxu0 %v2193
      %v2290 = vpop.f32.mrf.mxu0
      %v2291 = vadd.f32 0.0, %v2290
      %v2292 = vpop.f32.mrf.mxu0
      %v2293 = vadd.f32 0.0, %v2292
      %2294 = vmatmul.bf16.gmra.mxu0 %v2194
      %v2295 = vpop.f32.mrf.mxu0
      %v2296 = vadd.f32 0.0, %v2295
      %v2297 = vpop.f32.mrf.mxu0
      %v2298 = vadd.f32 0.0, %v2297
      %2299 = vmatmul.bf16.gmra.mxu0 %v2195
      %v2300 = vpop.f32.mrf.mxu0
      %v2301 = vadd.f32 0.0, %v2300
      %v2302 = vpop.f32.mrf.mxu0
      %v2303 = vadd.f32 0.0, %v2302
      %2304 = vmatmul.bf16.gmra.mxu0 %v2196
      %v2305 = vpop.f32.mrf.mxu0
      %v2306 = vadd.f32 0.0, %v2305
      %v2307 = vpop.f32.mrf.mxu0
      %v2308 = vadd.f32 0.0, %v2307
      %2309 = vmatmul.bf16.gmra.mxu0 %v2197
      %v2310 = vpop.f32.mrf.mxu0
      %v2311 = vadd.f32 0.0, %v2310
      %v2312 = vpop.f32.mrf.mxu0
      %v2313 = vadd.f32 0.0, %v2312
      %2314 = vmatmul.bf16.gmra.mxu0 %v2198
      %v2315 = vpop.f32.mrf.mxu0
      %v2316 = vadd.f32 0.0, %v2315
      %v2317 = vpop.f32.mrf.mxu0
      %v2318 = vadd.f32 0.0, %v2317
      %2319 = vmatmul.bf16.gmra.mxu0 %v2199
      %v2320 = vpop.f32.mrf.mxu0
      %v2321 = vadd.f32 0.0, %v2320
      %v2322 = vpop.f32.mrf.mxu0
      %v2323 = vadd.f32 0.0, %v2322
      %2324 = vmatmul.bf16.gmra.mxu0 %v2200
      %v2325 = vpop.f32.mrf.mxu0
      %v2326 = vadd.f32 0.0, %v2325
      %v2327 = vpop.f32.mrf.mxu0
      %v2328 = vadd.f32 0.0, %v2327
      %2329 = vmatmul.bf16.gmra.mxu0 %v2201
      %v2330 = vpop.f32.mrf.mxu0
      %v2331 = vadd.f32 0.0, %v2330
      %v2332 = vpop.f32.mrf.mxu0
      %v2333 = vadd.f32 0.0, %v2332
      %2334 = vmatmul.bf16.gmra.mxu0 %v2202
      %v2335 = vpop.f32.mrf.mxu0
      %v2336 = vadd.f32 0.0, %v2335
      %v2337 = vpop.f32.mrf.mxu0
      %v2338 = vadd.f32 0.0, %v2337
      %2339 = vmatmul.bf16.gmra.mxu0 %v2203
      %v2340 = vpop.f32.mrf.mxu0
      %v2341 = vadd.f32 0.0, %v2340
      %v2342 = vpop.f32.mrf.mxu0
      %v2343 = vadd.f32 0.0, %v2342
      %2344 = vmatmul.bf16.gmra.mxu0 %v2204
      %v2345 = vpop.f32.mrf.mxu0
      %v2346 = vadd.f32 0.0, %v2345
      %v2347 = vpop.f32.mrf.mxu0
      %v2348 = vadd.f32 0.0, %v2347
      %2349 = vmatmul.bf16.gmra.mxu0 %v2205
      %v2350 = vpop.f32.mrf.mxu0
      %v2351 = vadd.f32 0.0, %v2350
      %v2352 = vpop.f32.mrf.mxu0
      %v2353 = vadd.f32 0.0, %v2352
      %2354 = vmatmul.bf16.gmra.mxu0 %v2206
      %v2355 = vpop.f32.mrf.mxu0
      %v2356 = vadd.f32 0.0, %v2355
      %v2357 = vpop.f32.mrf.mxu0
      %v2358 = vadd.f32 0.0, %v2357
      %2359 = vdwg.mxu0
      %v2360 = vld [vmem:[#allocation3] sm:$0xff]
      %v2361 = vld [vmem:[#allocation3 + $0x8] sm:$0xff]
      %v2362 = vld [vmem:[#allocation3 + $0x10] sm:$0xff]
      %v2363 = vld [vmem:[#allocation3 + $0x18] sm:$0xff]
      %v2364 = vld [vmem:[#allocation3 + $0x20] sm:$0xff]
      %v2365 = vld [vmem:[#allocation3 + $0x28] sm:$0xff]
      %v2366 = vld [vmem:[#allocation3 + $0x30] sm:$0xff]
      %v2367 = vld [vmem:[#allocation3 + $0x38] sm:$0xff]
      %v2368 = vld [vmem:[#allocation3 + $0x40] sm:$0xff]
      %v2369 = vld [vmem:[#allocation3 + $0x48] sm:$0xff]
      %v2370 = vld [vmem:[#allocation3 + $0x50] sm:$0xff]
      %v2371 = vld [vmem:[#allocation3 + $0x58] sm:$0xff]
      %v2372 = vld [vmem:[#allocation3 + $0x60] sm:$0xff]
      %v2373 = vld [vmem:[#allocation3 + $0x68] sm:$0xff]
      %v2374 = vld [vmem:[#allocation3 + $0x70] sm:$0xff]
      %v2375 = vld [vmem:[#allocation3 + $0x78] sm:$0xff]
      %v2376 = vld [vmem:[#allocation3 + $0x80] sm:$0xff]
      %v2377 = vld [vmem:[#allocation3 + $0x88] sm:$0xff]
      %v2378 = vld [vmem:[#allocation3 + $0x90] sm:$0xff]
      %v2379 = vld [vmem:[#allocation3 + $0x98] sm:$0xff]
      %v2380 = vld [vmem:[#allocation3 + $0xa0] sm:$0xff]
      %v2381 = vld [vmem:[#allocation3 + $0xa8] sm:$0xff]
      %v2382 = vld [vmem:[#allocation3 + $0xb0] sm:$0xff]
      %v2383 = vld [vmem:[#allocation3 + $0xb8] sm:$0xff]
      %v2384 = vld [vmem:[#allocation3 + $0xc0] sm:$0xff]
      %v2385 = vld [vmem:[#allocation3 + $0xc8] sm:$0xff]
      %v2386 = vld [vmem:[#allocation3 + $0xd0] sm:$0xff]
      %v2387 = vld [vmem:[#allocation3 + $0xd8] sm:$0xff]
      %v2388 = vld [vmem:[#allocation3 + $0xe0] sm:$0xff]
      %v2389 = vld [vmem:[#allocation3 + $0xe8] sm:$0xff]
      %v2390 = vld [vmem:[#allocation3 + $0xf0] sm:$0xff]
      %v2391 = vld [vmem:[#allocation3 + $0xf8] sm:$0xff]
      %v2392 = vadd.f32 %v2360, %v2281
      %v2393 = vadd.f32 %v2361, %v2283
      %v2394 = vadd.f32 %v2362, %v2286
      %v2395 = vadd.f32 %v2363, %v2288
      %v2396 = vadd.f32 %v2364, %v2291
      %v2397 = vadd.f32 %v2365, %v2293
      %v2398 = vadd.f32 %v2366, %v2296
      %v2399 = vadd.f32 %v2367, %v2298
      %v2400 = vadd.f32 %v2368, %v2301
      %v2401 = vadd.f32 %v2369, %v2303
      %v2402 = vadd.f32 %v2370, %v2306
      %v2403 = vadd.f32 %v2371, %v2308
      %v2404 = vadd.f32 %v2372, %v2311
      %v2405 = vadd.f32 %v2373, %v2313
      %v2406 = vadd.f32 %v2374, %v2316
      %v2407 = vadd.f32 %v2375, %v2318
      %v2408 = vadd.f32 %v2376, %v2321
      %v2409 = vadd.f32 %v2377, %v2323
      %v2410 = vadd.f32 %v2378, %v2326
      %v2411 = vadd.f32 %v2379, %v2328
      %v2412 = vadd.f32 %v2380, %v2331
      %v2413 = vadd.f32 %v2381, %v2333
      %v2414 = vadd.f32 %v2382, %v2336
      %v2415 = vadd.f32 %v2383, %v2338
      %v2416 = vadd.f32 %v2384, %v2341
      %v2417 = vadd.f32 %v2385, %v2343
      %v2418 = vadd.f32 %v2386, %v2346
      %v2419 = vadd.f32 %v2387, %v2348
      %v2420 = vadd.f32 %v2388, %v2351
      %v2421 = vadd.f32 %v2389, %v2353
      %v2422 = vadd.f32 %v2390, %v2356
      %v2423 = vadd.f32 %v2391, %v2358
      %2424 = vst [vmem:[#allocation3] sm:$0xff] %v2392
      %2425 = vst [vmem:[#allocation3 + $0x8] sm:$0xff] %v2393
      %2426 = vst [vmem:[#allocation3 + $0x10] sm:$0xff] %v2394
      %2427 = vst [vmem:[#allocation3 + $0x18] sm:$0xff] %v2395
      %2428 = vst [vmem:[#allocation3 + $0x20] sm:$0xff] %v2396
      %2429 = vst [vmem:[#allocation3 + $0x28] sm:$0xff] %v2397
      %2430 = vst [vmem:[#allocation3 + $0x30] sm:$0xff] %v2398
      %2431 = vst [vmem:[#allocation3 + $0x38] sm:$0xff] %v2399
      %2432 = vst [vmem:[#allocation3 + $0x40] sm:$0xff] %v2400
      %2433 = vst [vmem:[#allocation3 + $0x48] sm:$0xff] %v2401
      %2434 = vst [vmem:[#allocation3 + $0x50] sm:$0xff] %v2402
      %2435 = vst [vmem:[#allocation3 + $0x58] sm:$0xff] %v2403
      %2436 = vst [vmem:[#allocation3 + $0x60] sm:$0xff] %v2404
      %2437 = vst [vmem:[#allocation3 + $0x68] sm:$0xff] %v2405
      %2438 = vst [vmem:[#allocation3 + $0x70] sm:$0xff] %v2406
      %2439 = vst [vmem:[#allocation3 + $0x78] sm:$0xff] %v2407
      %2440 = vst [vmem:[#allocation3 + $0x80] sm:$0xff] %v2408
      %2441 = vst [vmem:[#allocation3 + $0x88] sm:$0xff] %v2409
      %2442 = vst [vmem:[#allocation3 + $0x90] sm:$0xff] %v2410
      %2443 = vst [vmem:[#allocation3 + $0x98] sm:$0xff] %v2411
      %2444 = vst [vmem:[#allocation3 + $0xa0] sm:$0xff] %v2412
      %2445 = vst [vmem:[#allocation3 + $0xa8] sm:$0xff] %v2413
      %2446 = vst [vmem:[#allocation3 + $0xb0] sm:$0xff] %v2414
      %2447 = vst [vmem:[#allocation3 + $0xb8] sm:$0xff] %v2415
      %2448 = vst [vmem:[#allocation3 + $0xc0] sm:$0xff] %v2416
      %2449 = vst [vmem:[#allocation3 + $0xc8] sm:$0xff] %v2417
      %2450 = vst [vmem:[#allocation3 + $0xd0] sm:$0xff] %v2418
      %2451 = vst [vmem:[#allocation3 + $0xd8] sm:$0xff] %v2419
      %2452 = vst [vmem:[#allocation3 + $0xe0] sm:$0xff] %v2420
      %2453 = vst [vmem:[#allocation3 + $0xe8] sm:$0xff] %v2421
      %2454 = vst [vmem:[#allocation3 + $0xf0] sm:$0xff] %v2422
      %2455 = vst [vmem:[#allocation3 + $0xf8] sm:$0xff] %v2423
      %v2456 = vld [vmem:[%s595] sm:$0xf]
      %v2457 = vld [vmem:[%s595 + $0x4] sm:$0xf]
      %v2458 = vld [vmem:[%s595 + $0x8] sm:$0xf]
      %v2459 = vld [vmem:[%s595 + $0xc] sm:$0xf]
      %v2460 = vld [vmem:[%s595 + $0x10] sm:$0xf]
      %v2461 = vld [vmem:[%s595 + $0x14] sm:$0xf]
      %v2462 = vld [vmem:[%s595 + $0x18] sm:$0xf]
      %v2463 = vld [vmem:[%s595 + $0x1c] sm:$0xf]
      %v2464 = vld [vmem:[%s595 + $0x20] sm:$0xf]
      %v2465 = vld [vmem:[%s595 + $0x24] sm:$0xf]
      %v2466 = vld [vmem:[%s595 + $0x28] sm:$0xf]
      %v2467 = vld [vmem:[%s595 + $0x2c] sm:$0xf]
      %v2468 = vld [vmem:[%s595 + $0x30] sm:$0xf]
      %v2469 = vld [vmem:[%s595 + $0x34] sm:$0xf]
      %v2470 = vld [vmem:[%s595 + $0x38] sm:$0xf]
      %v2471 = vld [vmem:[%s595 + $0x3c] sm:$0xf]
      %v2472 = vld [vmem:[%s595 + $0x40] sm:$0xf]
      %v2473 = vld [vmem:[%s595 + $0x44] sm:$0xf]
      %v2474 = vld [vmem:[%s595 + $0x48] sm:$0xf]
      %v2475 = vld [vmem:[%s595 + $0x4c] sm:$0xf]
      %v2476 = vld [vmem:[%s595 + $0x50] sm:$0xf]
      %v2477 = vld [vmem:[%s595 + $0x54] sm:$0xf]
      %v2478 = vld [vmem:[%s595 + $0x58] sm:$0xf]
      %v2479 = vld [vmem:[%s595 + $0x5c] sm:$0xf]
      %v2480 = vld [vmem:[%s595 + $0x60] sm:$0xf]
      %v2481 = vld [vmem:[%s595 + $0x64] sm:$0xf]
      %v2482 = vld [vmem:[%s595 + $0x68] sm:$0xf]
      %v2483 = vld [vmem:[%s595 + $0x6c] sm:$0xf]
      %v2484 = vld [vmem:[%s595 + $0x70] sm:$0xf]
      %v2485 = vld [vmem:[%s595 + $0x74] sm:$0xf]
      %v2486 = vld [vmem:[%s595 + $0x78] sm:$0xf]
      %v2487 = vld [vmem:[%s595 + $0x7c] sm:$0xf]
      %s2488 = scalar_lea.vmem %s2, 192
      %v2489 = vld [vmem:[%s2488] sm:$0xf]
      %v2490 = vld [vmem:[%s2488 + $0x4] sm:$0xf]
      %v2491 = vld [vmem:[%s2488 + $0x8] sm:$0xf]
      %v2492 = vld [vmem:[%s2488 + $0xc] sm:$0xf]
      %v2493 = vld [vmem:[%s2488 + $0x10] sm:$0xf]
      %v2494 = vld [vmem:[%s2488 + $0x14] sm:$0xf]
      %v2495 = vld [vmem:[%s2488 + $0x18] sm:$0xf]
      %v2496 = vld [vmem:[%s2488 + $0x1c] sm:$0xf]
      %v2497 = vld [vmem:[%s2488 + $0x20] sm:$0xf]
      %v2498 = vld [vmem:[%s2488 + $0x24] sm:$0xf]
      %v2499 = vld [vmem:[%s2488 + $0x28] sm:$0xf]
      %v2500 = vld [vmem:[%s2488 + $0x2c] sm:$0xf]
      %v2501 = vld [vmem:[%s2488 + $0x30] sm:$0xf]
      %v2502 = vld [vmem:[%s2488 + $0x34] sm:$0xf]
      %v2503 = vld [vmem:[%s2488 + $0x38] sm:$0xf]
      %v2504 = vld [vmem:[%s2488 + $0x3c] sm:$0xf]
      %v2537 = vunpack.c.l.b16 %v2456
      %v2538 = vunpack.c.l.b16 %v2457
      %v2539 = vunpack.c.l.b16 %v2458
      %v2540 = vunpack.c.l.b16 %v2459
      %v2541 = vunpack.c.l.b16 %v2460
      %v2542 = vunpack.c.l.b16 %v2461
      %v2543 = vunpack.c.l.b16 %v2462
      %v2544 = vunpack.c.l.b16 %v2463
      %v2545 = vunpack.c.l.b16 %v2464
      %v2546 = vunpack.c.l.b16 %v2465
      %v2547 = vunpack.c.l.b16 %v2466
      %v2548 = vunpack.c.l.b16 %v2467
      %v2549 = vunpack.c.l.b16 %v2468
      %v2550 = vunpack.c.l.b16 %v2469
      %v2551 = vunpack.c.l.b16 %v2470
      %v2552 = vunpack.c.l.b16 %v2471
      %v2553 = vunpack.c.l.b16 %v2472
      %v2554 = vunpack.c.l.b16 %v2473
      %v2555 = vunpack.c.l.b16 %v2474
      %v2556 = vunpack.c.l.b16 %v2475
      %v2557 = vunpack.c.l.b16 %v2476
      %v2558 = vunpack.c.l.b16 %v2477
      %v2559 = vunpack.c.l.b16 %v2478
      %v2560 = vunpack.c.l.b16 %v2479
      %v2561 = vunpack.c.l.b16 %v2480
      %v2562 = vunpack.c.l.b16 %v2481
      %v2563 = vunpack.c.l.b16 %v2482
      %v2564 = vunpack.c.l.b16 %v2483
      %v2565 = vunpack.c.l.b16 %v2484
      %v2566 = vunpack.c.l.b16 %v2485
      %v2567 = vunpack.c.l.b16 %v2486
      %v2568 = vunpack.c.l.b16 %v2487
      %v2569 = vpack.c.b16 %v2538, %v2537
      %v2570 = vpack.c.b16 %v2540, %v2539
      %v2571 = vpack.c.b16 %v2542, %v2541
      %v2572 = vpack.c.b16 %v2544, %v2543
      %v2573 = vpack.c.b16 %v2546, %v2545
      %v2574 = vpack.c.b16 %v2548, %v2547
      %v2575 = vpack.c.b16 %v2550, %v2549
      %v2576 = vpack.c.b16 %v2552, %v2551
      %v2577 = vpack.c.b16 %v2554, %v2553
      %v2578 = vpack.c.b16 %v2556, %v2555
      %v2579 = vpack.c.b16 %v2558, %v2557
      %v2580 = vpack.c.b16 %v2560, %v2559
      %v2581 = vpack.c.b16 %v2562, %v2561
      %v2582 = vpack.c.b16 %v2564, %v2563
      %v2583 = vpack.c.b16 %v2566, %v2565
      %v2584 = vpack.c.b16 %v2568, %v2567
      %v2617 = vunpack.c.l.b16 %v2489
      %v2618 = vunpack.c.l.b16 %v2490
      %v2619 = vunpack.c.l.b16 %v2491
      %v2620 = vunpack.c.l.b16 %v2492
      %v2621 = vunpack.c.l.b16 %v2493
      %v2622 = vunpack.c.l.b16 %v2494
      %v2623 = vunpack.c.l.b16 %v2495
      %v2624 = vunpack.c.l.b16 %v2496
      %v2625 = vunpack.c.l.b16 %v2497
      %v2626 = vunpack.c.l.b16 %v2498
      %v2627 = vunpack.c.l.b16 %v2499
      %v2628 = vunpack.c.l.b16 %v2500
      %v2629 = vunpack.c.l.b16 %v2501
      %v2630 = vunpack.c.l.b16 %v2502
      %v2631 = vunpack.c.l.b16 %v2503
      %v2632 = vunpack.c.l.b16 %v2504
      %v2633 = vpack.c.b16 %v2618, %v2617
      %v2634 = vpack.c.b16 %v2620, %v2619
      %v2635 = vpack.c.b16 %v2622, %v2621
      %v2636 = vpack.c.b16 %v2624, %v2623
      %v2637 = vpack.c.b16 %v2626, %v2625
      %v2638 = vpack.c.b16 %v2628, %v2627
      %v2639 = vpack.c.b16 %v2630, %v2629
      %v2640 = vpack.c.b16 %v2632, %v2631
      %2649 = vmatpush.bf16.msra.mxu0 %v2640
      %2650 = vmatpush.bf16.msra.mxu0 %v2639
      %2651 = vmatpush.bf16.msra.mxu0 %v2638
      %2652 = vmatpush.bf16.msra.mxu0 %v2637
      %2653 = vmatpush.bf16.msra.mxu0 %v2636
      %2654 = vmatpush.bf16.msra.mxu0 %v2635
      %2655 = vmatpush.bf16.msra.mxu0 %v2634
      %2656 = vmatpush.bf16.msra.mxu0 %v2633
      %2657 = vmatmul.bf16.gmra.mxu0 %v2569
      %v2658 = vpop.f32.mrf.mxu0
      %v2659 = vadd.f32 0.0, %v2658
      %v2660 = vpop.f32.mrf.mxu0
      %v2661 = vadd.f32 0.0, %v2660
      %2662 = vmatmul.bf16.gmra.mxu0 %v2570
      %v2663 = vpop.f32.mrf.mxu0
      %v2664 = vadd.f32 0.0, %v2663
      %v2665 = vpop.f32.mrf.mxu0
      %v2666 = vadd.f32 0.0, %v2665
      %2667 = vmatmul.bf16.gmra.mxu0 %v2571
      %v2668 = vpop.f32.mrf.mxu0
      %v2669 = vadd.f32 0.0, %v2668
      %v2670 = vpop.f32.mrf.mxu0
      %v2671 = vadd.f32 0.0, %v2670
      %2672 = vmatmul.bf16.gmra.mxu0 %v2572
      %v2673 = vpop.f32.mrf.mxu0
      %v2674 = vadd.f32 0.0, %v2673
      %v2675 = vpop.f32.mrf.mxu0
      %v2676 = vadd.f32 0.0, %v2675
      %2677 = vmatmul.bf16.gmra.mxu0 %v2573
      %v2678 = vpop.f32.mrf.mxu0
      %v2679 = vadd.f32 0.0, %v2678
      %v2680 = vpop.f32.mrf.mxu0
      %v2681 = vadd.f32 0.0, %v2680
      %2682 = vmatmul.bf16.gmra.mxu0 %v2574
      %v2683 = vpop.f32.mrf.mxu0
      %v2684 = vadd.f32 0.0, %v2683
      %v2685 = vpop.f32.mrf.mxu0
      %v2686 = vadd.f32 0.0, %v2685
      %2687 = vmatmul.bf16.gmra.mxu0 %v2575
      %v2688 = vpop.f32.mrf.mxu0
      %v2689 = vadd.f32 0.0, %v2688
      %v2690 = vpop.f32.mrf.mxu0
      %v2691 = vadd.f32 0.0, %v2690
      %2692 = vmatmul.bf16.gmra.mxu0 %v2576
      %v2693 = vpop.f32.mrf.mxu0
      %v2694 = vadd.f32 0.0, %v2693
      %v2695 = vpop.f32.mrf.mxu0
      %v2696 = vadd.f32 0.0, %v2695
      %2697 = vmatmul.bf16.gmra.mxu0 %v2577
      %v2698 = vpop.f32.mrf.mxu0
      %v2699 = vadd.f32 0.0, %v2698
      %v2700 = vpop.f32.mrf.mxu0
      %v2701 = vadd.f32 0.0, %v2700
      %2702 = vmatmul.bf16.gmra.mxu0 %v2578
      %v2703 = vpop.f32.mrf.mxu0
      %v2704 = vadd.f32 0.0, %v2703
      %v2705 = vpop.f32.mrf.mxu0
      %v2706 = vadd.f32 0.0, %v2705
      %2707 = vmatmul.bf16.gmra.mxu0 %v2579
      %v2708 = vpop.f32.mrf.mxu0
      %v2709 = vadd.f32 0.0, %v2708
      %v2710 = vpop.f32.mrf.mxu0
      %v2711 = vadd.f32 0.0, %v2710
      %2712 = vmatmul.bf16.gmra.mxu0 %v2580
      %v2713 = vpop.f32.mrf.mxu0
      %v2714 = vadd.f32 0.0, %v2713
      %v2715 = vpop.f32.mrf.mxu0
      %v2716 = vadd.f32 0.0, %v2715
      %2717 = vmatmul.bf16.gmra.mxu0 %v2581
      %v2718 = vpop.f32.mrf.mxu0
      %v2719 = vadd.f32 0.0, %v2718
      %v2720 = vpop.f32.mrf.mxu0
      %v2721 = vadd.f32 0.0, %v2720
      %2722 = vmatmul.bf16.gmra.mxu0 %v2582
      %v2723 = vpop.f32.mrf.mxu0
      %v2724 = vadd.f32 0.0, %v2723
      %v2725 = vpop.f32.mrf.mxu0
      %v2726 = vadd.f32 0.0, %v2725
      %2727 = vmatmul.bf16.gmra.mxu0 %v2583
      %v2728 = vpop.f32.mrf.mxu0
      %v2729 = vadd.f32 0.0, %v2728
      %v2730 = vpop.f32.mrf.mxu0
      %v2731 = vadd.f32 0.0, %v2730
      %2732 = vmatmul.bf16.gmra.mxu0 %v2584
      %v2733 = vpop.f32.mrf.mxu0
      %v2734 = vadd.f32 0.0, %v2733
      %v2735 = vpop.f32.mrf.mxu0
      %v2736 = vadd.f32 0.0, %v2735
      %2737 = vdwg.mxu0
      %v2738 = vld [vmem:[#allocation3] sm:$0xff]
      %v2739 = vld [vmem:[#allocation3 + $0x8] sm:$0xff]
      %v2740 = vld [vmem:[#allocation3 + $0x10] sm:$0xff]
      %v2741 = vld [vmem:[#allocation3 + $0x18] sm:$0xff]
      %v2742 = vld [vmem:[#allocation3 + $0x20] sm:$0xff]
      %v2743 = vld [vmem:[#allocation3 + $0x28] sm:$0xff]
      %v2744 = vld [vmem:[#allocation3 + $0x30] sm:$0xff]
      %v2745 = vld [vmem:[#allocation3 + $0x38] sm:$0xff]
      %v2746 = vld [vmem:[#allocation3 + $0x40] sm:$0xff]
      %v2747 = vld [vmem:[#allocation3 + $0x48] sm:$0xff]
      %v2748 = vld [vmem:[#allocation3 + $0x50] sm:$0xff]
      %v2749 = vld [vmem:[#allocation3 + $0x58] sm:$0xff]
      %v2750 = vld [vmem:[#allocation3 + $0x60] sm:$0xff]
      %v2751 = vld [vmem:[#allocation3 + $0x68] sm:$0xff]
      %v2752 = vld [vmem:[#allocation3 + $0x70] sm:$0xff]
      %v2753 = vld [vmem:[#allocation3 + $0x78] sm:$0xff]
      %v2754 = vld [vmem:[#allocation3 + $0x80] sm:$0xff]
      %v2755 = vld [vmem:[#allocation3 + $0x88] sm:$0xff]
      %v2756 = vld [vmem:[#allocation3 + $0x90] sm:$0xff]
      %v2757 = vld [vmem:[#allocation3 + $0x98] sm:$0xff]
      %v2758 = vld [vmem:[#allocation3 + $0xa0] sm:$0xff]
      %v2759 = vld [vmem:[#allocation3 + $0xa8] sm:$0xff]
      %v2760 = vld [vmem:[#allocation3 + $0xb0] sm:$0xff]
      %v2761 = vld [vmem:[#allocation3 + $0xb8] sm:$0xff]
      %v2762 = vld [vmem:[#allocation3 + $0xc0] sm:$0xff]
      %v2763 = vld [vmem:[#allocation3 + $0xc8] sm:$0xff]
      %v2764 = vld [vmem:[#allocation3 + $0xd0] sm:$0xff]
      %v2765 = vld [vmem:[#allocation3 + $0xd8] sm:$0xff]
      %v2766 = vld [vmem:[#allocation3 + $0xe0] sm:$0xff]
      %v2767 = vld [vmem:[#allocation3 + $0xe8] sm:$0xff]
      %v2768 = vld [vmem:[#allocation3 + $0xf0] sm:$0xff]
      %v2769 = vld [vmem:[#allocation3 + $0xf8] sm:$0xff]
      %v2770 = vadd.f32 %v2738, %v2659
      %v2771 = vadd.f32 %v2739, %v2661
      %v2772 = vadd.f32 %v2740, %v2664
      %v2773 = vadd.f32 %v2741, %v2666
      %v2774 = vadd.f32 %v2742, %v2669
      %v2775 = vadd.f32 %v2743, %v2671
      %v2776 = vadd.f32 %v2744, %v2674
      %v2777 = vadd.f32 %v2745, %v2676
      %v2778 = vadd.f32 %v2746, %v2679
      %v2779 = vadd.f32 %v2747, %v2681
      %v2780 = vadd.f32 %v2748, %v2684
      %v2781 = vadd.f32 %v2749, %v2686
      %v2782 = vadd.f32 %v2750, %v2689
      %v2783 = vadd.f32 %v2751, %v2691
      %v2784 = vadd.f32 %v2752, %v2694
      %v2785 = vadd.f32 %v2753, %v2696
      %v2786 = vadd.f32 %v2754, %v2699
      %v2787 = vadd.f32 %v2755, %v2701
      %v2788 = vadd.f32 %v2756, %v2704
      %v2789 = vadd.f32 %v2757, %v2706
      %v2790 = vadd.f32 %v2758, %v2709
      %v2791 = vadd.f32 %v2759, %v2711
      %v2792 = vadd.f32 %v2760, %v2714
      %v2793 = vadd.f32 %v2761, %v2716
      %v2794 = vadd.f32 %v2762, %v2719
      %v2795 = vadd.f32 %v2763, %v2721
      %v2796 = vadd.f32 %v2764, %v2724
      %v2797 = vadd.f32 %v2765, %v2726
      %v2798 = vadd.f32 %v2766, %v2729
      %v2799 = vadd.f32 %v2767, %v2731
      %v2800 = vadd.f32 %v2768, %v2734
      %v2801 = vadd.f32 %v2769, %v2736
      %2802 = vst [vmem:[#allocation3] sm:$0xff] %v2770
      %2803 = vst [vmem:[#allocation3 + $0x8] sm:$0xff] %v2771
      %2804 = vst [vmem:[#allocation3 + $0x10] sm:$0xff] %v2772
      %2805 = vst [vmem:[#allocation3 + $0x18] sm:$0xff] %v2773
      %2806 = vst [vmem:[#allocation3 + $0x20] sm:$0xff] %v2774
      %2807 = vst [vmem:[#allocation3 + $0x28] sm:$0xff] %v2775
      %2808 = vst [vmem:[#allocation3 + $0x30] sm:$0xff] %v2776
      %2809 = vst [vmem:[#allocation3 + $0x38] sm:$0xff] %v2777
      %2810 = vst [vmem:[#allocation3 + $0x40] sm:$0xff] %v2778
      %2811 = vst [vmem:[#allocation3 + $0x48] sm:$0xff] %v2779
      %2812 = vst [vmem:[#allocation3 + $0x50] sm:$0xff] %v2780
      %2813 = vst [vmem:[#allocation3 + $0x58] sm:$0xff] %v2781
      %2814 = vst [vmem:[#allocation3 + $0x60] sm:$0xff] %v2782
      %2815 = vst [vmem:[#allocation3 + $0x68] sm:$0xff] %v2783
      %2816 = vst [vmem:[#allocation3 + $0x70] sm:$0xff] %v2784
      %2817 = vst [vmem:[#allocation3 + $0x78] sm:$0xff] %v2785
      %2818 = vst [vmem:[#allocation3 + $0x80] sm:$0xff] %v2786
      %2819 = vst [vmem:[#allocation3 + $0x88] sm:$0xff] %v2787
      %2820 = vst [vmem:[#allocation3 + $0x90] sm:$0xff] %v2788
      %2821 = vst [vmem:[#allocation3 + $0x98] sm:$0xff] %v2789
      %2822 = vst [vmem:[#allocation3 + $0xa0] sm:$0xff] %v2790
      %2823 = vst [vmem:[#allocation3 + $0xa8] sm:$0xff] %v2791
      %2824 = vst [vmem:[#allocation3 + $0xb0] sm:$0xff] %v2792
      %2825 = vst [vmem:[#allocation3 + $0xb8] sm:$0xff] %v2793
      %2826 = vst [vmem:[#allocation3 + $0xc0] sm:$0xff] %v2794
      %2827 = vst [vmem:[#allocation3 + $0xc8] sm:$0xff] %v2795
      %2828 = vst [vmem:[#allocation3 + $0xd0] sm:$0xff] %v2796
      %2829 = vst [vmem:[#allocation3 + $0xd8] sm:$0xff] %v2797
      %2830 = vst [vmem:[#allocation3 + $0xe0] sm:$0xff] %v2798
      %2831 = vst [vmem:[#allocation3 + $0xe8] sm:$0xff] %v2799
      %2832 = vst [vmem:[#allocation3 + $0xf0] sm:$0xff] %v2800
      %2833 = vst [vmem:[#allocation3 + $0xf8] sm:$0xff] %v2801
      %v2834 = vld [vmem:[%s956] sm:$0xf]
      %v2835 = vld [vmem:[%s956 + $0x4] sm:$0xf]
      %v2836 = vld [vmem:[%s956 + $0x8] sm:$0xf]
      %v2837 = vld [vmem:[%s956 + $0xc] sm:$0xf]
      %v2838 = vld [vmem:[%s956 + $0x10] sm:$0xf]
      %v2839 = vld [vmem:[%s956 + $0x14] sm:$0xf]
      %v2840 = vld [vmem:[%s956 + $0x18] sm:$0xf]
      %v2841 = vld [vmem:[%s956 + $0x1c] sm:$0xf]
      %v2842 = vld [vmem:[%s956 + $0x20] sm:$0xf]
      %v2843 = vld [vmem:[%s956 + $0x24] sm:$0xf]
      %v2844 = vld [vmem:[%s956 + $0x28] sm:$0xf]
      %v2845 = vld [vmem:[%s956 + $0x2c] sm:$0xf]
      %v2846 = vld [vmem:[%s956 + $0x30] sm:$0xf]
      %v2847 = vld [vmem:[%s956 + $0x34] sm:$0xf]
      %v2848 = vld [vmem:[%s956 + $0x38] sm:$0xf]
      %v2849 = vld [vmem:[%s956 + $0x3c] sm:$0xf]
      %v2850 = vld [vmem:[%s956 + $0x40] sm:$0xf]
      %v2851 = vld [vmem:[%s956 + $0x44] sm:$0xf]
      %v2852 = vld [vmem:[%s956 + $0x48] sm:$0xf]
      %v2853 = vld [vmem:[%s956 + $0x4c] sm:$0xf]
      %v2854 = vld [vmem:[%s956 + $0x50] sm:$0xf]
      %v2855 = vld [vmem:[%s956 + $0x54] sm:$0xf]
      %v2856 = vld [vmem:[%s956 + $0x58] sm:$0xf]
      %v2857 = vld [vmem:[%s956 + $0x5c] sm:$0xf]
      %v2858 = vld [vmem:[%s956 + $0x60] sm:$0xf]
      %v2859 = vld [vmem:[%s956 + $0x64] sm:$0xf]
      %v2860 = vld [vmem:[%s956 + $0x68] sm:$0xf]
      %v2861 = vld [vmem:[%s956 + $0x6c] sm:$0xf]
      %v2862 = vld [vmem:[%s956 + $0x70] sm:$0xf]
      %v2863 = vld [vmem:[%s956 + $0x74] sm:$0xf]
      %v2864 = vld [vmem:[%s956 + $0x78] sm:$0xf]
      %v2865 = vld [vmem:[%s956 + $0x7c] sm:$0xf]
      %s2866 = scalar_lea.vmem %s2, 256
      %v2867 = vld [vmem:[%s2866] sm:$0xf]
      %v2868 = vld [vmem:[%s2866 + $0x4] sm:$0xf]
      %v2869 = vld [vmem:[%s2866 + $0x8] sm:$0xf]
      %v2870 = vld [vmem:[%s2866 + $0xc] sm:$0xf]
      %v2871 = vld [vmem:[%s2866 + $0x10] sm:$0xf]
      %v2872 = vld [vmem:[%s2866 + $0x14] sm:$0xf]
      %v2873 = vld [vmem:[%s2866 + $0x18] sm:$0xf]
      %v2874 = vld [vmem:[%s2866 + $0x1c] sm:$0xf]
      %v2875 = vld [vmem:[%s2866 + $0x20] sm:$0xf]
      %v2876 = vld [vmem:[%s2866 + $0x24] sm:$0xf]
      %v2877 = vld [vmem:[%s2866 + $0x28] sm:$0xf]
      %v2878 = vld [vmem:[%s2866 + $0x2c] sm:$0xf]
      %v2879 = vld [vmem:[%s2866 + $0x30] sm:$0xf]
      %v2880 = vld [vmem:[%s2866 + $0x34] sm:$0xf]
      %v2881 = vld [vmem:[%s2866 + $0x38] sm:$0xf]
      %v2882 = vld [vmem:[%s2866 + $0x3c] sm:$0xf]
      %v2915 = vunpack.c.l.b16 %v2834
      %v2916 = vunpack.c.l.b16 %v2835
      %v2917 = vunpack.c.l.b16 %v2836
      %v2918 = vunpack.c.l.b16 %v2837
      %v2919 = vunpack.c.l.b16 %v2838
      %v2920 = vunpack.c.l.b16 %v2839
      %v2921 = vunpack.c.l.b16 %v2840
      %v2922 = vunpack.c.l.b16 %v2841
      %v2923 = vunpack.c.l.b16 %v2842
      %v2924 = vunpack.c.l.b16 %v2843
      %v2925 = vunpack.c.l.b16 %v2844
      %v2926 = vunpack.c.l.b16 %v2845
      %v2927 = vunpack.c.l.b16 %v2846
      %v2928 = vunpack.c.l.b16 %v2847
      %v2929 = vunpack.c.l.b16 %v2848
      %v2930 = vunpack.c.l.b16 %v2849
      %v2931 = vunpack.c.l.b16 %v2850
      %v2932 = vunpack.c.l.b16 %v2851
      %v2933 = vunpack.c.l.b16 %v2852
      %v2934 = vunpack.c.l.b16 %v2853
      %v2935 = vunpack.c.l.b16 %v2854
      %v2936 = vunpack.c.l.b16 %v2855
      %v2937 = vunpack.c.l.b16 %v2856
      %v2938 = vunpack.c.l.b16 %v2857
      %v2939 = vunpack.c.l.b16 %v2858
      %v2940 = vunpack.c.l.b16 %v2859
      %v2941 = vunpack.c.l.b16 %v2860
      %v2942 = vunpack.c.l.b16 %v2861
      %v2943 = vunpack.c.l.b16 %v2862
      %v2944 = vunpack.c.l.b16 %v2863
      %v2945 = vunpack.c.l.b16 %v2864
      %v2946 = vunpack.c.l.b16 %v2865
      %v2947 = vpack.c.b16 %v2916, %v2915
      %v2948 = vpack.c.b16 %v2918, %v2917
      %v2949 = vpack.c.b16 %v2920, %v2919
      %v2950 = vpack.c.b16 %v2922, %v2921
      %v2951 = vpack.c.b16 %v2924, %v2923
      %v2952 = vpack.c.b16 %v2926, %v2925
      %v2953 = vpack.c.b16 %v2928, %v2927
      %v2954 = vpack.c.b16 %v2930, %v2929
      %v2955 = vpack.c.b16 %v2932, %v2931
      %v2956 = vpack.c.b16 %v2934, %v2933
      %v2957 = vpack.c.b16 %v2936, %v2935
      %v2958 = vpack.c.b16 %v2938, %v2937
      %v2959 = vpack.c.b16 %v2940, %v2939
      %v2960 = vpack.c.b16 %v2942, %v2941
      %v2961 = vpack.c.b16 %v2944, %v2943
      %v2962 = vpack.c.b16 %v2946, %v2945
      %v2995 = vunpack.c.l.b16 %v2867
      %v2996 = vunpack.c.l.b16 %v2868
      %v2997 = vunpack.c.l.b16 %v2869
      %v2998 = vunpack.c.l.b16 %v2870
      %v2999 = vunpack.c.l.b16 %v2871
      %v3000 = vunpack.c.l.b16 %v2872
      %v3001 = vunpack.c.l.b16 %v2873
      %v3002 = vunpack.c.l.b16 %v2874
      %v3003 = vunpack.c.l.b16 %v2875
      %v3004 = vunpack.c.l.b16 %v2876
      %v3005 = vunpack.c.l.b16 %v2877
      %v3006 = vunpack.c.l.b16 %v2878
      %v3007 = vunpack.c.l.b16 %v2879
      %v3008 = vunpack.c.l.b16 %v2880
      %v3009 = vunpack.c.l.b16 %v2881
      %v3010 = vunpack.c.l.b16 %v2882
      %v3011 = vpack.c.b16 %v2996, %v2995
      %v3012 = vpack.c.b16 %v2998, %v2997
      %v3013 = vpack.c.b16 %v3000, %v2999
      %v3014 = vpack.c.b16 %v3002, %v3001
      %v3015 = vpack.c.b16 %v3004, %v3003
      %v3016 = vpack.c.b16 %v3006, %v3005
      %v3017 = vpack.c.b16 %v3008, %v3007
      %v3018 = vpack.c.b16 %v3010, %v3009
      %3027 = vmatpush.bf16.msra.mxu0 %v3018
      %3028 = vmatpush.bf16.msra.mxu0 %v3017
      %3029 = vmatpush.bf16.msra.mxu0 %v3016
      %3030 = vmatpush.bf16.msra.mxu0 %v3015
      %3031 = vmatpush.bf16.msra.mxu0 %v3014
      %3032 = vmatpush.bf16.msra.mxu0 %v3013
      %3033 = vmatpush.bf16.msra.mxu0 %v3012
      %3034 = vmatpush.bf16.msra.mxu0 %v3011
      %3035 = vmatmul.bf16.gmra.mxu0 %v2947
      %v3036 = vpop.f32.mrf.mxu0
      %v3037 = vadd.f32 0.0, %v3036
      %v3038 = vpop.f32.mrf.mxu0
      %v3039 = vadd.f32 0.0, %v3038
      %3040 = vmatmul.bf16.gmra.mxu0 %v2948
      %v3041 = vpop.f32.mrf.mxu0
      %v3042 = vadd.f32 0.0, %v3041
      %v3043 = vpop.f32.mrf.mxu0
      %v3044 = vadd.f32 0.0, %v3043
      %3045 = vmatmul.bf16.gmra.mxu0 %v2949
      %v3046 = vpop.f32.mrf.mxu0
      %v3047 = vadd.f32 0.0, %v3046
      %v3048 = vpop.f32.mrf.mxu0
      %v3049 = vadd.f32 0.0, %v3048
      %3050 = vmatmul.bf16.gmra.mxu0 %v2950
      %v3051 = vpop.f32.mrf.mxu0
      %v3052 = vadd.f32 0.0, %v3051
      %v3053 = vpop.f32.mrf.mxu0
      %v3054 = vadd.f32 0.0, %v3053
      %3055 = vmatmul.bf16.gmra.mxu0 %v2951
      %v3056 = vpop.f32.mrf.mxu0
      %v3057 = vadd.f32 0.0, %v3056
      %v3058 = vpop.f32.mrf.mxu0
      %v3059 = vadd.f32 0.0, %v3058
      %3060 = vmatmul.bf16.gmra.mxu0 %v2952
      %v3061 = vpop.f32.mrf.mxu0
      %v3062 = vadd.f32 0.0, %v3061
      %v3063 = vpop.f32.mrf.mxu0
      %v3064 = vadd.f32 0.0, %v3063
      %3065 = vmatmul.bf16.gmra.mxu0 %v2953
      %v3066 = vpop.f32.mrf.mxu0
      %v3067 = vadd.f32 0.0, %v3066
      %v3068 = vpop.f32.mrf.mxu0
      %v3069 = vadd.f32 0.0, %v3068
      %3070 = vmatmul.bf16.gmra.mxu0 %v2954
      %v3071 = vpop.f32.mrf.mxu0
      %v3072 = vadd.f32 0.0, %v3071
      %v3073 = vpop.f32.mrf.mxu0
      %v3074 = vadd.f32 0.0, %v3073
      %3075 = vmatmul.bf16.gmra.mxu0 %v2955
      %v3076 = vpop.f32.mrf.mxu0
      %v3077 = vadd.f32 0.0, %v3076
      %v3078 = vpop.f32.mrf.mxu0
      %v3079 = vadd.f32 0.0, %v3078
      %3080 = vmatmul.bf16.gmra.mxu0 %v2956
      %v3081 = vpop.f32.mrf.mxu0
      %v3082 = vadd.f32 0.0, %v3081
      %v3083 = vpop.f32.mrf.mxu0
      %v3084 = vadd.f32 0.0, %v3083
      %3085 = vmatmul.bf16.gmra.mxu0 %v2957
      %v3086 = vpop.f32.mrf.mxu0
      %v3087 = vadd.f32 0.0, %v3086
      %v3088 = vpop.f32.mrf.mxu0
      %v3089 = vadd.f32 0.0, %v3088
      %3090 = vmatmul.bf16.gmra.mxu0 %v2958
      %v3091 = vpop.f32.mrf.mxu0
      %v3092 = vadd.f32 0.0, %v3091
      %v3093 = vpop.f32.mrf.mxu0
      %v3094 = vadd.f32 0.0, %v3093
      %3095 = vmatmul.bf16.gmra.mxu0 %v2959
      %v3096 = vpop.f32.mrf.mxu0
      %v3097 = vadd.f32 0.0, %v3096
      %v3098 = vpop.f32.mrf.mxu0
      %v3099 = vadd.f32 0.0, %v3098
      %3100 = vmatmul.bf16.gmra.mxu0 %v2960
      %v3101 = vpop.f32.mrf.mxu0
      %v3102 = vadd.f32 0.0, %v3101
      %v3103 = vpop.f32.mrf.mxu0
      %v3104 = vadd.f32 0.0, %v3103
      %3105 = vmatmul.bf16.gmra.mxu0 %v2961
      %v3106 = vpop.f32.mrf.mxu0
      %v3107 = vadd.f32 0.0, %v3106
      %v3108 = vpop.f32.mrf.mxu0
      %v3109 = vadd.f32 0.0, %v3108
      %3110 = vmatmul.bf16.gmra.mxu0 %v2962
      %v3111 = vpop.f32.mrf.mxu0
      %v3112 = vadd.f32 0.0, %v3111
      %v3113 = vpop.f32.mrf.mxu0
      %v3114 = vadd.f32 0.0, %v3113
      %3115 = vdwg.mxu0
      %v3116 = vld [vmem:[#allocation3] sm:$0xff]
      %v3117 = vld [vmem:[#allocation3 + $0x8] sm:$0xff]
      %v3118 = vld [vmem:[#allocation3 + $0x10] sm:$0xff]
      %v3119 = vld [vmem:[#allocation3 + $0x18] sm:$0xff]
      %v3120 = vld [vmem:[#allocation3 + $0x20] sm:$0xff]
      %v3121 = vld [vmem:[#allocation3 + $0x28] sm:$0xff]
      %v3122 = vld [vmem:[#allocation3 + $0x30] sm:$0xff]
      %v3123 = vld [vmem:[#allocation3 + $0x38] sm:$0xff]
      %v3124 = vld [vmem:[#allocation3 + $0x40] sm:$0xff]
      %v3125 = vld [vmem:[#allocation3 + $0x48] sm:$0xff]
      %v3126 = vld [vmem:[#allocation3 + $0x50] sm:$0xff]
      %v3127 = vld [vmem:[#allocation3 + $0x58] sm:$0xff]
      %v3128 = vld [vmem:[#allocation3 + $0x60] sm:$0xff]
      %v3129 = vld [vmem:[#allocation3 + $0x68] sm:$0xff]
      %v3130 = vld [vmem:[#allocation3 + $0x70] sm:$0xff]
      %v3131 = vld [vmem:[#allocation3 + $0x78] sm:$0xff]
      %v3132 = vld [vmem:[#allocation3 + $0x80] sm:$0xff]
      %v3133 = vld [vmem:[#allocation3 + $0x88] sm:$0xff]
      %v3134 = vld [vmem:[#allocation3 + $0x90] sm:$0xff]
      %v3135 = vld [vmem:[#allocation3 + $0x98] sm:$0xff]
      %v3136 = vld [vmem:[#allocation3 + $0xa0] sm:$0xff]
      %v3137 = vld [vmem:[#allocation3 + $0xa8] sm:$0xff]
      %v3138 = vld [vmem:[#allocation3 + $0xb0] sm:$0xff]
      %v3139 = vld [vmem:[#allocation3 + $0xb8] sm:$0xff]
      %v3140 = vld [vmem:[#allocation3 + $0xc0] sm:$0xff]
      %v3141 = vld [vmem:[#allocation3 + $0xc8] sm:$0xff]
      %v3142 = vld [vmem:[#allocation3 + $0xd0] sm:$0xff]
      %v3143 = vld [vmem:[#allocation3 + $0xd8] sm:$0xff]
      %v3144 = vld [vmem:[#allocation3 + $0xe0] sm:$0xff]
      %v3145 = vld [vmem:[#allocation3 + $0xe8] sm:$0xff]
      %v3146 = vld [vmem:[#allocation3 + $0xf0] sm:$0xff]
      %v3147 = vld [vmem:[#allocation3 + $0xf8] sm:$0xff]
      %v3148 = vadd.f32 %v3116, %v3037
      %v3149 = vadd.f32 %v3117, %v3039
      %v3150 = vadd.f32 %v3118, %v3042
      %v3151 = vadd.f32 %v3119, %v3044
      %v3152 = vadd.f32 %v3120, %v3047
      %v3153 = vadd.f32 %v3121, %v3049
      %v3154 = vadd.f32 %v3122, %v3052
      %v3155 = vadd.f32 %v3123, %v3054
      %v3156 = vadd.f32 %v3124, %v3057
      %v3157 = vadd.f32 %v3125, %v3059
      %v3158 = vadd.f32 %v3126, %v3062
      %v3159 = vadd.f32 %v3127, %v3064
      %v3160 = vadd.f32 %v3128, %v3067
      %v3161 = vadd.f32 %v3129, %v3069
      %v3162 = vadd.f32 %v3130, %v3072
      %v3163 = vadd.f32 %v3131, %v3074
      %v3164 = vadd.f32 %v3132, %v3077
      %v3165 = vadd.f32 %v3133, %v3079
      %v3166 = vadd.f32 %v3134, %v3082
      %v3167 = vadd.f32 %v3135, %v3084
      %v3168 = vadd.f32 %v3136, %v3087
      %v3169 = vadd.f32 %v3137, %v3089
      %v3170 = vadd.f32 %v3138, %v3092
      %v3171 = vadd.f32 %v3139, %v3094
      %v3172 = vadd.f32 %v3140, %v3097
      %v3173 = vadd.f32 %v3141, %v3099
      %v3174 = vadd.f32 %v3142, %v3102
      %v3175 = vadd.f32 %v3143, %v3104
      %v3176 = vadd.f32 %v3144, %v3107
      %v3177 = vadd.f32 %v3145, %v3109
      %v3178 = vadd.f32 %v3146, %v3112
      %v3179 = vadd.f32 %v3147, %v3114
      %3180 = vst [vmem:[#allocation3] sm:$0xff] %v3148
      %3181 = vst [vmem:[#allocation3 + $0x8] sm:$0xff] %v3149
      %3182 = vst [vmem:[#allocation3 + $0x10] sm:$0xff] %v3150
      %3183 = vst [vmem:[#allocation3 + $0x18] sm:$0xff] %v3151
      %3184 = vst [vmem:[#allocation3 + $0x20] sm:$0xff] %v3152
      %3185 = vst [vmem:[#allocation3 + $0x28] sm:$0xff] %v3153
      %3186 = vst [vmem:[#allocation3 + $0x30] sm:$0xff] %v3154
      %3187 = vst [vmem:[#allocation3 + $0x38] sm:$0xff] %v3155
      %3188 = vst [vmem:[#allocation3 + $0x40] sm:$0xff] %v3156
      %3189 = vst [vmem:[#allocation3 + $0x48] sm:$0xff] %v3157
      %3190 = vst [vmem:[#allocation3 + $0x50] sm:$0xff] %v3158
      %3191 = vst [vmem:[#allocation3 + $0x58] sm:$0xff] %v3159
      %3192 = vst [vmem:[#allocation3 + $0x60] sm:$0xff] %v3160
      %3193 = vst [vmem:[#allocation3 + $0x68] sm:$0xff] %v3161
      %3194 = vst [vmem:[#allocation3 + $0x70] sm:$0xff] %v3162
      %3195 = vst [vmem:[#allocation3 + $0x78] sm:$0xff] %v3163
      %3196 = vst [vmem:[#allocation3 + $0x80] sm:$0xff] %v3164
      %3197 = vst [vmem:[#allocation3 + $0x88] sm:$0xff] %v3165
      %3198 = vst [vmem:[#allocation3 + $0x90] sm:$0xff] %v3166
      %3199 = vst [vmem:[#allocation3 + $0x98] sm:$0xff] %v3167
      %3200 = vst [vmem:[#allocation3 + $0xa0] sm:$0xff] %v3168
      %3201 = vst [vmem:[#allocation3 + $0xa8] sm:$0xff] %v3169
      %3202 = vst [vmem:[#allocation3 + $0xb0] sm:$0xff] %v3170
      %3203 = vst [vmem:[#allocation3 + $0xb8] sm:$0xff] %v3171
      %3204 = vst [vmem:[#allocation3 + $0xc0] sm:$0xff] %v3172
      %3205 = vst [vmem:[#allocation3 + $0xc8] sm:$0xff] %v3173
      %3206 = vst [vmem:[#allocation3 + $0xd0] sm:$0xff] %v3174
      %3207 = vst [vmem:[#allocation3 + $0xd8] sm:$0xff] %v3175
      %3208 = vst [vmem:[#allocation3 + $0xe0] sm:$0xff] %v3176
      %3209 = vst [vmem:[#allocation3 + $0xe8] sm:$0xff] %v3177
      %3210 = vst [vmem:[#allocation3 + $0xf0] sm:$0xff] %v3178
      %3211 = vst [vmem:[#allocation3 + $0xf8] sm:$0xff] %v3179
      %v3212 = vld [vmem:[%s1351] sm:$0xf]
      %v3213 = vld [vmem:[%s1351 + $0x4] sm:$0xf]
      %v3214 = vld [vmem:[%s1351 + $0x8] sm:$0xf]
      %v3215 = vld [vmem:[%s1351 + $0xc] sm:$0xf]
      %v3216 = vld [vmem:[%s1351 + $0x10] sm:$0xf]
      %v3217 = vld [vmem:[%s1351 + $0x14] sm:$0xf]
      %v3218 = vld [vmem:[%s1351 + $0x18] sm:$0xf]
      %v3219 = vld [vmem:[%s1351 + $0x1c] sm:$0xf]
      %v3220 = vld [vmem:[%s1351 + $0x20] sm:$0xf]
      %v3221 = vld [vmem:[%s1351 + $0x24] sm:$0xf]
      %v3222 = vld [vmem:[%s1351 + $0x28] sm:$0xf]
      %v3223 = vld [vmem:[%s1351 + $0x2c] sm:$0xf]
      %v3224 = vld [vmem:[%s1351 + $0x30] sm:$0xf]
      %v3225 = vld [vmem:[%s1351 + $0x34] sm:$0xf]
      %v3226 = vld [vmem:[%s1351 + $0x38] sm:$0xf]
      %v3227 = vld [vmem:[%s1351 + $0x3c] sm:$0xf]
      %v3228 = vld [vmem:[%s1351 + $0x40] sm:$0xf]
      %v3229 = vld [vmem:[%s1351 + $0x44] sm:$0xf]
      %v3230 = vld [vmem:[%s1351 + $0x48] sm:$0xf]
      %v3231 = vld [vmem:[%s1351 + $0x4c] sm:$0xf]
      %v3232 = vld [vmem:[%s1351 + $0x50] sm:$0xf]
      %v3233 = vld [vmem:[%s1351 + $0x54] sm:$0xf]
      %v3234 = vld [vmem:[%s1351 + $0x58] sm:$0xf]
      %v3235 = vld [vmem:[%s1351 + $0x5c] sm:$0xf]
      %v3236 = vld [vmem:[%s1351 + $0x60] sm:$0xf]
      %v3237 = vld [vmem:[%s1351 + $0x64] sm:$0xf]
      %v3238 = vld [vmem:[%s1351 + $0x68] sm:$0xf]
      %v3239 = vld [vmem:[%s1351 + $0x6c] sm:$0xf]
      %v3240 = vld [vmem:[%s1351 + $0x70] sm:$0xf]
      %v3241 = vld [vmem:[%s1351 + $0x74] sm:$0xf]
      %v3242 = vld [vmem:[%s1351 + $0x78] sm:$0xf]
      %v3243 = vld [vmem:[%s1351 + $0x7c] sm:$0xf]
      %s3244 = scalar_lea.vmem %s2, 320
      %v3245 = vld [vmem:[%s3244] sm:$0xf]
      %v3246 = vld [vmem:[%s3244 + $0x4] sm:$0xf]
      %v3247 = vld [vmem:[%s3244 + $0x8] sm:$0xf]
      %v3248 = vld [vmem:[%s3244 + $0xc] sm:$0xf]
      %v3249 = vld [vmem:[%s3244 + $0x10] sm:$0xf]
      %v3250 = vld [vmem:[%s3244 + $0x14] sm:$0xf]
      %v3251 = vld [vmem:[%s3244 + $0x18] sm:$0xf]
      %v3252 = vld [vmem:[%s3244 + $0x1c] sm:$0xf]
      %v3253 = vld [vmem:[%s3244 + $0x20] sm:$0xf]
      %v3254 = vld [vmem:[%s3244 + $0x24] sm:$0xf]
      %v3255 = vld [vmem:[%s3244 + $0x28] sm:$0xf]
      %v3256 = vld [vmem:[%s3244 + $0x2c] sm:$0xf]
      %v3257 = vld [vmem:[%s3244 + $0x30] sm:$0xf]
      %v3258 = vld [vmem:[%s3244 + $0x34] sm:$0xf]
      %v3259 = vld [vmem:[%s3244 + $0x38] sm:$0xf]
      %v3260 = vld [vmem:[%s3244 + $0x3c] sm:$0xf]
      %v3293 = vunpack.c.l.b16 %v3212
      %v3294 = vunpack.c.l.b16 %v3213
      %v3295 = vunpack.c.l.b16 %v3214
      %v3296 = vunpack.c.l.b16 %v3215
      %v3297 = vunpack.c.l.b16 %v3216
      %v3298 = vunpack.c.l.b16 %v3217
      %v3299 = vunpack.c.l.b16 %v3218
      %v3300 = vunpack.c.l.b16 %v3219
      %v3301 = vunpack.c.l.b16 %v3220
      %v3302 = vunpack.c.l.b16 %v3221
      %v3303 = vunpack.c.l.b16 %v3222
      %v3304 = vunpack.c.l.b16 %v3223
      %v3305 = vunpack.c.l.b16 %v3224
      %v3306 = vunpack.c.l.b16 %v3225
      %v3307 = vunpack.c.l.b16 %v3226
      %v3308 = vunpack.c.l.b16 %v3227
      %v3309 = vunpack.c.l.b16 %v3228
      %v3310 = vunpack.c.l.b16 %v3229
      %v3311 = vunpack.c.l.b16 %v3230
      %v3312 = vunpack.c.l.b16 %v3231
      %v3313 = vunpack.c.l.b16 %v3232
      %v3314 = vunpack.c.l.b16 %v3233
      %v3315 = vunpack.c.l.b16 %v3234
      %v3316 = vunpack.c.l.b16 %v3235
      %v3317 = vunpack.c.l.b16 %v3236
      %v3318 = vunpack.c.l.b16 %v3237
      %v3319 = vunpack.c.l.b16 %v3238
      %v3320 = vunpack.c.l.b16 %v3239
      %v3321 = vunpack.c.l.b16 %v3240
      %v3322 = vunpack.c.l.b16 %v3241
      %v3323 = vunpack.c.l.b16 %v3242
      %v3324 = vunpack.c.l.b16 %v3243
      %v3325 = vpack.c.b16 %v3294, %v3293
      %v3326 = vpack.c.b16 %v3296, %v3295
      %v3327 = vpack.c.b16 %v3298, %v3297
      %v3328 = vpack.c.b16 %v3300, %v3299
      %v3329 = vpack.c.b16 %v3302, %v3301
      %v3330 = vpack.c.b16 %v3304, %v3303
      %v3331 = vpack.c.b16 %v3306, %v3305
      %v3332 = vpack.c.b16 %v3308, %v3307
      %v3333 = vpack.c.b16 %v3310, %v3309
      %v3334 = vpack.c.b16 %v3312, %v3311
      %v3335 = vpack.c.b16 %v3314, %v3313
      %v3336 = vpack.c.b16 %v3316, %v3315
      %v3337 = vpack.c.b16 %v3318, %v3317
      %v3338 = vpack.c.b16 %v3320, %v3319
      %v3339 = vpack.c.b16 %v3322, %v3321
      %v3340 = vpack.c.b16 %v3324, %v3323
      %v3373 = vunpack.c.l.b16 %v3245
      %v3374 = vunpack.c.l.b16 %v3246
      %v3375 = vunpack.c.l.b16 %v3247
      %v3376 = vunpack.c.l.b16 %v3248
      %v3377 = vunpack.c.l.b16 %v3249
      %v3378 = vunpack.c.l.b16 %v3250
      %v3379 = vunpack.c.l.b16 %v3251
      %v3380 = vunpack.c.l.b16 %v3252
      %v3381 = vunpack.c.l.b16 %v3253
      %v3382 = vunpack.c.l.b16 %v3254
      %v3383 = vunpack.c.l.b16 %v3255
      %v3384 = vunpack.c.l.b16 %v3256
      %v3385 = vunpack.c.l.b16 %v3257
      %v3386 = vunpack.c.l.b16 %v3258
      %v3387 = vunpack.c.l.b16 %v3259
      %v3388 = vunpack.c.l.b16 %v3260
      %v3389 = vpack.c.b16 %v3374, %v3373
      %v3390 = vpack.c.b16 %v3376, %v3375
      %v3391 = vpack.c.b16 %v3378, %v3377
      %v3392 = vpack.c.b16 %v3380, %v3379
      %v3393 = vpack.c.b16 %v3382, %v3381
      %v3394 = vpack.c.b16 %v3384, %v3383
      %v3395 = vpack.c.b16 %v3386, %v3385
      %v3396 = vpack.c.b16 %v3388, %v3387
      %3405 = vmatpush.bf16.msra.mxu0 %v3396
      %3406 = vmatpush.bf16.msra.mxu0 %v3395
      %3407 = vmatpush.bf16.msra.mxu0 %v3394
      %3408 = vmatpush.bf16.msra.mxu0 %v3393
      %3409 = vmatpush.bf16.msra.mxu0 %v3392
      %3410 = vmatpush.bf16.msra.mxu0 %v3391
      %3411 = vmatpush.bf16.msra.mxu0 %v3390
      %3412 = vmatpush.bf16.msra.mxu0 %v3389
      %3413 = vmatmul.bf16.gmra.mxu0 %v3325
      %v3414 = vpop.f32.mrf.mxu0
      %v3415 = vadd.f32 0.0, %v3414
      %v3416 = vpop.f32.mrf.mxu0
      %v3417 = vadd.f32 0.0, %v3416
      %3418 = vmatmul.bf16.gmra.mxu0 %v3326
      %v3419 = vpop.f32.mrf.mxu0
      %v3420 = vadd.f32 0.0, %v3419
      %v3421 = vpop.f32.mrf.mxu0
      %v3422 = vadd.f32 0.0, %v3421
      %3423 = vmatmul.bf16.gmra.mxu0 %v3327
      %v3424 = vpop.f32.mrf.mxu0
      %v3425 = vadd.f32 0.0, %v3424
      %v3426 = vpop.f32.mrf.mxu0
      %v3427 = vadd.f32 0.0, %v3426
      %3428 = vmatmul.bf16.gmra.mxu0 %v3328
      %v3429 = vpop.f32.mrf.mxu0
      %v3430 = vadd.f32 0.0, %v3429
      %v3431 = vpop.f32.mrf.mxu0
      %v3432 = vadd.f32 0.0, %v3431
      %3433 = vmatmul.bf16.gmra.mxu0 %v3329
      %v3434 = vpop.f32.mrf.mxu0
      %v3435 = vadd.f32 0.0, %v3434
      %v3436 = vpop.f32.mrf.mxu0
      %v3437 = vadd.f32 0.0, %v3436
      %3438 = vmatmul.bf16.gmra.mxu0 %v3330
      %v3439 = vpop.f32.mrf.mxu0
      %v3440 = vadd.f32 0.0, %v3439
      %v3441 = vpop.f32.mrf.mxu0
      %v3442 = vadd.f32 0.0, %v3441
      %3443 = vmatmul.bf16.gmra.mxu0 %v3331
      %v3444 = vpop.f32.mrf.mxu0
      %v3445 = vadd.f32 0.0, %v3444
      %v3446 = vpop.f32.mrf.mxu0
      %v3447 = vadd.f32 0.0, %v3446
      %3448 = vmatmul.bf16.gmra.mxu0 %v3332
      %v3449 = vpop.f32.mrf.mxu0
      %v3450 = vadd.f32 0.0, %v3449
      %v3451 = vpop.f32.mrf.mxu0
      %v3452 = vadd.f32 0.0, %v3451
      %3453 = vmatmul.bf16.gmra.mxu0 %v3333
      %v3454 = vpop.f32.mrf.mxu0
      %v3455 = vadd.f32 0.0, %v3454
      %v3456 = vpop.f32.mrf.mxu0
      %v3457 = vadd.f32 0.0, %v3456
      %3458 = vmatmul.bf16.gmra.mxu0 %v3334
      %v3459 = vpop.f32.mrf.mxu0
      %v3460 = vadd.f32 0.0, %v3459
      %v3461 = vpop.f32.mrf.mxu0
      %v3462 = vadd.f32 0.0, %v3461
      %3463 = vmatmul.bf16.gmra.mxu0 %v3335
      %v3464 = vpop.f32.mrf.mxu0
      %v3465 = vadd.f32 0.0, %v3464
      %v3466 = vpop.f32.mrf.mxu0
      %v3467 = vadd.f32 0.0, %v3466
      %3468 = vmatmul.bf16.gmra.mxu0 %v3336
      %v3469 = vpop.f32.mrf.mxu0
      %v3470 = vadd.f32 0.0, %v3469
      %v3471 = vpop.f32.mrf.mxu0
      %v3472 = vadd.f32 0.0, %v3471
      %3473 = vmatmul.bf16.gmra.mxu0 %v3337
      %v3474 = vpop.f32.mrf.mxu0
      %v3475 = vadd.f32 0.0, %v3474
      %v3476 = vpop.f32.mrf.mxu0
      %v3477 = vadd.f32 0.0, %v3476
      %3478 = vmatmul.bf16.gmra.mxu0 %v3338
      %v3479 = vpop.f32.mrf.mxu0
      %v3480 = vadd.f32 0.0, %v3479
      %v3481 = vpop.f32.mrf.mxu0
      %v3482 = vadd.f32 0.0, %v3481
      %3483 = vmatmul.bf16.gmra.mxu0 %v3339
      %v3484 = vpop.f32.mrf.mxu0
      %v3485 = vadd.f32 0.0, %v3484
      %v3486 = vpop.f32.mrf.mxu0
      %v3487 = vadd.f32 0.0, %v3486
      %3488 = vmatmul.bf16.gmra.mxu0 %v3340
      %v3489 = vpop.f32.mrf.mxu0
      %v3490 = vadd.f32 0.0, %v3489
      %v3491 = vpop.f32.mrf.mxu0
      %v3492 = vadd.f32 0.0, %v3491
      %3493 = vdwg.mxu0
      %v3494 = vld [vmem:[#allocation3] sm:$0xff]
      %v3495 = vld [vmem:[#allocation3 + $0x8] sm:$0xff]
      %v3496 = vld [vmem:[#allocation3 + $0x10] sm:$0xff]
      %v3497 = vld [vmem:[#allocation3 + $0x18] sm:$0xff]
      %v3498 = vld [vmem:[#allocation3 + $0x20] sm:$0xff]
      %v3499 = vld [vmem:[#allocation3 + $0x28] sm:$0xff]
      %v3500 = vld [vmem:[#allocation3 + $0x30] sm:$0xff]
      %v3501 = vld [vmem:[#allocation3 + $0x38] sm:$0xff]
      %v3502 = vld [vmem:[#allocation3 + $0x40] sm:$0xff]
      %v3503 = vld [vmem:[#allocation3 + $0x48] sm:$0xff]
      %v3504 = vld [vmem:[#allocation3 + $0x50] sm:$0xff]
      %v3505 = vld [vmem:[#allocation3 + $0x58] sm:$0xff]
      %v3506 = vld [vmem:[#allocation3 + $0x60] sm:$0xff]
      %v3507 = vld [vmem:[#allocation3 + $0x68] sm:$0xff]
      %v3508 = vld [vmem:[#allocation3 + $0x70] sm:$0xff]
      %v3509 = vld [vmem:[#allocation3 + $0x78] sm:$0xff]
      %v3510 = vld [vmem:[#allocation3 + $0x80] sm:$0xff]
      %v3511 = vld [vmem:[#allocation3 + $0x88] sm:$0xff]
      %v3512 = vld [vmem:[#allocation3 + $0x90] sm:$0xff]
      %v3513 = vld [vmem:[#allocation3 + $0x98] sm:$0xff]
      %v3514 = vld [vmem:[#allocation3 + $0xa0] sm:$0xff]
      %v3515 = vld [vmem:[#allocation3 + $0xa8] sm:$0xff]
      %v3516 = vld [vmem:[#allocation3 + $0xb0] sm:$0xff]
      %v3517 = vld [vmem:[#allocation3 + $0xb8] sm:$0xff]
      %v3518 = vld [vmem:[#allocation3 + $0xc0] sm:$0xff]
      %v3519 = vld [vmem:[#allocation3 + $0xc8] sm:$0xff]
      %v3520 = vld [vmem:[#allocation3 + $0xd0] sm:$0xff]
      %v3521 = vld [vmem:[#allocation3 + $0xd8] sm:$0xff]
      %v3522 = vld [vmem:[#allocation3 + $0xe0] sm:$0xff]
      %v3523 = vld [vmem:[#allocation3 + $0xe8] sm:$0xff]
      %v3524 = vld [vmem:[#allocation3 + $0xf0] sm:$0xff]
      %v3525 = vld [vmem:[#allocation3 + $0xf8] sm:$0xff]
      %v3526 = vadd.f32 %v3494, %v3415
      %v3527 = vadd.f32 %v3495, %v3417
      %v3528 = vadd.f32 %v3496, %v3420
      %v3529 = vadd.f32 %v3497, %v3422
      %v3530 = vadd.f32 %v3498, %v3425
      %v3531 = vadd.f32 %v3499, %v3427
      %v3532 = vadd.f32 %v3500, %v3430
      %v3533 = vadd.f32 %v3501, %v3432
      %v3534 = vadd.f32 %v3502, %v3435
      %v3535 = vadd.f32 %v3503, %v3437
      %v3536 = vadd.f32 %v3504, %v3440
      %v3537 = vadd.f32 %v3505, %v3442
      %v3538 = vadd.f32 %v3506, %v3445
      %v3539 = vadd.f32 %v3507, %v3447
      %v3540 = vadd.f32 %v3508, %v3450
      %v3541 = vadd.f32 %v3509, %v3452
      %v3542 = vadd.f32 %v3510, %v3455
      %v3543 = vadd.f32 %v3511, %v3457
      %v3544 = vadd.f32 %v3512, %v3460
      %v3545 = vadd.f32 %v3513, %v3462
      %v3546 = vadd.f32 %v3514, %v3465
      %v3547 = vadd.f32 %v3515, %v3467
      %v3548 = vadd.f32 %v3516, %v3470
      %v3549 = vadd.f32 %v3517, %v3472
      %v3550 = vadd.f32 %v3518, %v3475
      %v3551 = vadd.f32 %v3519, %v3477
      %v3552 = vadd.f32 %v3520, %v3480
      %v3553 = vadd.f32 %v3521, %v3482
      %v3554 = vadd.f32 %v3522, %v3485
      %v3555 = vadd.f32 %v3523, %v3487
      %v3556 = vadd.f32 %v3524, %v3490
      %v3557 = vadd.f32 %v3525, %v3492
      %3558 = vst [vmem:[#allocation3] sm:$0xff] %v3526
      %3559 = vst [vmem:[#allocation3 + $0x8] sm:$0xff] %v3527
      %3560 = vst [vmem:[#allocation3 + $0x10] sm:$0xff] %v3528
      %3561 = vst [vmem:[#allocation3 + $0x18] sm:$0xff] %v3529
      %3562 = vst [vmem:[#allocation3 + $0x20] sm:$0xff] %v3530
      %3563 = vst [vmem:[#allocation3 + $0x28] sm:$0xff] %v3531
      %3564 = vst [vmem:[#allocation3 + $0x30] sm:$0xff] %v3532
      %3565 = vst [vmem:[#allocation3 + $0x38] sm:$0xff] %v3533
      %3566 = vst [vmem:[#allocation3 + $0x40] sm:$0xff] %v3534
      %3567 = vst [vmem:[#allocation3 + $0x48] sm:$0xff] %v3535
      %3568 = vst [vmem:[#allocation3 + $0x50] sm:$0xff] %v3536
      %3569 = vst [vmem:[#allocation3 + $0x58] sm:$0xff] %v3537
      %3570 = vst [vmem:[#allocation3 + $0x60] sm:$0xff] %v3538
      %3571 = vst [vmem:[#allocation3 + $0x68] sm:$0xff] %v3539
      %3572 = vst [vmem:[#allocation3 + $0x70] sm:$0xff] %v3540
      %3573 = vst [vmem:[#allocation3 + $0x78] sm:$0xff] %v3541
      %3574 = vst [vmem:[#allocation3 + $0x80] sm:$0xff] %v3542
      %3575 = vst [vmem:[#allocation3 + $0x88] sm:$0xff] %v3543
      %3576 = vst [vmem:[#allocation3 + $0x90] sm:$0xff] %v3544
      %3577 = vst [vmem:[#allocation3 + $0x98] sm:$0xff] %v3545
      %3578 = vst [vmem:[#allocation3 + $0xa0] sm:$0xff] %v3546
      %3579 = vst [vmem:[#allocation3 + $0xa8] sm:$0xff] %v3547
      %3580 = vst [vmem:[#allocation3 + $0xb0] sm:$0xff] %v3548
      %3581 = vst [vmem:[#allocation3 + $0xb8] sm:$0xff] %v3549
      %3582 = vst [vmem:[#allocation3 + $0xc0] sm:$0xff] %v3550
      %3583 = vst [vmem:[#allocation3 + $0xc8] sm:$0xff] %v3551
      %3584 = vst [vmem:[#allocation3 + $0xd0] sm:$0xff] %v3552
      %3585 = vst [vmem:[#allocation3 + $0xd8] sm:$0xff] %v3553
      %3586 = vst [vmem:[#allocation3 + $0xe0] sm:$0xff] %v3554
      %3587 = vst [vmem:[#allocation3 + $0xe8] sm:$0xff] %v3555
      %3588 = vst [vmem:[#allocation3 + $0xf0] sm:$0xff] %v3556
      %3589 = vst [vmem:[#allocation3 + $0xf8] sm:$0xff] %v3557
      %s3590 = scalar_lea.vmem [#allocation2], 16
      %v3591 = vld [vmem:[%s3590] sm:$0xf]
      %v3592 = vld [vmem:[%s3590 + $0x4] sm:$0xf]
      %v3593 = vld [vmem:[%s3590 + $0x8] sm:$0xf]
      %v3594 = vld [vmem:[%s3590 + $0xc] sm:$0xf]
      %v3595 = vld [vmem:[%s3590 + $0x10] sm:$0xf]
      %v3596 = vld [vmem:[%s3590 + $0x14] sm:$0xf]
      %v3597 = vld [vmem:[%s3590 + $0x18] sm:$0xf]
      %v3598 = vld [vmem:[%s3590 + $0x1c] sm:$0xf]
      %v3599 = vld [vmem:[%s3590 + $0x20] sm:$0xf]
      %v3600 = vld [vmem:[%s3590 + $0x24] sm:$0xf]
      %v3601 = vld [vmem:[%s3590 + $0x28] sm:$0xf]
      %v3602 = vld [vmem:[%s3590 + $0x2c] sm:$0xf]
      %v3603 = vld [vmem:[%s3590 + $0x30] sm:$0xf]
      %v3604 = vld [vmem:[%s3590 + $0x34] sm:$0xf]
      %v3605 = vld [vmem:[%s3590 + $0x38] sm:$0xf]
      %v3606 = vld [vmem:[%s3590 + $0x3c] sm:$0xf]
      %v3607 = vld [vmem:[%s3590 + $0x40] sm:$0xf]
      %v3608 = vld [vmem:[%s3590 + $0x44] sm:$0xf]
      %v3609 = vld [vmem:[%s3590 + $0x48] sm:$0xf]
      %v3610 = vld [vmem:[%s3590 + $0x4c] sm:$0xf]
      %v3611 = vld [vmem:[%s3590 + $0x50] sm:$0xf]
      %v3612 = vld [vmem:[%s3590 + $0x54] sm:$0xf]
      %v3613 = vld [vmem:[%s3590 + $0x58] sm:$0xf]
      %v3614 = vld [vmem:[%s3590 + $0x5c] sm:$0xf]
      %v3615 = vld [vmem:[%s3590 + $0x60] sm:$0xf]
      %v3616 = vld [vmem:[%s3590 + $0x64] sm:$0xf]
      %v3617 = vld [vmem:[%s3590 + $0x68] sm:$0xf]
      %v3618 = vld [vmem:[%s3590 + $0x6c] sm:$0xf]
      %v3619 = vld [vmem:[%s3590 + $0x70] sm:$0xf]
      %v3620 = vld [vmem:[%s3590 + $0x74] sm:$0xf]
      %v3621 = vld [vmem:[%s3590 + $0x78] sm:$0xf]
      %v3622 = vld [vmem:[%s3590 + $0x7c] sm:$0xf]
      %s3623 = scalar_lea.vmem %s2, 384
      %v3624 = vld [vmem:[%s3623] sm:$0xf]
      %v3625 = vld [vmem:[%s3623 + $0x4] sm:$0xf]
      %v3626 = vld [vmem:[%s3623 + $0x8] sm:$0xf]
      %v3627 = vld [vmem:[%s3623 + $0xc] sm:$0xf]
      %v3628 = vld [vmem:[%s3623 + $0x10] sm:$0xf]
      %v3629 = vld [vmem:[%s3623 + $0x14] sm:$0xf]
      %v3630 = vld [vmem:[%s3623 + $0x18] sm:$0xf]
      %v3631 = vld [vmem:[%s3623 + $0x1c] sm:$0xf]
      %v3632 = vld [vmem:[%s3623 + $0x20] sm:$0xf]
      %v3633 = vld [vmem:[%s3623 + $0x24] sm:$0xf]
      %v3634 = vld [vmem:[%s3623 + $0x28] sm:$0xf]
      %v3635 = vld [vmem:[%s3623 + $0x2c] sm:$0xf]
      %v3636 = vld [vmem:[%s3623 + $0x30] sm:$0xf]
      %v3637 = vld [vmem:[%s3623 + $0x34] sm:$0xf]
      %v3638 = vld [vmem:[%s3623 + $0x38] sm:$0xf]
      %v3639 = vld [vmem:[%s3623 + $0x3c] sm:$0xf]
      %v3672 = vunpack.c.l.b16 %v3591
      %v3673 = vunpack.c.l.b16 %v3592
      %v3674 = vunpack.c.l.b16 %v3593
      %v3675 = vunpack.c.l.b16 %v3594
      %v3676 = vunpack.c.l.b16 %v3595
      %v3677 = vunpack.c.l.b16 %v3596
      %v3678 = vunpack.c.l.b16 %v3597
      %v3679 = vunpack.c.l.b16 %v3598
      %v3680 = vunpack.c.l.b16 %v3599
      %v3681 = vunpack.c.l.b16 %v3600
      %v3682 = vunpack.c.l.b16 %v3601
      %v3683 = vunpack.c.l.b16 %v3602
      %v3684 = vunpack.c.l.b16 %v3603
      %v3685 = vunpack.c.l.b16 %v3604
      %v3686 = vunpack.c.l.b16 %v3605
      %v3687 = vunpack.c.l.b16 %v3606
      %v3688 = vunpack.c.l.b16 %v3607
      %v3689 = vunpack.c.l.b16 %v3608
      %v3690 = vunpack.c.l.b16 %v3609
      %v3691 = vunpack.c.l.b16 %v3610
      %v3692 = vunpack.c.l.b16 %v3611
      %v3693 = vunpack.c.l.b16 %v3612
      %v3694 = vunpack.c.l.b16 %v3613
      %v3695 = vunpack.c.l.b16 %v3614
      %v3696 = vunpack.c.l.b16 %v3615
      %v3697 = vunpack.c.l.b16 %v3616
      %v3698 = vunpack.c.l.b16 %v3617
      %v3699 = vunpack.c.l.b16 %v3618
      %v3700 = vunpack.c.l.b16 %v3619
      %v3701 = vunpack.c.l.b16 %v3620
      %v3702 = vunpack.c.l.b16 %v3621
      %v3703 = vunpack.c.l.b16 %v3622
      %v3704 = vpack.c.b16 %v3673, %v3672
      %v3705 = vpack.c.b16 %v3675, %v3674
      %v3706 = vpack.c.b16 %v3677, %v3676
      %v3707 = vpack.c.b16 %v3679, %v3678
      %v3708 = vpack.c.b16 %v3681, %v3680
      %v3709 = vpack.c.b16 %v3683, %v3682
      %v3710 = vpack.c.b16 %v3685, %v3684
      %v3711 = vpack.c.b16 %v3687, %v3686
      %v3712 = vpack.c.b16 %v3689, %v3688
      %v3713 = vpack.c.b16 %v3691, %v3690
      %v3714 = vpack.c.b16 %v3693, %v3692
      %v3715 = vpack.c.b16 %v3695, %v3694
      %v3716 = vpack.c.b16 %v3697, %v3696
      %v3717 = vpack.c.b16 %v3699, %v3698
      %v3718 = vpack.c.b16 %v3701, %v3700
      %v3719 = vpack.c.b16 %v3703, %v3702
      %v3752 = vunpack.c.l.b16 %v3624
      %v3753 = vunpack.c.l.b16 %v3625
      %v3754 = vunpack.c.l.b16 %v3626
      %v3755 = vunpack.c.l.b16 %v3627
      %v3756 = vunpack.c.l.b16 %v3628
      %v3757 = vunpack.c.l.b16 %v3629
      %v3758 = vunpack.c.l.b16 %v3630
      %v3759 = vunpack.c.l.b16 %v3631
      %v3760 = vunpack.c.l.b16 %v3632
      %v3761 = vunpack.c.l.b16 %v3633
      %v3762 = vunpack.c.l.b16 %v3634
      %v3763 = vunpack.c.l.b16 %v3635
      %v3764 = vunpack.c.l.b16 %v3636
      %v3765 = vunpack.c.l.b16 %v3637
      %v3766 = vunpack.c.l.b16 %v3638
      %v3767 = vunpack.c.l.b16 %v3639
      %v3768 = vpack.c.b16 %v3753, %v3752
      %v3769 = vpack.c.b16 %v3755, %v3754
      %v3770 = vpack.c.b16 %v3757, %v3756
      %v3771 = vpack.c.b16 %v3759, %v3758
      %v3772 = vpack.c.b16 %v3761, %v3760
      %v3773 = vpack.c.b16 %v3763, %v3762
      %v3774 = vpack.c.b16 %v3765, %v3764
      %v3775 = vpack.c.b16 %v3767, %v3766
      %3784 = vmatpush.bf16.msra.mxu0 %v3775
      %3785 = vmatpush.bf16.msra.mxu0 %v3774
      %3786 = vmatpush.bf16.msra.mxu0 %v3773
      %3787 = vmatpush.bf16.msra.mxu0 %v3772
      %3788 = vmatpush.bf16.msra.mxu0 %v3771
      %3789 = vmatpush.bf16.msra.mxu0 %v3770
      %3790 = vmatpush.bf16.msra.mxu0 %v3769
      %3791 = vmatpush.bf16.msra.mxu0 %v3768
      %3792 = vmatmul.bf16.gmra.mxu0 %v3704
      %v3793 = vpop.f32.mrf.mxu0
      %v3794 = vadd.f32 0.0, %v3793
      %v3795 = vpop.f32.mrf.mxu0
      %v3796 = vadd.f32 0.0, %v3795
      %3797 = vmatmul.bf16.gmra.mxu0 %v3705
      %v3798 = vpop.f32.mrf.mxu0
      %v3799 = vadd.f32 0.0, %v3798
      %v3800 = vpop.f32.mrf.mxu0
      %v3801 = vadd.f32 0.0, %v3800
      %3802 = vmatmul.bf16.gmra.mxu0 %v3706
      %v3803 = vpop.f32.mrf.mxu0
      %v3804 = vadd.f32 0.0, %v3803
      %v3805 = vpop.f32.mrf.mxu0
      %v3806 = vadd.f32 0.0, %v3805
      %3807 = vmatmul.bf16.gmra.mxu0 %v3707
      %v3808 = vpop.f32.mrf.mxu0
      %v3809 = vadd.f32 0.0, %v3808
      %v3810 = vpop.f32.mrf.mxu0
      %v3811 = vadd.f32 0.0, %v3810
      %3812 = vmatmul.bf16.gmra.mxu0 %v3708
      %v3813 = vpop.f32.mrf.mxu0
      %v3814 = vadd.f32 0.0, %v3813
      %v3815 = vpop.f32.mrf.mxu0
      %v3816 = vadd.f32 0.0, %v3815
      %3817 = vmatmul.bf16.gmra.mxu0 %v3709
      %v3818 = vpop.f32.mrf.mxu0
      %v3819 = vadd.f32 0.0, %v3818
      %v3820 = vpop.f32.mrf.mxu0
      %v3821 = vadd.f32 0.0, %v3820
      %3822 = vmatmul.bf16.gmra.mxu0 %v3710
      %v3823 = vpop.f32.mrf.mxu0
      %v3824 = vadd.f32 0.0, %v3823
      %v3825 = vpop.f32.mrf.mxu0
      %v3826 = vadd.f32 0.0, %v3825
      %3827 = vmatmul.bf16.gmra.mxu0 %v3711
      %v3828 = vpop.f32.mrf.mxu0
      %v3829 = vadd.f32 0.0, %v3828
      %v3830 = vpop.f32.mrf.mxu0
      %v3831 = vadd.f32 0.0, %v3830
      %3832 = vmatmul.bf16.gmra.mxu0 %v3712
      %v3833 = vpop.f32.mrf.mxu0
      %v3834 = vadd.f32 0.0, %v3833
      %v3835 = vpop.f32.mrf.mxu0
      %v3836 = vadd.f32 0.0, %v3835
      %3837 = vmatmul.bf16.gmra.mxu0 %v3713
      %v3838 = vpop.f32.mrf.mxu0
      %v3839 = vadd.f32 0.0, %v3838
      %v3840 = vpop.f32.mrf.mxu0
      %v3841 = vadd.f32 0.0, %v3840
      %3842 = vmatmul.bf16.gmra.mxu0 %v3714
      %v3843 = vpop.f32.mrf.mxu0
      %v3844 = vadd.f32 0.0, %v3843
      %v3845 = vpop.f32.mrf.mxu0
      %v3846 = vadd.f32 0.0, %v3845
      %3847 = vmatmul.bf16.gmra.mxu0 %v3715
      %v3848 = vpop.f32.mrf.mxu0
      %v3849 = vadd.f32 0.0, %v3848
      %v3850 = vpop.f32.mrf.mxu0
      %v3851 = vadd.f32 0.0, %v3850
      %3852 = vmatmul.bf16.gmra.mxu0 %v3716
      %v3853 = vpop.f32.mrf.mxu0
      %v3854 = vadd.f32 0.0, %v3853
      %v3855 = vpop.f32.mrf.mxu0
      %v3856 = vadd.f32 0.0, %v3855
      %3857 = vmatmul.bf16.gmra.mxu0 %v3717
      %v3858 = vpop.f32.mrf.mxu0
      %v3859 = vadd.f32 0.0, %v3858
      %v3860 = vpop.f32.mrf.mxu0
      %v3861 = vadd.f32 0.0, %v3860
      %3862 = vmatmul.bf16.gmra.mxu0 %v3718
      %v3863 = vpop.f32.mrf.mxu0
      %v3864 = vadd.f32 0.0, %v3863
      %v3865 = vpop.f32.mrf.mxu0
      %v3866 = vadd.f32 0.0, %v3865
      %3867 = vmatmul.bf16.gmra.mxu0 %v3719
      %v3868 = vpop.f32.mrf.mxu0
      %v3869 = vadd.f32 0.0, %v3868
      %v3870 = vpop.f32.mrf.mxu0
      %v3871 = vadd.f32 0.0, %v3870
      %3872 = vdwg.mxu0
      %v3873 = vld [vmem:[#allocation3] sm:$0xff]
      %v3874 = vld [vmem:[#allocation3 + $0x8] sm:$0xff]
      %v3875 = vld [vmem:[#allocation3 + $0x10] sm:$0xff]
      %v3876 = vld [vmem:[#allocation3 + $0x18] sm:$0xff]
      %v3877 = vld [vmem:[#allocation3 + $0x20] sm:$0xff]
      %v3878 = vld [vmem:[#allocation3 + $0x28] sm:$0xff]
      %v3879 = vld [vmem:[#allocation3 + $0x30] sm:$0xff]
      %v3880 = vld [vmem:[#allocation3 + $0x38] sm:$0xff]
      %v3881 = vld [vmem:[#allocation3 + $0x40] sm:$0xff]
      %v3882 = vld [vmem:[#allocation3 + $0x48] sm:$0xff]
      %v3883 = vld [vmem:[#allocation3 + $0x50] sm:$0xff]
      %v3884 = vld [vmem:[#allocation3 + $0x58] sm:$0xff]
      %v3885 = vld [vmem:[#allocation3 + $0x60] sm:$0xff]
      %v3886 = vld [vmem:[#allocation3 + $0x68] sm:$0xff]
      %v3887 = vld [vmem:[#allocation3 + $0x70] sm:$0xff]
      %v3888 = vld [vmem:[#allocation3 + $0x78] sm:$0xff]
      %v3889 = vld [vmem:[#allocation3 + $0x80] sm:$0xff]
      %v3890 = vld [vmem:[#allocation3 + $0x88] sm:$0xff]
      %v3891 = vld [vmem:[#allocation3 + $0x90] sm:$0xff]
      %v3892 = vld [vmem:[#allocation3 + $0x98] sm:$0xff]
      %v3893 = vld [vmem:[#allocation3 + $0xa0] sm:$0xff]
      %v3894 = vld [vmem:[#allocation3 + $0xa8] sm:$0xff]
      %v3895 = vld [vmem:[#allocation3 + $0xb0] sm:$0xff]
      %v3896 = vld [vmem:[#allocation3 + $0xb8] sm:$0xff]
      %v3897 = vld [vmem:[#allocation3 + $0xc0] sm:$0xff]
      %v3898 = vld [vmem:[#allocation3 + $0xc8] sm:$0xff]
      %v3899 = vld [vmem:[#allocation3 + $0xd0] sm:$0xff]
      %v3900 = vld [vmem:[#allocation3 + $0xd8] sm:$0xff]
      %v3901 = vld [vmem:[#allocation3 + $0xe0] sm:$0xff]
      %v3902 = vld [vmem:[#allocation3 + $0xe8] sm:$0xff]
      %v3903 = vld [vmem:[#allocation3 + $0xf0] sm:$0xff]
      %v3904 = vld [vmem:[#allocation3 + $0xf8] sm:$0xff]
      %v3905 = vadd.f32 %v3873, %v3794
      %v3906 = vadd.f32 %v3874, %v3796
      %v3907 = vadd.f32 %v3875, %v3799
      %v3908 = vadd.f32 %v3876, %v3801
      %v3909 = vadd.f32 %v3877, %v3804
      %v3910 = vadd.f32 %v3878, %v3806
      %v3911 = vadd.f32 %v3879, %v3809
      %v3912 = vadd.f32 %v3880, %v3811
      %v3913 = vadd.f32 %v3881, %v3814
      %v3914 = vadd.f32 %v3882, %v3816
      %v3915 = vadd.f32 %v3883, %v3819
      %v3916 = vadd.f32 %v3884, %v3821
      %v3917 = vadd.f32 %v3885, %v3824
      %v3918 = vadd.f32 %v3886, %v3826
      %v3919 = vadd.f32 %v3887, %v3829
      %v3920 = vadd.f32 %v3888, %v3831
      %v3921 = vadd.f32 %v3889, %v3834
      %v3922 = vadd.f32 %v3890, %v3836
      %v3923 = vadd.f32 %v3891, %v3839
      %v3924 = vadd.f32 %v3892, %v3841
      %v3925 = vadd.f32 %v3893, %v3844
      %v3926 = vadd.f32 %v3894, %v3846
      %v3927 = vadd.f32 %v3895, %v3849
      %v3928 = vadd.f32 %v3896, %v3851
      %v3929 = vadd.f32 %v3897, %v3854
      %v3930 = vadd.f32 %v3898, %v3856
      %v3931 = vadd.f32 %v3899, %v3859
      %v3932 = vadd.f32 %v3900, %v3861
      %v3933 = vadd.f32 %v3901, %v3864
      %v3934 = vadd.f32 %v3902, %v3866
      %v3935 = vadd.f32 %v3903, %v3869
      %v3936 = vadd.f32 %v3904, %v3871
      %3937 = vst [vmem:[#allocation3] sm:$0xff] %v3905
      %3938 = vst [vmem:[#allocation3 + $0x8] sm:$0xff] %v3906
      %3939 = vst [vmem:[#allocation3 + $0x10] sm:$0xff] %v3907
      %3940 = vst [vmem:[#allocation3 + $0x18] sm:$0xff] %v3908
      %3941 = vst [vmem:[#allocation3 + $0x20] sm:$0xff] %v3909
      %3942 = vst [vmem:[#allocation3 + $0x28] sm:$0xff] %v3910
      %3943 = vst [vmem:[#allocation3 + $0x30] sm:$0xff] %v3911
      %3944 = vst [vmem:[#allocation3 + $0x38] sm:$0xff] %v3912
      %3945 = vst [vmem:[#allocation3 + $0x40] sm:$0xff] %v3913
      %3946 = vst [vmem:[#allocation3 + $0x48] sm:$0xff] %v3914
      %3947 = vst [vmem:[#allocation3 + $0x50] sm:$0xff] %v3915
      %3948 = vst [vmem:[#allocation3 + $0x58] sm:$0xff] %v3916
      %3949 = vst [vmem:[#allocation3 + $0x60] sm:$0xff] %v3917
      %3950 = vst [vmem:[#allocation3 + $0x68] sm:$0xff] %v3918
      %3951 = vst [vmem:[#allocation3 + $0x70] sm:$0xff] %v3919
      %3952 = vst [vmem:[#allocation3 + $0x78] sm:$0xff] %v3920
      %3953 = vst [vmem:[#allocation3 + $0x80] sm:$0xff] %v3921
      %3954 = vst [vmem:[#allocation3 + $0x88] sm:$0xff] %v3922
      %3955 = vst [vmem:[#allocation3 + $0x90] sm:$0xff] %v3923
      %3956 = vst [vmem:[#allocation3 + $0x98] sm:$0xff] %v3924
      %3957 = vst [vmem:[#allocation3 + $0xa0] sm:$0xff] %v3925
      %3958 = vst [vmem:[#allocation3 + $0xa8] sm:$0xff] %v3926
      %3959 = vst [vmem:[#allocation3 + $0xb0] sm:$0xff] %v3927
      %3960 = vst [vmem:[#allocation3 + $0xb8] sm:$0xff] %v3928
      %3961 = vst [vmem:[#allocation3 + $0xc0] sm:$0xff] %v3929
      %3962 = vst [vmem:[#allocation3 + $0xc8] sm:$0xff] %v3930
      %3963 = vst [vmem:[#allocation3 + $0xd0] sm:$0xff] %v3931
      %3964 = vst [vmem:[#allocation3 + $0xd8] sm:$0xff] %v3932
      %3965 = vst [vmem:[#allocation3 + $0xe0] sm:$0xff] %v3933
      %3966 = vst [vmem:[#allocation3 + $0xe8] sm:$0xff] %v3934
      %3967 = vst [vmem:[#allocation3 + $0xf0] sm:$0xff] %v3935
      %3968 = vst [vmem:[#allocation3 + $0xf8] sm:$0xff] %v3936
      %s3969 = scalar_lea.vmem [#allocation2], 160
      %v3970 = vld [vmem:[%s3969] sm:$0xf]
      %v3971 = vld [vmem:[%s3969 + $0x4] sm:$0xf]
      %v3972 = vld [vmem:[%s3969 + $0x8] sm:$0xf]
      %v3973 = vld [vmem:[%s3969 + $0xc] sm:$0xf]
      %v3974 = vld [vmem:[%s3969 + $0x10] sm:$0xf]
      %v3975 = vld [vmem:[%s3969 + $0x14] sm:$0xf]
      %v3976 = vld [vmem:[%s3969 + $0x18] sm:$0xf]
      %v3977 = vld [vmem:[%s3969 + $0x1c] sm:$0xf]
      %v3978 = vld [vmem:[%s3969 + $0x20] sm:$0xf]
      %v3979 = vld [vmem:[%s3969 + $0x24] sm:$0xf]
      %v3980 = vld [vmem:[%s3969 + $0x28] sm:$0xf]
      %v3981 = vld [vmem:[%s3969 + $0x2c] sm:$0xf]
      %v3982 = vld [vmem:[%s3969 + $0x30] sm:$0xf]
      %v3983 = vld [vmem:[%s3969 + $0x34] sm:$0xf]
      %v3984 = vld [vmem:[%s3969 + $0x38] sm:$0xf]
      %v3985 = vld [vmem:[%s3969 + $0x3c] sm:$0xf]
      %v3986 = vld [vmem:[%s3969 + $0x40] sm:$0xf]
      %v3987 = vld [vmem:[%s3969 + $0x44] sm:$0xf]
      %v3988 = vld [vmem:[%s3969 + $0x48] sm:$0xf]
      %v3989 = vld [vmem:[%s3969 + $0x4c] sm:$0xf]
      %v3990 = vld [vmem:[%s3969 + $0x50] sm:$0xf]
      %v3991 = vld [vmem:[%s3969 + $0x54] sm:$0xf]
      %v3992 = vld [vmem:[%s3969 + $0x58] sm:$0xf]
      %v3993 = vld [vmem:[%s3969 + $0x5c] sm:$0xf]
      %v3994 = vld [vmem:[%s3969 + $0x60] sm:$0xf]
      %v3995 = vld [vmem:[%s3969 + $0x64] sm:$0xf]
      %v3996 = vld [vmem:[%s3969 + $0x68] sm:$0xf]
      %v3997 = vld [vmem:[%s3969 + $0x6c] sm:$0xf]
      %v3998 = vld [vmem:[%s3969 + $0x70] sm:$0xf]
      %v3999 = vld [vmem:[%s3969 + $0x74] sm:$0xf]
      %v4000 = vld [vmem:[%s3969 + $0x78] sm:$0xf]
      %v4001 = vld [vmem:[%s3969 + $0x7c] sm:$0xf]
      %s4002 = scalar_lea.vmem %s2, 448
      %v4003 = vld [vmem:[%s4002] sm:$0xf]
      %v4004 = vld [vmem:[%s4002 + $0x4] sm:$0xf]
      %v4005 = vld [vmem:[%s4002 + $0x8] sm:$0xf]
      %v4006 = vld [vmem:[%s4002 + $0xc] sm:$0xf]
      %v4007 = vld [vmem:[%s4002 + $0x10] sm:$0xf]
      %v4008 = vld [vmem:[%s4002 + $0x14] sm:$0xf]
      %v4009 = vld [vmem:[%s4002 + $0x18] sm:$0xf]
      %v4010 = vld [vmem:[%s4002 + $0x1c] sm:$0xf]
      %v4011 = vld [vmem:[%s4002 + $0x20] sm:$0xf]
      %v4012 = vld [vmem:[%s4002 + $0x24] sm:$0xf]
      %v4013 = vld [vmem:[%s4002 + $0x28] sm:$0xf]
      %v4014 = vld [vmem:[%s4002 + $0x2c] sm:$0xf]
      %v4015 = vld [vmem:[%s4002 + $0x30] sm:$0xf]
      %v4016 = vld [vmem:[%s4002 + $0x34] sm:$0xf]
      %v4017 = vld [vmem:[%s4002 + $0x38] sm:$0xf]
      %v4018 = vld [vmem:[%s4002 + $0x3c] sm:$0xf]
      %v4051 = vunpack.c.l.b16 %v3970
      %v4052 = vunpack.c.l.b16 %v3971
      %v4053 = vunpack.c.l.b16 %v3972
      %v4054 = vunpack.c.l.b16 %v3973
      %v4055 = vunpack.c.l.b16 %v3974
      %v4056 = vunpack.c.l.b16 %v3975
      %v4057 = vunpack.c.l.b16 %v3976
      %v4058 = vunpack.c.l.b16 %v3977
      %v4059 = vunpack.c.l.b16 %v3978
      %v4060 = vunpack.c.l.b16 %v3979
      %v4061 = vunpack.c.l.b16 %v3980
      %v4062 = vunpack.c.l.b16 %v3981
      %v4063 = vunpack.c.l.b16 %v3982
      %v4064 = vunpack.c.l.b16 %v3983
      %v4065 = vunpack.c.l.b16 %v3984
      %v4066 = vunpack.c.l.b16 %v3985
      %v4067 = vunpack.c.l.b16 %v3986
      %v4068 = vunpack.c.l.b16 %v3987
      %v4069 = vunpack.c.l.b16 %v3988
      %v4070 = vunpack.c.l.b16 %v3989
      %v4071 = vunpack.c.l.b16 %v3990
      %v4072 = vunpack.c.l.b16 %v3991
      %v4073 = vunpack.c.l.b16 %v3992
      %v4074 = vunpack.c.l.b16 %v3993
      %v4075 = vunpack.c.l.b16 %v3994
      %v4076 = vunpack.c.l.b16 %v3995
      %v4077 = vunpack.c.l.b16 %v3996
      %v4078 = vunpack.c.l.b16 %v3997
      %v4079 = vunpack.c.l.b16 %v3998
      %v4080 = vunpack.c.l.b16 %v3999
      %v4081 = vunpack.c.l.b16 %v4000
      %v4082 = vunpack.c.l.b16 %v4001
      %v4083 = vpack.c.b16 %v4052, %v4051
      %v4084 = vpack.c.b16 %v4054, %v4053
      %v4085 = vpack.c.b16 %v4056, %v4055
      %v4086 = vpack.c.b16 %v4058, %v4057
      %v4087 = vpack.c.b16 %v4060, %v4059
      %v4088 = vpack.c.b16 %v4062, %v4061
      %v4089 = vpack.c.b16 %v4064, %v4063
      %v4090 = vpack.c.b16 %v4066, %v4065
      %v4091 = vpack.c.b16 %v4068, %v4067
      %v4092 = vpack.c.b16 %v4070, %v4069
      %v4093 = vpack.c.b16 %v4072, %v4071
      %v4094 = vpack.c.b16 %v4074, %v4073
      %v4095 = vpack.c.b16 %v4076, %v4075
      %v4096 = vpack.c.b16 %v4078, %v4077
      %v4097 = vpack.c.b16 %v4080, %v4079
      %v4098 = vpack.c.b16 %v4082, %v4081
      %v4131 = vunpack.c.l.b16 %v4003
      %v4132 = vunpack.c.l.b16 %v4004
      %v4133 = vunpack.c.l.b16 %v4005
      %v4134 = vunpack.c.l.b16 %v4006
      %v4135 = vunpack.c.l.b16 %v4007
      %v4136 = vunpack.c.l.b16 %v4008
      %v4137 = vunpack.c.l.b16 %v4009
      %v4138 = vunpack.c.l.b16 %v4010
      %v4139 = vunpack.c.l.b16 %v4011
      %v4140 = vunpack.c.l.b16 %v4012
      %v4141 = vunpack.c.l.b16 %v4013
      %v4142 = vunpack.c.l.b16 %v4014
      %v4143 = vunpack.c.l.b16 %v4015
      %v4144 = vunpack.c.l.b16 %v4016
      %v4145 = vunpack.c.l.b16 %v4017
      %v4146 = vunpack.c.l.b16 %v4018
      %v4147 = vpack.c.b16 %v4132, %v4131
      %v4148 = vpack.c.b16 %v4134, %v4133
      %v4149 = vpack.c.b16 %v4136, %v4135
      %v4150 = vpack.c.b16 %v4138, %v4137
      %v4151 = vpack.c.b16 %v4140, %v4139
      %v4152 = vpack.c.b16 %v4142, %v4141
      %v4153 = vpack.c.b16 %v4144, %v4143
      %v4154 = vpack.c.b16 %v4146, %v4145
      %4163 = vmatpush.bf16.msra.mxu0 %v4154
      %4164 = vmatpush.bf16.msra.mxu0 %v4153
      %4165 = vmatpush.bf16.msra.mxu0 %v4152
      %4166 = vmatpush.bf16.msra.mxu0 %v4151
      %4167 = vmatpush.bf16.msra.mxu0 %v4150
      %4168 = vmatpush.bf16.msra.mxu0 %v4149
      %4169 = vmatpush.bf16.msra.mxu0 %v4148
      %4170 = vmatpush.bf16.msra.mxu0 %v4147
      %4171 = vmatmul.bf16.gmra.mxu0 %v4083
      %v4172 = vpop.f32.mrf.mxu0
      %v4173 = vadd.f32 0.0, %v4172
      %v4174 = vpop.f32.mrf.mxu0
      %v4175 = vadd.f32 0.0, %v4174
      %4176 = vmatmul.bf16.gmra.mxu0 %v4084
      %v4177 = vpop.f32.mrf.mxu0
      %v4178 = vadd.f32 0.0, %v4177
      %v4179 = vpop.f32.mrf.mxu0
      %v4180 = vadd.f32 0.0, %v4179
      %4181 = vmatmul.bf16.gmra.mxu0 %v4085
      %v4182 = vpop.f32.mrf.mxu0
      %v4183 = vadd.f32 0.0, %v4182
      %v4184 = vpop.f32.mrf.mxu0
      %v4185 = vadd.f32 0.0, %v4184
      %4186 = vmatmul.bf16.gmra.mxu0 %v4086
      %v4187 = vpop.f32.mrf.mxu0
      %v4188 = vadd.f32 0.0, %v4187
      %v4189 = vpop.f32.mrf.mxu0
      %v4190 = vadd.f32 0.0, %v4189
      %4191 = vmatmul.bf16.gmra.mxu0 %v4087
      %v4192 = vpop.f32.mrf.mxu0
      %v4193 = vadd.f32 0.0, %v4192
      %v4194 = vpop.f32.mrf.mxu0
      %v4195 = vadd.f32 0.0, %v4194
      %4196 = vmatmul.bf16.gmra.mxu0 %v4088
      %v4197 = vpop.f32.mrf.mxu0
      %v4198 = vadd.f32 0.0, %v4197
      %v4199 = vpop.f32.mrf.mxu0
      %v4200 = vadd.f32 0.0, %v4199
      %4201 = vmatmul.bf16.gmra.mxu0 %v4089
      %v4202 = vpop.f32.mrf.mxu0
      %v4203 = vadd.f32 0.0, %v4202
      %v4204 = vpop.f32.mrf.mxu0
      %v4205 = vadd.f32 0.0, %v4204
      %4206 = vmatmul.bf16.gmra.mxu0 %v4090
      %v4207 = vpop.f32.mrf.mxu0
      %v4208 = vadd.f32 0.0, %v4207
      %v4209 = vpop.f32.mrf.mxu0
      %v4210 = vadd.f32 0.0, %v4209
      %4211 = vmatmul.bf16.gmra.mxu0 %v4091
      %v4212 = vpop.f32.mrf.mxu0
      %v4213 = vadd.f32 0.0, %v4212
      %v4214 = vpop.f32.mrf.mxu0
      %v4215 = vadd.f32 0.0, %v4214
      %4216 = vmatmul.bf16.gmra.mxu0 %v4092
      %v4217 = vpop.f32.mrf.mxu0
      %v4218 = vadd.f32 0.0, %v4217
      %v4219 = vpop.f32.mrf.mxu0
      %v4220 = vadd.f32 0.0, %v4219
      %4221 = vmatmul.bf16.gmra.mxu0 %v4093
      %v4222 = vpop.f32.mrf.mxu0
      %v4223 = vadd.f32 0.0, %v4222
      %v4224 = vpop.f32.mrf.mxu0
      %v4225 = vadd.f32 0.0, %v4224
      %4226 = vmatmul.bf16.gmra.mxu0 %v4094
      %v4227 = vpop.f32.mrf.mxu0
      %v4228 = vadd.f32 0.0, %v4227
      %v4229 = vpop.f32.mrf.mxu0
      %v4230 = vadd.f32 0.0, %v4229
      %4231 = vmatmul.bf16.gmra.mxu0 %v4095
      %v4232 = vpop.f32.mrf.mxu0
      %v4233 = vadd.f32 0.0, %v4232
      %v4234 = vpop.f32.mrf.mxu0
      %v4235 = vadd.f32 0.0, %v4234
      %4236 = vmatmul.bf16.gmra.mxu0 %v4096
      %v4237 = vpop.f32.mrf.mxu0
      %v4238 = vadd.f32 0.0, %v4237
      %v4239 = vpop.f32.mrf.mxu0
      %v4240 = vadd.f32 0.0, %v4239
      %4241 = vmatmul.bf16.gmra.mxu0 %v4097
      %v4242 = vpop.f32.mrf.mxu0
      %v4243 = vadd.f32 0.0, %v4242
      %v4244 = vpop.f32.mrf.mxu0
      %v4245 = vadd.f32 0.0, %v4244
      %4246 = vmatmul.bf16.gmra.mxu0 %v4098
      %v4247 = vpop.f32.mrf.mxu0
      %v4248 = vadd.f32 0.0, %v4247
      %v4249 = vpop.f32.mrf.mxu0
      %v4250 = vadd.f32 0.0, %v4249
      %4251 = vdwg.mxu0
      %v4252 = vld [vmem:[#allocation3] sm:$0xff]
      %v4253 = vld [vmem:[#allocation3 + $0x8] sm:$0xff]
      %v4254 = vld [vmem:[#allocation3 + $0x10] sm:$0xff]
      %v4255 = vld [vmem:[#allocation3 + $0x18] sm:$0xff]
      %v4256 = vld [vmem:[#allocation3 + $0x20] sm:$0xff]
      %v4257 = vld [vmem:[#allocation3 + $0x28] sm:$0xff]
      %v4258 = vld [vmem:[#allocation3 + $0x30] sm:$0xff]
      %v4259 = vld [vmem:[#allocation3 + $0x38] sm:$0xff]
      %v4260 = vld [vmem:[#allocation3 + $0x40] sm:$0xff]
      %v4261 = vld [vmem:[#allocation3 + $0x48] sm:$0xff]
      %v4262 = vld [vmem:[#allocation3 + $0x50] sm:$0xff]
      %v4263 = vld [vmem:[#allocation3 + $0x58] sm:$0xff]
      %v4264 = vld [vmem:[#allocation3 + $0x60] sm:$0xff]
      %v4265 = vld [vmem:[#allocation3 + $0x68] sm:$0xff]
      %v4266 = vld [vmem:[#allocation3 + $0x70] sm:$0xff]
      %v4267 = vld [vmem:[#allocation3 + $0x78] sm:$0xff]
      %v4268 = vld [vmem:[#allocation3 + $0x80] sm:$0xff]
      %v4269 = vld [vmem:[#allocation3 + $0x88] sm:$0xff]
      %v4270 = vld [vmem:[#allocation3 + $0x90] sm:$0xff]
      %v4271 = vld [vmem:[#allocation3 + $0x98] sm:$0xff]
      %v4272 = vld [vmem:[#allocation3 + $0xa0] sm:$0xff]
      %v4273 = vld [vmem:[#allocation3 + $0xa8] sm:$0xff]
      %v4274 = vld [vmem:[#allocation3 + $0xb0] sm:$0xff]
      %v4275 = vld [vmem:[#allocation3 + $0xb8] sm:$0xff]
      %v4276 = vld [vmem:[#allocation3 + $0xc0] sm:$0xff]
      %v4277 = vld [vmem:[#allocation3 + $0xc8] sm:$0xff]
      %v4278 = vld [vmem:[#allocation3 + $0xd0] sm:$0xff]
      %v4279 = vld [vmem:[#allocation3 + $0xd8] sm:$0xff]
      %v4280 = vld [vmem:[#allocation3 + $0xe0] sm:$0xff]
      %v4281 = vld [vmem:[#allocation3 + $0xe8] sm:$0xff]
      %v4282 = vld [vmem:[#allocation3 + $0xf0] sm:$0xff]
      %v4283 = vld [vmem:[#allocation3 + $0xf8] sm:$0xff]
      %v4284 = vadd.f32 %v4252, %v4173
      %v4285 = vadd.f32 %v4253, %v4175
      %v4286 = vadd.f32 %v4254, %v4178
      %v4287 = vadd.f32 %v4255, %v4180
      %v4288 = vadd.f32 %v4256, %v4183
      %v4289 = vadd.f32 %v4257, %v4185
      %v4290 = vadd.f32 %v4258, %v4188
      %v4291 = vadd.f32 %v4259, %v4190
      %v4292 = vadd.f32 %v4260, %v4193
      %v4293 = vadd.f32 %v4261, %v4195
      %v4294 = vadd.f32 %v4262, %v4198
      %v4295 = vadd.f32 %v4263, %v4200
      %v4296 = vadd.f32 %v4264, %v4203
      %v4297 = vadd.f32 %v4265, %v4205
      %v4298 = vadd.f32 %v4266, %v4208
      %v4299 = vadd.f32 %v4267, %v4210
      %v4300 = vadd.f32 %v4268, %v4213
      %v4301 = vadd.f32 %v4269, %v4215
      %v4302 = vadd.f32 %v4270, %v4218
      %v4303 = vadd.f32 %v4271, %v4220
      %v4304 = vadd.f32 %v4272, %v4223
      %v4305 = vadd.f32 %v4273, %v4225
      %v4306 = vadd.f32 %v4274, %v4228
      %v4307 = vadd.f32 %v4275, %v4230
      %v4308 = vadd.f32 %v4276, %v4233
      %v4309 = vadd.f32 %v4277, %v4235
      %v4310 = vadd.f32 %v4278, %v4238
      %v4311 = vadd.f32 %v4279, %v4240
      %v4312 = vadd.f32 %v4280, %v4243
      %v4313 = vadd.f32 %v4281, %v4245
      %v4314 = vadd.f32 %v4282, %v4248
      %v4315 = vadd.f32 %v4283, %v4250
      %4316 = vst [vmem:[#allocation3] sm:$0xff] %v4284
      %4317 = vst [vmem:[#allocation3 + $0x8] sm:$0xff] %v4285
      %4318 = vst [vmem:[#allocation3 + $0x10] sm:$0xff] %v4286
      %4319 = vst [vmem:[#allocation3 + $0x18] sm:$0xff] %v4287
      %4320 = vst [vmem:[#allocation3 + $0x20] sm:$0xff] %v4288
      %4321 = vst [vmem:[#allocation3 + $0x28] sm:$0xff] %v4289
      %4322 = vst [vmem:[#allocation3 + $0x30] sm:$0xff] %v4290
      %4323 = vst [vmem:[#allocation3 + $0x38] sm:$0xff] %v4291
      %4324 = vst [vmem:[#allocation3 + $0x40] sm:$0xff] %v4292
      %4325 = vst [vmem:[#allocation3 + $0x48] sm:$0xff] %v4293
      %4326 = vst [vmem:[#allocation3 + $0x50] sm:$0xff] %v4294
      %4327 = vst [vmem:[#allocation3 + $0x58] sm:$0xff] %v4295
      %4328 = vst [vmem:[#allocation3 + $0x60] sm:$0xff] %v4296
      %4329 = vst [vmem:[#allocation3 + $0x68] sm:$0xff] %v4297
      %4330 = vst [vmem:[#allocation3 + $0x70] sm:$0xff] %v4298
      %4331 = vst [vmem:[#allocation3 + $0x78] sm:$0xff] %v4299
      %4332 = vst [vmem:[#allocation3 + $0x80] sm:$0xff] %v4300
      %4333 = vst [vmem:[#allocation3 + $0x88] sm:$0xff] %v4301
      %4334 = vst [vmem:[#allocation3 + $0x90] sm:$0xff] %v4302
      %4335 = vst [vmem:[#allocation3 + $0x98] sm:$0xff] %v4303
      %4336 = vst [vmem:[#allocation3 + $0xa0] sm:$0xff] %v4304
      %4337 = vst [vmem:[#allocation3 + $0xa8] sm:$0xff] %v4305
      %4338 = vst [vmem:[#allocation3 + $0xb0] sm:$0xff] %v4306
      %4339 = vst [vmem:[#allocation3 + $0xb8] sm:$0xff] %v4307
      %4340 = vst [vmem:[#allocation3 + $0xc0] sm:$0xff] %v4308
      %4341 = vst [vmem:[#allocation3 + $0xc8] sm:$0xff] %v4309
      %4342 = vst [vmem:[#allocation3 + $0xd0] sm:$0xff] %v4310
      %4343 = vst [vmem:[#allocation3 + $0xd8] sm:$0xff] %v4311
      %4344 = vst [vmem:[#allocation3 + $0xe0] sm:$0xff] %v4312
      %4345 = vst [vmem:[#allocation3 + $0xe8] sm:$0xff] %v4313
      %4346 = vst [vmem:[#allocation3 + $0xf0] sm:$0xff] %v4314
      %4347 = vst [vmem:[#allocation3 + $0xf8] sm:$0xff] %v4315
      %s4348 = scalar_lea.vmem [#allocation2], 304
      %v4349 = vld [vmem:[%s4348] sm:$0xf]
      %v4350 = vld [vmem:[%s4348 + $0x4] sm:$0xf]
      %v4351 = vld [vmem:[%s4348 + $0x8] sm:$0xf]
      %v4352 = vld [vmem:[%s4348 + $0xc] sm:$0xf]
      %v4353 = vld [vmem:[%s4348 + $0x10] sm:$0xf]
      %v4354 = vld [vmem:[%s4348 + $0x14] sm:$0xf]
      %v4355 = vld [vmem:[%s4348 + $0x18] sm:$0xf]
      %v4356 = vld [vmem:[%s4348 + $0x1c] sm:$0xf]
      %v4357 = vld [vmem:[%s4348 + $0x20] sm:$0xf]
      %v4358 = vld [vmem:[%s4348 + $0x24] sm:$0xf]
      %v4359 = vld [vmem:[%s4348 + $0x28] sm:$0xf]
      %v4360 = vld [vmem:[%s4348 + $0x2c] sm:$0xf]
      %v4361 = vld [vmem:[%s4348 + $0x30] sm:$0xf]
      %v4362 = vld [vmem:[%s4348 + $0x34] sm:$0xf]
      %v4363 = vld [vmem:[%s4348 + $0x38] sm:$0xf]
      %v4364 = vld [vmem:[%s4348 + $0x3c] sm:$0xf]
      %v4365 = vld [vmem:[%s4348 + $0x40] sm:$0xf]
      %v4366 = vld [vmem:[%s4348 + $0x44] sm:$0xf]
      %v4367 = vld [vmem:[%s4348 + $0x48] sm:$0xf]
      %v4368 = vld [vmem:[%s4348 + $0x4c] sm:$0xf]
      %v4369 = vld [vmem:[%s4348 + $0x50] sm:$0xf]
      %v4370 = vld [vmem:[%s4348 + $0x54] sm:$0xf]
      %v4371 = vld [vmem:[%s4348 + $0x58] sm:$0xf]
      %v4372 = vld [vmem:[%s4348 + $0x5c] sm:$0xf]
      %v4373 = vld [vmem:[%s4348 + $0x60] sm:$0xf]
      %v4374 = vld [vmem:[%s4348 + $0x64] sm:$0xf]
      %v4375 = vld [vmem:[%s4348 + $0x68] sm:$0xf]
      %v4376 = vld [vmem:[%s4348 + $0x6c] sm:$0xf]
      %v4377 = vld [vmem:[%s4348 + $0x70] sm:$0xf]
      %v4378 = vld [vmem:[%s4348 + $0x74] sm:$0xf]
      %v4379 = vld [vmem:[%s4348 + $0x78] sm:$0xf]
      %v4380 = vld [vmem:[%s4348 + $0x7c] sm:$0xf]
      %s4381 = scalar_lea.vmem %s2, 512
      %v4382 = vld [vmem:[%s4381] sm:$0xf]
      %v4383 = vld [vmem:[%s4381 + $0x4] sm:$0xf]
      %v4384 = vld [vmem:[%s4381 + $0x8] sm:$0xf]
      %v4385 = vld [vmem:[%s4381 + $0xc] sm:$0xf]
      %v4386 = vld [vmem:[%s4381 + $0x10] sm:$0xf]
      %v4387 = vld [vmem:[%s4381 + $0x14] sm:$0xf]
      %v4388 = vld [vmem:[%s4381 + $0x18] sm:$0xf]
      %v4389 = vld [vmem:[%s4381 + $0x1c] sm:$0xf]
      %v4390 = vld [vmem:[%s4381 + $0x20] sm:$0xf]
      %v4391 = vld [vmem:[%s4381 + $0x24] sm:$0xf]
      %v4392 = vld [vmem:[%s4381 + $0x28] sm:$0xf]
      %v4393 = vld [vmem:[%s4381 + $0x2c] sm:$0xf]
      %v4394 = vld [vmem:[%s4381 + $0x30] sm:$0xf]
      %v4395 = vld [vmem:[%s4381 + $0x34] sm:$0xf]
      %v4396 = vld [vmem:[%s4381 + $0x38] sm:$0xf]
      %v4397 = vld [vmem:[%s4381 + $0x3c] sm:$0xf]
      %v4430 = vunpack.c.l.b16 %v4349
      %v4431 = vunpack.c.l.b16 %v4350
      %v4432 = vunpack.c.l.b16 %v4351
      %v4433 = vunpack.c.l.b16 %v4352
      %v4434 = vunpack.c.l.b16 %v4353
      %v4435 = vunpack.c.l.b16 %v4354
      %v4436 = vunpack.c.l.b16 %v4355
      %v4437 = vunpack.c.l.b16 %v4356
      %v4438 = vunpack.c.l.b16 %v4357
      %v4439 = vunpack.c.l.b16 %v4358
      %v4440 = vunpack.c.l.b16 %v4359
      %v4441 = vunpack.c.l.b16 %v4360
      %v4442 = vunpack.c.l.b16 %v4361
      %v4443 = vunpack.c.l.b16 %v4362
      %v4444 = vunpack.c.l.b16 %v4363
      %v4445 = vunpack.c.l.b16 %v4364
      %v4446 = vunpack.c.l.b16 %v4365
      %v4447 = vunpack.c.l.b16 %v4366
      %v4448 = vunpack.c.l.b16 %v4367
      %v4449 = vunpack.c.l.b16 %v4368
      %v4450 = vunpack.c.l.b16 %v4369
      %v4451 = vunpack.c.l.b16 %v4370
      %v4452 = vunpack.c.l.b16 %v4371
      %v4453 = vunpack.c.l.b16 %v4372
      %v4454 = vunpack.c.l.b16 %v4373
      %v4455 = vunpack.c.l.b16 %v4374
      %v4456 = vunpack.c.l.b16 %v4375
      %v4457 = vunpack.c.l.b16 %v4376
      %v4458 = vunpack.c.l.b16 %v4377
      %v4459 = vunpack.c.l.b16 %v4378
      %v4460 = vunpack.c.l.b16 %v4379
      %v4461 = vunpack.c.l.b16 %v4380
      %v4462 = vpack.c.b16 %v4431, %v4430
      %v4463 = vpack.c.b16 %v4433, %v4432
      %v4464 = vpack.c.b16 %v4435, %v4434
      %v4465 = vpack.c.b16 %v4437, %v4436
      %v4466 = vpack.c.b16 %v4439, %v4438
      %v4467 = vpack.c.b16 %v4441, %v4440
      %v4468 = vpack.c.b16 %v4443, %v4442
      %v4469 = vpack.c.b16 %v4445, %v4444
      %v4470 = vpack.c.b16 %v4447, %v4446
      %v4471 = vpack.c.b16 %v4449, %v4448
      %v4472 = vpack.c.b16 %v4451, %v4450
      %v4473 = vpack.c.b16 %v4453, %v4452
      %v4474 = vpack.c.b16 %v4455, %v4454
      %v4475 = vpack.c.b16 %v4457, %v4456
      %v4476 = vpack.c.b16 %v4459, %v4458
      %v4477 = vpack.c.b16 %v4461, %v4460
      %v4510 = vunpack.c.l.b16 %v4382
      %v4511 = vunpack.c.l.b16 %v4383
      %v4512 = vunpack.c.l.b16 %v4384
      %v4513 = vunpack.c.l.b16 %v4385
      %v4514 = vunpack.c.l.b16 %v4386
      %v4515 = vunpack.c.l.b16 %v4387
      %v4516 = vunpack.c.l.b16 %v4388
      %v4517 = vunpack.c.l.b16 %v4389
      %v4518 = vunpack.c.l.b16 %v4390
      %v4519 = vunpack.c.l.b16 %v4391
      %v4520 = vunpack.c.l.b16 %v4392
      %v4521 = vunpack.c.l.b16 %v4393
      %v4522 = vunpack.c.l.b16 %v4394
      %v4523 = vunpack.c.l.b16 %v4395
      %v4524 = vunpack.c.l.b16 %v4396
      %v4525 = vunpack.c.l.b16 %v4397
      %v4526 = vpack.c.b16 %v4511, %v4510
      %v4527 = vpack.c.b16 %v4513, %v4512
      %v4528 = vpack.c.b16 %v4515, %v4514
      %v4529 = vpack.c.b16 %v4517, %v4516
      %v4530 = vpack.c.b16 %v4519, %v4518
      %v4531 = vpack.c.b16 %v4521, %v4520
      %v4532 = vpack.c.b16 %v4523, %v4522
      %v4533 = vpack.c.b16 %v4525, %v4524
      %4542 = vmatpush.bf16.msra.mxu0 %v4533
      %4543 = vmatpush.bf16.msra.mxu0 %v4532
      %4544 = vmatpush.bf16.msra.mxu0 %v4531
      %4545 = vmatpush.bf16.msra.mxu0 %v4530
      %4546 = vmatpush.bf16.msra.mxu0 %v4529
      %4547 = vmatpush.bf16.msra.mxu0 %v4528
      %4548 = vmatpush.bf16.msra.mxu0 %v4527
      %4549 = vmatpush.bf16.msra.mxu0 %v4526
      %4550 = vmatmul.bf16.gmra.mxu0 %v4462
      %v4551 = vpop.f32.mrf.mxu0
      %v4552 = vadd.f32 0.0, %v4551
      %v4553 = vpop.f32.mrf.mxu0
      %v4554 = vadd.f32 0.0, %v4553
      %4555 = vmatmul.bf16.gmra.mxu0 %v4463
      %v4556 = vpop.f32.mrf.mxu0
      %v4557 = vadd.f32 0.0, %v4556
      %v4558 = vpop.f32.mrf.mxu0
      %v4559 = vadd.f32 0.0, %v4558
      %4560 = vmatmul.bf16.gmra.mxu0 %v4464
      %v4561 = vpop.f32.mrf.mxu0
      %v4562 = vadd.f32 0.0, %v4561
      %v4563 = vpop.f32.mrf.mxu0
      %v4564 = vadd.f32 0.0, %v4563
      %4565 = vmatmul.bf16.gmra.mxu0 %v4465
      %v4566 = vpop.f32.mrf.mxu0
      %v4567 = vadd.f32 0.0, %v4566
      %v4568 = vpop.f32.mrf.mxu0
      %v4569 = vadd.f32 0.0, %v4568
      %4570 = vmatmul.bf16.gmra.mxu0 %v4466
      %v4571 = vpop.f32.mrf.mxu0
      %v4572 = vadd.f32 0.0, %v4571
      %v4573 = vpop.f32.mrf.mxu0
      %v4574 = vadd.f32 0.0, %v4573
      %4575 = vmatmul.bf16.gmra.mxu0 %v4467
      %v4576 = vpop.f32.mrf.mxu0
      %v4577 = vadd.f32 0.0, %v4576
      %v4578 = vpop.f32.mrf.mxu0
      %v4579 = vadd.f32 0.0, %v4578
      %4580 = vmatmul.bf16.gmra.mxu0 %v4468
      %v4581 = vpop.f32.mrf.mxu0
      %v4582 = vadd.f32 0.0, %v4581
      %v4583 = vpop.f32.mrf.mxu0
      %v4584 = vadd.f32 0.0, %v4583
      %4585 = vmatmul.bf16.gmra.mxu0 %v4469
      %v4586 = vpop.f32.mrf.mxu0
      %v4587 = vadd.f32 0.0, %v4586
      %v4588 = vpop.f32.mrf.mxu0
      %v4589 = vadd.f32 0.0, %v4588
      %4590 = vmatmul.bf16.gmra.mxu0 %v4470
      %v4591 = vpop.f32.mrf.mxu0
      %v4592 = vadd.f32 0.0, %v4591
      %v4593 = vpop.f32.mrf.mxu0
      %v4594 = vadd.f32 0.0, %v4593
      %4595 = vmatmul.bf16.gmra.mxu0 %v4471
      %v4596 = vpop.f32.mrf.mxu0
      %v4597 = vadd.f32 0.0, %v4596
      %v4598 = vpop.f32.mrf.mxu0
      %v4599 = vadd.f32 0.0, %v4598
      %4600 = vmatmul.bf16.gmra.mxu0 %v4472
      %v4601 = vpop.f32.mrf.mxu0
      %v4602 = vadd.f32 0.0, %v4601
      %v4603 = vpop.f32.mrf.mxu0
      %v4604 = vadd.f32 0.0, %v4603
      %4605 = vmatmul.bf16.gmra.mxu0 %v4473
      %v4606 = vpop.f32.mrf.mxu0
      %v4607 = vadd.f32 0.0, %v4606
      %v4608 = vpop.f32.mrf.mxu0
      %v4609 = vadd.f32 0.0, %v4608
      %4610 = vmatmul.bf16.gmra.mxu0 %v4474
      %v4611 = vpop.f32.mrf.mxu0
      %v4612 = vadd.f32 0.0, %v4611
      %v4613 = vpop.f32.mrf.mxu0
      %v4614 = vadd.f32 0.0, %v4613
      %4615 = vmatmul.bf16.gmra.mxu0 %v4475
      %v4616 = vpop.f32.mrf.mxu0
      %v4617 = vadd.f32 0.0, %v4616
      %v4618 = vpop.f32.mrf.mxu0
      %v4619 = vadd.f32 0.0, %v4618
      %4620 = vmatmul.bf16.gmra.mxu0 %v4476
      %v4621 = vpop.f32.mrf.mxu0
      %v4622 = vadd.f32 0.0, %v4621
      %v4623 = vpop.f32.mrf.mxu0
      %v4624 = vadd.f32 0.0, %v4623
      %4625 = vmatmul.bf16.gmra.mxu0 %v4477
      %v4626 = vpop.f32.mrf.mxu0
      %v4627 = vadd.f32 0.0, %v4626
      %v4628 = vpop.f32.mrf.mxu0
      %v4629 = vadd.f32 0.0, %v4628
      %4630 = vdwg.mxu0
      %v4631 = vld [vmem:[#allocation3] sm:$0xff]
      %v4632 = vld [vmem:[#allocation3 + $0x8] sm:$0xff]
      %v4633 = vld [vmem:[#allocation3 + $0x10] sm:$0xff]
      %v4634 = vld [vmem:[#allocation3 + $0x18] sm:$0xff]
      %v4635 = vld [vmem:[#allocation3 + $0x20] sm:$0xff]
      %v4636 = vld [vmem:[#allocation3 + $0x28] sm:$0xff]
      %v4637 = vld [vmem:[#allocation3 + $0x30] sm:$0xff]
      %v4638 = vld [vmem:[#allocation3 + $0x38] sm:$0xff]
      %v4639 = vld [vmem:[#allocation3 + $0x40] sm:$0xff]
      %v4640 = vld [vmem:[#allocation3 + $0x48] sm:$0xff]
      %v4641 = vld [vmem:[#allocation3 + $0x50] sm:$0xff]
      %v4642 = vld [vmem:[#allocation3 + $0x58] sm:$0xff]
      %v4643 = vld [vmem:[#allocation3 + $0x60] sm:$0xff]
      %v4644 = vld [vmem:[#allocation3 + $0x68] sm:$0xff]
      %v4645 = vld [vmem:[#allocation3 + $0x70] sm:$0xff]
      %v4646 = vld [vmem:[#allocation3 + $0x78] sm:$0xff]
      %v4647 = vld [vmem:[#allocation3 + $0x80] sm:$0xff]
      %v4648 = vld [vmem:[#allocation3 + $0x88] sm:$0xff]
      %v4649 = vld [vmem:[#allocation3 + $0x90] sm:$0xff]
      %v4650 = vld [vmem:[#allocation3 + $0x98] sm:$0xff]
      %v4651 = vld [vmem:[#allocation3 + $0xa0] sm:$0xff]
      %v4652 = vld [vmem:[#allocation3 + $0xa8] sm:$0xff]
      %v4653 = vld [vmem:[#allocation3 + $0xb0] sm:$0xff]
      %v4654 = vld [vmem:[#allocation3 + $0xb8] sm:$0xff]
      %v4655 = vld [vmem:[#allocation3 + $0xc0] sm:$0xff]
      %v4656 = vld [vmem:[#allocation3 + $0xc8] sm:$0xff]
      %v4657 = vld [vmem:[#allocation3 + $0xd0] sm:$0xff]
      %v4658 = vld [vmem:[#allocation3 + $0xd8] sm:$0xff]
      %v4659 = vld [vmem:[#allocation3 + $0xe0] sm:$0xff]
      %v4660 = vld [vmem:[#allocation3 + $0xe8] sm:$0xff]
      %v4661 = vld [vmem:[#allocation3 + $0xf0] sm:$0xff]
      %v4662 = vld [vmem:[#allocation3 + $0xf8] sm:$0xff]
      %v4663 = vadd.f32 %v4631, %v4552
      %v4664 = vadd.f32 %v4632, %v4554
      %v4665 = vadd.f32 %v4633, %v4557
      %v4666 = vadd.f32 %v4634, %v4559
      %v4667 = vadd.f32 %v4635, %v4562
      %v4668 = vadd.f32 %v4636, %v4564
      %v4669 = vadd.f32 %v4637, %v4567
      %v4670 = vadd.f32 %v4638, %v4569
      %v4671 = vadd.f32 %v4639, %v4572
      %v4672 = vadd.f32 %v4640, %v4574
      %v4673 = vadd.f32 %v4641, %v4577
      %v4674 = vadd.f32 %v4642, %v4579
      %v4675 = vadd.f32 %v4643, %v4582
      %v4676 = vadd.f32 %v4644, %v4584
      %v4677 = vadd.f32 %v4645, %v4587
      %v4678 = vadd.f32 %v4646, %v4589
      %v4679 = vadd.f32 %v4647, %v4592
      %v4680 = vadd.f32 %v4648, %v4594
      %v4681 = vadd.f32 %v4649, %v4597
      %v4682 = vadd.f32 %v4650, %v4599
      %v4683 = vadd.f32 %v4651, %v4602
      %v4684 = vadd.f32 %v4652, %v4604
      %v4685 = vadd.f32 %v4653, %v4607
      %v4686 = vadd.f32 %v4654, %v4609
      %v4687 = vadd.f32 %v4655, %v4612
      %v4688 = vadd.f32 %v4656, %v4614
      %v4689 = vadd.f32 %v4657, %v4617
      %v4690 = vadd.f32 %v4658, %v4619
      %v4691 = vadd.f32 %v4659, %v4622
      %v4692 = vadd.f32 %v4660, %v4624
      %v4693 = vadd.f32 %v4661, %v4627
      %v4694 = vadd.f32 %v4662, %v4629
      %4695 = vst [vmem:[#allocation3] sm:$0xff] %v4663
      %4696 = vst [vmem:[#allocation3 + $0x8] sm:$0xff] %v4664
      %4697 = vst [vmem:[#allocation3 + $0x10] sm:$0xff] %v4665
      %4698 = vst [vmem:[#allocation3 + $0x18] sm:$0xff] %v4666
      %4699 = vst [vmem:[#allocation3 + $0x20] sm:$0xff] %v4667
      %4700 = vst [vmem:[#allocation3 + $0x28] sm:$0xff] %v4668
      %4701 = vst [vmem:[#allocation3 + $0x30] sm:$0xff] %v4669
      %4702 = vst [vmem:[#allocation3 + $0x38] sm:$0xff] %v4670
      %4703 = vst [vmem:[#allocation3 + $0x40] sm:$0xff] %v4671
      %4704 = vst [vmem:[#allocation3 + $0x48] sm:$0xff] %v4672
      %4705 = vst [vmem:[#allocation3 + $0x50] sm:$0xff] %v4673
      %4706 = vst [vmem:[#allocation3 + $0x58] sm:$0xff] %v4674
      %4707 = vst [vmem:[#allocation3 + $0x60] sm:$0xff] %v4675
      %4708 = vst [vmem:[#allocation3 + $0x68] sm:$0xff] %v4676
      %4709 = vst [vmem:[#allocation3 + $0x70] sm:$0xff] %v4677
      %4710 = vst [vmem:[#allocation3 + $0x78] sm:$0xff] %v4678
      %4711 = vst [vmem:[#allocation3 + $0x80] sm:$0xff] %v4679
      %4712 = vst [vmem:[#allocation3 + $0x88] sm:$0xff] %v4680
      %4713 = vst [vmem:[#allocation3 + $0x90] sm:$0xff] %v4681
      %4714 = vst [vmem:[#allocation3 + $0x98] sm:$0xff] %v4682
      %4715 = vst [vmem:[#allocation3 + $0xa0] sm:$0xff] %v4683
      %4716 = vst [vmem:[#allocation3 + $0xa8] sm:$0xff] %v4684
      %4717 = vst [vmem:[#allocation3 + $0xb0] sm:$0xff] %v4685
      %4718 = vst [vmem:[#allocation3 + $0xb8] sm:$0xff] %v4686
      %4719 = vst [vmem:[#allocation3 + $0xc0] sm:$0xff] %v4687
      %4720 = vst [vmem:[#allocation3 + $0xc8] sm:$0xff] %v4688
      %4721 = vst [vmem:[#allocation3 + $0xd0] sm:$0xff] %v4689
      %4722 = vst [vmem:[#allocation3 + $0xd8] sm:$0xff] %v4690
      %4723 = vst [vmem:[#allocation3 + $0xe0] sm:$0xff] %v4691
      %4724 = vst [vmem:[#allocation3 + $0xe8] sm:$0xff] %v4692
      %4725 = vst [vmem:[#allocation3 + $0xf0] sm:$0xff] %v4693
      %4726 = vst [vmem:[#allocation3 + $0xf8] sm:$0xff] %v4694
      %v4727 = vld [vmem:[#allocation3] sm:$0xff]
      %v4728 = vld [vmem:[#allocation3 + $0x8] sm:$0xff]
      %v4729 = vld [vmem:[#allocation3 + $0x10] sm:$0xff]
      %v4730 = vld [vmem:[#allocation3 + $0x18] sm:$0xff]
      %v4731 = vld [vmem:[#allocation3 + $0x20] sm:$0xff]
      %v4732 = vld [vmem:[#allocation3 + $0x28] sm:$0xff]
      %v4733 = vld [vmem:[#allocation3 + $0x30] sm:$0xff]
      %v4734 = vld [vmem:[#allocation3 + $0x38] sm:$0xff]
      %v4735 = vld [vmem:[#allocation3 + $0x40] sm:$0xff]
      %v4736 = vld [vmem:[#allocation3 + $0x48] sm:$0xff]
      %v4737 = vld [vmem:[#allocation3 + $0x50] sm:$0xff]
      %v4738 = vld [vmem:[#allocation3 + $0x58] sm:$0xff]
      %v4739 = vld [vmem:[#allocation3 + $0x60] sm:$0xff]
      %v4740 = vld [vmem:[#allocation3 + $0x68] sm:$0xff]
      %v4741 = vld [vmem:[#allocation3 + $0x70] sm:$0xff]
      %v4742 = vld [vmem:[#allocation3 + $0x78] sm:$0xff]
      %v4743 = vld [vmem:[#allocation3 + $0x80] sm:$0xff]
      %v4744 = vld [vmem:[#allocation3 + $0x88] sm:$0xff]
      %v4745 = vld [vmem:[#allocation3 + $0x90] sm:$0xff]
      %v4746 = vld [vmem:[#allocation3 + $0x98] sm:$0xff]
      %v4747 = vld [vmem:[#allocation3 + $0xa0] sm:$0xff]
      %v4748 = vld [vmem:[#allocation3 + $0xa8] sm:$0xff]
      %v4749 = vld [vmem:[#allocation3 + $0xb0] sm:$0xff]
      %v4750 = vld [vmem:[#allocation3 + $0xb8] sm:$0xff]
      %v4751 = vld [vmem:[#allocation3 + $0xc0] sm:$0xff]
      %v4752 = vld [vmem:[#allocation3 + $0xc8] sm:$0xff]
      %v4753 = vld [vmem:[#allocation3 + $0xd0] sm:$0xff]
      %v4754 = vld [vmem:[#allocation3 + $0xd8] sm:$0xff]
      %v4755 = vld [vmem:[#allocation3 + $0xe0] sm:$0xff]
      %v4756 = vld [vmem:[#allocation3 + $0xe8] sm:$0xff]
      %v4757 = vld [vmem:[#allocation3 + $0xf0] sm:$0xff]
      %v4758 = vld [vmem:[#allocation3 + $0xf8] sm:$0xff]
      %v4760 = vperm.slane %v231, 0
      %v4762 = vadd.f32 %v4727, %v4760
      %v4763 = vadd.f32 %v4728, %v4760
      %v4764 = vadd.f32 %v4729, %v4760
      %v4765 = vadd.f32 %v4730, %v4760
      %v4766 = vadd.f32 %v4731, %v4760
      %v4767 = vadd.f32 %v4732, %v4760
      %v4768 = vadd.f32 %v4733, %v4760
      %v4769 = vadd.f32 %v4734, %v4760
      %v4770 = vadd.f32 %v4735, %v4760
      %v4771 = vadd.f32 %v4736, %v4760
      %v4772 = vadd.f32 %v4737, %v4760
      %v4773 = vadd.f32 %v4738, %v4760
      %v4774 = vadd.f32 %v4739, %v4760
      %v4775 = vadd.f32 %v4740, %v4760
      %v4776 = vadd.f32 %v4741, %v4760
      %v4777 = vadd.f32 %v4742, %v4760
      %v4778 = vadd.f32 %v4743, %v4760
      %v4779 = vadd.f32 %v4744, %v4760
      %v4780 = vadd.f32 %v4745, %v4760
      %v4781 = vadd.f32 %v4746, %v4760
      %v4782 = vadd.f32 %v4747, %v4760
      %v4783 = vadd.f32 %v4748, %v4760
      %v4784 = vadd.f32 %v4749, %v4760
      %v4785 = vadd.f32 %v4750, %v4760
      %v4786 = vadd.f32 %v4751, %v4760
      %v4787 = vadd.f32 %v4752, %v4760
      %v4788 = vadd.f32 %v4753, %v4760
      %v4789 = vadd.f32 %v4754, %v4760
      %v4790 = vadd.f32 %v4755, %v4760
      %v4791 = vadd.f32 %v4756, %v4760
      %v4792 = vadd.f32 %v4757, %v4760
      %v4793 = vadd.f32 %v4758, %v4760
      %v4794 = vmax.f32 %v4762, 0.0
      %v4795 = vmax.f32 %v4763, 0.0
      %v4796 = vmax.f32 %v4764, 0.0
      %v4797 = vmax.f32 %v4765, 0.0
      %v4798 = vmax.f32 %v4766, 0.0
      %v4799 = vmax.f32 %v4767, 0.0
      %v4800 = vmax.f32 %v4768, 0.0
      %v4801 = vmax.f32 %v4769, 0.0
      %v4802 = vmax.f32 %v4770, 0.0
      %v4803 = vmax.f32 %v4771, 0.0
      %v4804 = vmax.f32 %v4772, 0.0
      %v4805 = vmax.f32 %v4773, 0.0
      %v4806 = vmax.f32 %v4774, 0.0
      %v4807 = vmax.f32 %v4775, 0.0
      %v4808 = vmax.f32 %v4776, 0.0
      %v4809 = vmax.f32 %v4777, 0.0
      %v4810 = vmax.f32 %v4778, 0.0
      %v4811 = vmax.f32 %v4779, 0.0
      %v4812 = vmax.f32 %v4780, 0.0
      %v4813 = vmax.f32 %v4781, 0.0
      %v4814 = vmax.f32 %v4782, 0.0
      %v4815 = vmax.f32 %v4783, 0.0
      %v4816 = vmax.f32 %v4784, 0.0
      %v4817 = vmax.f32 %v4785, 0.0
      %v4818 = vmax.f32 %v4786, 0.0
      %v4819 = vmax.f32 %v4787, 0.0
      %v4820 = vmax.f32 %v4788, 0.0
      %v4821 = vmax.f32 %v4789, 0.0
      %v4822 = vmax.f32 %v4790, 0.0
      %v4823 = vmax.f32 %v4791, 0.0
      %v4824 = vmax.f32 %v4792, 0.0
      %v4825 = vmax.f32 %v4793, 0.0
      %v4826 = vpack.c.bf16 %v4795, %v4794
      %v4827 = vpack.c.bf16 %v4797, %v4796
      %v4828 = vpack.c.bf16 %v4799, %v4798
      %v4829 = vpack.c.bf16 %v4801, %v4800
      %v4830 = vpack.c.bf16 %v4803, %v4802
      %v4831 = vpack.c.bf16 %v4805, %v4804
      %v4832 = vpack.c.bf16 %v4807, %v4806
      %v4833 = vpack.c.bf16 %v4809, %v4808
      %v4834 = vpack.c.bf16 %v4811, %v4810
      %v4835 = vpack.c.bf16 %v4813, %v4812
      %v4836 = vpack.c.bf16 %v4815, %v4814
      %v4837 = vpack.c.bf16 %v4817, %v4816
      %v4838 = vpack.c.bf16 %v4819, %v4818
      %v4839 = vpack.c.bf16 %v4821, %v4820
      %v4840 = vpack.c.bf16 %v4823, %v4822
      %v4841 = vpack.c.bf16 %v4825, %v4824
      %v4842 = vld [vmem:[%s3] sm:$0xf]
      %v4843 = vld [vmem:[%s3 + $0x4] sm:$0xf]
      %v4844 = vld [vmem:[%s3 + $0x8] sm:$0xf]
      %v4845 = vld [vmem:[%s3 + $0xc] sm:$0xf]
      %v4846 = vld [vmem:[%s3 + $0x10] sm:$0xf]
      %v4847 = vld [vmem:[%s3 + $0x14] sm:$0xf]
      %v4848 = vld [vmem:[%s3 + $0x18] sm:$0xf]
      %v4849 = vld [vmem:[%s3 + $0x1c] sm:$0xf]
      %v4850 = vld [vmem:[%s3 + $0x20] sm:$0xf]
      %v4851 = vld [vmem:[%s3 + $0x24] sm:$0xf]
      %v4852 = vld [vmem:[%s3 + $0x28] sm:$0xf]
      %v4853 = vld [vmem:[%s3 + $0x2c] sm:$0xf]
      %v4854 = vld [vmem:[%s3 + $0x30] sm:$0xf]
      %v4855 = vld [vmem:[%s3 + $0x34] sm:$0xf]
      %v4856 = vld [vmem:[%s3 + $0x38] sm:$0xf]
      %v4857 = vld [vmem:[%s3 + $0x3c] sm:$0xf]
      %v4859 = vperm.slane %v233, 0
      %v4877 = vunpack.c.l.b16 %v4842
      %v4878 = vunpack.c.l.b16 %v4843
      %v4879 = vunpack.c.l.b16 %v4844
      %v4880 = vunpack.c.l.b16 %v4845
      %v4881 = vunpack.c.l.b16 %v4846
      %v4882 = vunpack.c.l.b16 %v4847
      %v4883 = vunpack.c.l.b16 %v4848
      %v4884 = vunpack.c.l.b16 %v4849
      %v4885 = vunpack.c.l.b16 %v4850
      %v4886 = vunpack.c.l.b16 %v4851
      %v4887 = vunpack.c.l.b16 %v4852
      %v4888 = vunpack.c.l.b16 %v4853
      %v4889 = vunpack.c.l.b16 %v4854
      %v4890 = vunpack.c.l.b16 %v4855
      %v4891 = vunpack.c.l.b16 %v4856
      %v4892 = vunpack.c.l.b16 %v4857
      %v4893 = vpack.c.b16 %v4878, %v4877
      %v4894 = vpack.c.b16 %v4880, %v4879
      %v4895 = vpack.c.b16 %v4882, %v4881
      %v4896 = vpack.c.b16 %v4884, %v4883
      %v4897 = vpack.c.b16 %v4886, %v4885
      %v4898 = vpack.c.b16 %v4888, %v4887
      %v4899 = vpack.c.b16 %v4890, %v4889
      %v4900 = vpack.c.b16 %v4892, %v4891
      %4909 = vmatpush.bf16.msra.mxu0 %v4900
      %4910 = vmatpush.bf16.msra.mxu0 %v4899
      %4911 = vmatpush.bf16.msra.mxu0 %v4898
      %4912 = vmatpush.bf16.msra.mxu0 %v4897
      %4913 = vmatpush.bf16.msra.mxu0 %v4896
      %4914 = vmatpush.bf16.msra.mxu0 %v4895
      %4915 = vmatpush.bf16.msra.mxu0 %v4894
      %4916 = vmatpush.bf16.msra.mxu0 %v4893
      %4917 = vmatmul.bf16.gmra.mxu0 %v4826
      %v4918 = vpop.f32.mrf.mxu0
      %v4919 = vadd.f32 %v4859, %v4918
      %v4920 = vpop.f32.mrf.mxu0
      %v4921 = vadd.f32 %v4859, %v4920
      %4922 = vmatmul.bf16.gmra.mxu0 %v4827
      %v4923 = vpop.f32.mrf.mxu0
      %v4924 = vadd.f32 %v4859, %v4923
      %v4925 = vpop.f32.mrf.mxu0
      %v4926 = vadd.f32 %v4859, %v4925
      %4927 = vmatmul.bf16.gmra.mxu0 %v4828
      %v4928 = vpop.f32.mrf.mxu0
      %v4929 = vadd.f32 %v4859, %v4928
      %v4930 = vpop.f32.mrf.mxu0
      %v4931 = vadd.f32 %v4859, %v4930
      %4932 = vmatmul.bf16.gmra.mxu0 %v4829
      %v4933 = vpop.f32.mrf.mxu0
      %v4934 = vadd.f32 %v4859, %v4933
      %v4935 = vpop.f32.mrf.mxu0
      %v4936 = vadd.f32 %v4859, %v4935
      %4937 = vmatmul.bf16.gmra.mxu0 %v4830
      %v4938 = vpop.f32.mrf.mxu0
      %v4939 = vadd.f32 %v4859, %v4938
      %v4940 = vpop.f32.mrf.mxu0
      %v4941 = vadd.f32 %v4859, %v4940
      %4942 = vmatmul.bf16.gmra.mxu0 %v4831
      %v4943 = vpop.f32.mrf.mxu0
      %v4944 = vadd.f32 %v4859, %v4943
      %v4945 = vpop.f32.mrf.mxu0
      %v4946 = vadd.f32 %v4859, %v4945
      %4947 = vmatmul.bf16.gmra.mxu0 %v4832
      %v4948 = vpop.f32.mrf.mxu0
      %v4949 = vadd.f32 %v4859, %v4948
      %v4950 = vpop.f32.mrf.mxu0
      %v4951 = vadd.f32 %v4859, %v4950
      %4952 = vmatmul.bf16.gmra.mxu0 %v4833
      %v4953 = vpop.f32.mrf.mxu0
      %v4954 = vadd.f32 %v4859, %v4953
      %v4955 = vpop.f32.mrf.mxu0
      %v4956 = vadd.f32 %v4859, %v4955
      %4957 = vmatmul.bf16.gmra.mxu0 %v4834
      %v4958 = vpop.f32.mrf.mxu0
      %v4959 = vadd.f32 %v4859, %v4958
      %v4960 = vpop.f32.mrf.mxu0
      %v4961 = vadd.f32 %v4859, %v4960
      %4962 = vmatmul.bf16.gmra.mxu0 %v4835
      %v4963 = vpop.f32.mrf.mxu0
      %v4964 = vadd.f32 %v4859, %v4963
      %v4965 = vpop.f32.mrf.mxu0
      %v4966 = vadd.f32 %v4859, %v4965
      %4967 = vmatmul.bf16.gmra.mxu0 %v4836
      %v4968 = vpop.f32.mrf.mxu0
      %v4969 = vadd.f32 %v4859, %v4968
      %v4970 = vpop.f32.mrf.mxu0
      %v4971 = vadd.f32 %v4859, %v4970
      %4972 = vmatmul.bf16.gmra.mxu0 %v4837
      %v4973 = vpop.f32.mrf.mxu0
      %v4974 = vadd.f32 %v4859, %v4973
      %v4975 = vpop.f32.mrf.mxu0
      %v4976 = vadd.f32 %v4859, %v4975
      %4977 = vmatmul.bf16.gmra.mxu0 %v4838
      %v4978 = vpop.f32.mrf.mxu0
      %v4979 = vadd.f32 %v4859, %v4978
      %v4980 = vpop.f32.mrf.mxu0
      %v4981 = vadd.f32 %v4859, %v4980
      %4982 = vmatmul.bf16.gmra.mxu0 %v4839
      %v4983 = vpop.f32.mrf.mxu0
      %v4984 = vadd.f32 %v4859, %v4983
      %v4985 = vpop.f32.mrf.mxu0
      %v4986 = vadd.f32 %v4859, %v4985
      %4987 = vmatmul.bf16.gmra.mxu0 %v4840
      %v4988 = vpop.f32.mrf.mxu0
      %v4989 = vadd.f32 %v4859, %v4988
      %v4990 = vpop.f32.mrf.mxu0
      %v4991 = vadd.f32 %v4859, %v4990
      %4992 = vmatmul.bf16.gmra.mxu0 %v4841
      %v4993 = vpop.f32.mrf.mxu0
      %v4994 = vadd.f32 %v4859, %v4993
      %v4995 = vpop.f32.mrf.mxu0
      %v4996 = vadd.f32 %v4859, %v4995
      %4997 = vdwg.mxu0
      %4998 = vst [vmem:[%s224] sm:$0xff] %v4919
      %4999 = vst [vmem:[%s224 + $0x8] sm:$0xff] %v4921
      %5000 = vst [vmem:[%s224 + $0x10] sm:$0xff] %v4924
      %5001 = vst [vmem:[%s224 + $0x18] sm:$0xff] %v4926
      %5002 = vst [vmem:[%s224 + $0x20] sm:$0xff] %v4929
      %5003 = vst [vmem:[%s224 + $0x28] sm:$0xff] %v4931
      %5004 = vst [vmem:[%s224 + $0x30] sm:$0xff] %v4934
      %5005 = vst [vmem:[%s224 + $0x38] sm:$0xff] %v4936
      %5006 = vst [vmem:[%s224 + $0x40] sm:$0xff] %v4939
      %5007 = vst [vmem:[%s224 + $0x48] sm:$0xff] %v4941
      %5008 = vst [vmem:[%s224 + $0x50] sm:$0xff] %v4944
      %5009 = vst [vmem:[%s224 + $0x58] sm:$0xff] %v4946
      %5010 = vst [vmem:[%s224 + $0x60] sm:$0xff] %v4949
      %5011 = vst [vmem:[%s224 + $0x68] sm:$0xff] %v4951
      %5012 = vst [vmem:[%s224 + $0x70] sm:$0xff] %v4954
      %5013 = vst [vmem:[%s224 + $0x78] sm:$0xff] %v4956
      %5014 = vst [vmem:[%s224 + $0x80] sm:$0xff] %v4959
      %5015 = vst [vmem:[%s224 + $0x88] sm:$0xff] %v4961
      %5016 = vst [vmem:[%s224 + $0x90] sm:$0xff] %v4964
      %5017 = vst [vmem:[%s224 + $0x98] sm:$0xff] %v4966
      %5018 = vst [vmem:[%s224 + $0xa0] sm:$0xff] %v4969
      %5019 = vst [vmem:[%s224 + $0xa8] sm:$0xff] %v4971
      %5020 = vst [vmem:[%s224 + $0xb0] sm:$0xff] %v4974
      %5021 = vst [vmem:[%s224 + $0xb8] sm:$0xff] %v4976
      %5022 = vst [vmem:[%s224 + $0xc0] sm:$0xff] %v4979
      %5023 = vst [vmem:[%s224 + $0xc8] sm:$0xff] %v4981
      %5024 = vst [vmem:[%s224 + $0xd0] sm:$0xff] %v4984
      %5025 = vst [vmem:[%s224 + $0xd8] sm:$0xff] %v4986
      %5026 = vst [vmem:[%s224 + $0xe0] sm:$0xff] %v4989
      %5027 = vst [vmem:[%s224 + $0xe8] sm:$0xff] %v4991
      %5028 = vst [vmem:[%s224 + $0xf0] sm:$0xff] %v4994
      %5029 = vst [vmem:[%s224 + $0xf8] sm:$0xff] %v4996
      %p5030 = scmp.lt.s32.totalorder %s16, 1
      %s5031 = scalar_select %p5030, %s16, 1
      %s5032 = smul.addr %s5031, 32
      %s5033 = smul.addr %s5032, 8
      %s5034 = scalar_lea.vmem %s5, %s5033
      // Predicated region
      $region41: #{res_bottleneck_block.1} parent=39 // pred_check
        %p5035 = pneg %p144
      $region42: #{res_bottleneck_block.1} parent=39 // pred_check_branch
        %5037 = sbr.rel (%p5035) target = $region44
      $region43: #{res_bottleneck_block.1} parent=39 // pred_region
        _
      $region44: #{res_bottleneck_block.1} parent=39 // pred_fallthru
        _
    $region40: #{res_bottleneck_block.1} parent=5 // pred_fallthru
      _
    %p5038 = scmp.le.s32.totalorder 2, %s11
    // Predicated region
    $region45: #{res_bottleneck_block.1} parent=5 // pred_check
      %p5039 = pneg %p5038
    $region46: #{res_bottleneck_block.1} parent=5 // pred_check_branch
      %5041 = sbr.rel (%p5039) target = $region48
    $region47: #{res_bottleneck_block.1} parent=5 // pred_region
      %s5042 = ssub.s32 %s11, 2
      // Predicated region
      $region49: #{res_bottleneck_block.1} parent=47 // pred_check
        %p5043 = pneg %p150
      $region50: #{res_bottleneck_block.1} parent=47 // pred_check_branch
        %5045 = sbr.rel (%p5043) target = $region52
      $region51: #{res_bottleneck_block.1} parent=47 // pred_region
        %p5046 = scmp.lt.s32.totalorder %s17, 1
        %s5047 = scalar_select %p5046, %s17, 1
        %s5048 = smul.addr %s5047, 32
        %s5049 = smul.addr %s5048, 8
        %s5050 = scalar_lea.vmem %s5, %s5049
      $region52: #{res_bottleneck_block.1} parent=47 // pred_fallthru
        _
    $region48: #{res_bottleneck_block.1} parent=5 // pred_fallthru
      _
  $region6: #{res_bottleneck_block.1} parent=0 // loop_footer
    %s15 = sadd.s32 1, %s11
  $region7: #{res_bottleneck_block.1} parent=0 // loop_footer_branch
    %10 = sbr.rel target = $region3
  $region8: #{res_bottleneck_block.1} parent=0 // loop_exit
    _

</llo_original>
